<compile_context>
chip_gen: v7x
topology: tpu7x:2x2x1
jax: 0.10.0
libtpu: 0.0.40
codegen_flags: <defaults>
</compile_context>

<pallas_src>
import functools

import jax
import jax.numpy as jnp
import numpy as np
from jax import lax
from jax.experimental import pallas as pl
from jax.experimental.pallas import tpu as pltpu

LANE = 128


# ---------------------------------------------------------------------------
# Kernels
# ---------------------------------------------------------------------------
def _conv_pool_kernel(xe_ref, xo_ref, w_ref, b_ref, o_ref, *, kh):
    """Fused conv(kh x kw, valid) + bias + ReLU + 2x2 max-pool, batched over
    all images of the grid step.

    xe_ref/xo_ref : (R, 128)       even / odd input rows of all images in this
                                   step, flattened with stride S rows/image;
                                   lanes = w*Cin + c (bf16, zero padded)
    w_ref         : (kh, 128, 256) banded conv weights; output lanes are
                                   [even-wo | odd-wo] blocks of width Wp*Cout
                                   (zero padded) (bf16)
    b_ref         : (1, 128)       bias tiled into pooled layout wp*Cout+o (f32)
    o_ref         : (R, 128)       pooled activations, lanes = wp*Cout + o;
                                   rows >= hp_count within each image are junk
                                   and sliced away by the caller (bf16)
    """
    R = o_ref.shape[0]
    half = o_ref.shape[-1]          # 128
    xe = xe_ref[...]
    xo = xo_ref[...]

    def shift_up(x, s):
        # result[r] = x[r + s] for r < R - s (wrap only feeds junk rows).
        if s == 0:
            return x
        return jnp.concatenate([x[s:], x[:s]], axis=0)

    acc_e = jnp.zeros((R, 2 * half), jnp.float32)   # even output rows
    acc_o = jnp.zeros((R, 2 * half), jnp.float32)   # odd output rows
    for ki in range(kh):
        wk = w_ref[ki]                               # (128, 256) bf16
        m = ki // 2
        if ki % 2 == 0:
            src_e, se = xe, m            # even out rows need even in rows
            src_o, so = xo, m            # odd  out rows need odd  in rows
        else:
            src_e, se = xo, m            # even out rows need odd in rows
            src_o, so = xe, m + 1        # odd  out rows need even in rows
        acc_e = acc_e + jnp.dot(shift_up(src_e, se), wk,
                                preferred_element_type=jnp.float32)
        acc_o = acc_o + jnp.dot(shift_up(src_o, so), wk,
                                preferred_element_type=jnp.float32)

    pooled = jnp.maximum(acc_e, acc_o)                           # pool over rows
    pooled = jnp.maximum(pooled[:, :half], pooled[:, half:])     # pool over cols
    o_ref[...] = jnp.maximum(pooled + b_ref[...], 0.0).astype(o_ref.dtype)


def _mlp_kernel(x_ref, w1_ref, b1_ref, w2_ref, b2_ref, w3_ref, b3_ref, o_ref):
    """fc1+ReLU -> fc2+ReLU -> fc3, all in VMEM.  All widths padded to 128."""
    h = jnp.dot(x_ref[...], w1_ref[...], preferred_element_type=jnp.float32) + b1_ref[...]
    h = jnp.maximum(h, 0.0).astype(jnp.bfloat16)
    h = jnp.dot(h, w2_ref[...], preferred_element_type=jnp.float32) + b2_ref[...]
    h = jnp.maximum(h, 0.0).astype(jnp.bfloat16)
    o_ref[...] = jnp.dot(h, w3_ref[...], preferred_element_type=jnp.float32) + b3_ref[...]


# ---------------------------------------------------------------------------
# pallas_call wrappers
# ---------------------------------------------------------------------------
def conv_pool(xe, xo, w_banded, b_pooled, *, rows_per_step):
    total_rows, lane = xe.shape
    kernel = functools.partial(_conv_pool_kernel, kh=w_banded.shape[0])
    return pl.pallas_call(
        kernel,
        out_shape=jax.ShapeDtypeStruct((total_rows, LANE), jnp.bfloat16),
        grid=(total_rows // rows_per_step,),
        in_specs=[
            pl.BlockSpec((rows_per_step, lane), lambda i: (i, 0)),
            pl.BlockSpec((rows_per_step, lane), lambda i: (i, 0)),
            pl.BlockSpec(w_banded.shape, lambda i: (0, 0, 0)),
            pl.BlockSpec(b_pooled.shape, lambda i: (0, 0)),
        ],
        out_specs=pl.BlockSpec((rows_per_step, LANE), lambda i: (i, 0)),
        compiler_params=pltpu.CompilerParams(dimension_semantics=("parallel",)),
    )(xe, xo, w_banded, b_pooled)


def mlp_head(x, w1, b1, w2, b2, w3, b3):
    B, K = x.shape
    tb = B if B <= 256 else 256
    full = lambda i: (0, 0)
    return pl.pallas_call(
        _mlp_kernel,
        out_shape=jax.ShapeDtypeStruct((B, LANE), jnp.float32),
        grid=(B // tb,),
        in_specs=[
            pl.BlockSpec((tb, K), lambda i: (i, 0)),
            pl.BlockSpec(w1.shape, full), pl.BlockSpec(b1.shape, full),
            pl.BlockSpec(w2.shape, full), pl.BlockSpec(b2.shape, full),
            pl.BlockSpec(w3.shape, full), pl.BlockSpec(b3.shape, full),
        ],
        out_specs=pl.BlockSpec((tb, LANE), lambda i: (i, 0)),
        compiler_params=pltpu.CompilerParams(dimension_semantics=("parallel",)),
    )(x, w1, b1, w2, b2, w3, b3)


# ---------------------------------------------------------------------------
# One-time parameter repacking (done once, outside the forward pass)
# ---------------------------------------------------------------------------
def _conv_banded_weights(w, win):
    """PyTorch conv weight (Cout,Cin,kh,kw) -> (kh, 128, 256) banded matmul weights.

    Row lane p = w_in*Cin + c.  Output column s*128 + wp*Cout + o holds
    w[o, c, ki, (2*wp+s) offset], so  input_row(h+ki) @ W[ki]  accumulates the
    conv pre-activation at output column wo = 2*wp + s, already grouped by
    pooling parity (even-wo block | odd-wo block)."""
    cout, cin, kh, kw = w.shape
    wo = win - kw + 1
    wp = wo // 2
    wo_order = jnp.concatenate([jnp.arange(0, wo, 2), jnp.arange(1, wo, 2)])
    sel = (jnp.arange(win)[None, None, :] ==
           (wo_order[None, :, None] + jnp.arange(kw)[:, None, None])).astype(jnp.float32)
    w_t = jnp.transpose(w, (2, 3, 1, 0)).astype(jnp.float32)        # (kh,kw,cin,cout)
    big = jnp.einsum('jqv,ijco->ivcqo', sel, w_t)                    # (kh,win,cin,wo,cout)
    big = big.reshape(kh, win * cin, 2, wp * cout)
    big = jnp.pad(big, ((0, 0), (0, LANE - win * cin), (0, 0), (0, LANE - wp * cout)))
    return big.reshape(kh, LANE, 2 * LANE).astype(jnp.bfloat16)


def _pool_bias(b, wp):
    cout = b.shape[0]
    tiled = jnp.tile(b.astype(jnp.float32), (wp,))                   # idx wp*cout+o -> b[o]
    return jnp.pad(tiled, (0, LANE - wp * cout)).reshape(1, LANE)


def _fc1_weight(w1):
    """fc1 weight (120,400) -> (5*128, 128).  Rows follow our HWC, lane-padded
    flatten (h*128 + w*16 + c); this absorbs PyTorch's CHW view(-1,400) order."""
    h, w, c = jnp.meshgrid(jnp.arange(5), jnp.arange(5), jnp.arange(16), indexing="ij")
    rows = (h * LANE + w * 16 + c).ravel()
    cols = (c * 25 + h * 5 + w).ravel()
    w1t = jnp.pad(jnp.transpose(w1), ((0, 0), (0, LANE - 120)))      # (400, 128)
    out = jnp.zeros((5 * LANE, LANE), jnp.float32).at[rows].set(w1t[cols])
    return out.astype(jnp.bfloat16)


def prepare_params(params, num_cls):
    assert num_cls <= LANE
    return {
        "c1_w": _conv_banded_weights(params["conv1_w"], win=32),
        "c1_b": _pool_bias(params["conv1_b"], wp=14),
        "c2_w": _conv_banded_weights(params["conv2_w"], win=14),
        "c2_b": _pool_bias(params["conv2_b"], wp=5),
        "fc1_w": _fc1_weight(params["fc1_w"]),
        "fc1_b": jnp.pad(params["fc1_b"], (0, LANE - 120)).reshape(1, LANE).astype(jnp.float32),
        "fc2_w": jnp.pad(jnp.transpose(params["fc2_w"]),
                         ((0, LANE - 120), (0, LANE - 84))).astype(jnp.bfloat16),
        "fc2_b": jnp.pad(params["fc2_b"], (0, LANE - 84)).reshape(1, LANE).astype(jnp.float32),
        "fc3_w": jnp.pad(jnp.transpose(params["fc3_w"]),
                         ((0, LANE - 84), (0, LANE - num_cls))).astype(jnp.bfloat16),
        "fc3_b": jnp.pad(params["fc3_b"], (0, LANE - num_cls)).reshape(1, LANE).astype(jnp.float32),
    }


# ---------------------------------------------------------------------------
# Forward pass (matches LocalNet.forward semantics)
# ---------------------------------------------------------------------------
def _images_per_block(B):
    for tb in (8, 4, 2, 1):
        if B % tb == 0:
            return tb
    return 1


def local_net_forward(x_nchw, prep, *, num_cls):
    B = x_nchw.shape[0]
    tb = _images_per_block(B)

    # Layout glue (tiny XLA ops): NCHW -> (B, H, W*Cin) with features on lanes,
    # zero-padded to 128 lanes, split into even/odd image rows and flattened to
    # (B*rows, 128) so the conv kernel can batch all images of a step into one
    # matmul per weight band.
    x = jnp.transpose(x_nchw, (0, 2, 3, 1)).reshape(B, 32, 32 * 3)
    x = jnp.pad(x, ((0, 0), (0, 0), (0, LANE - 32 * 3))).astype(jnp.bfloat16)
    x1e = x[:, 0::2, :].reshape(B * 16, LANE)           # 16 even rows / image
    x1o = x[:, 1::2, :].reshape(B * 16, LANE)           # 16 odd rows / image

    # conv1 + ReLU + pool: per image, pooled rows 0..13 are real, 14..15 junk.
    h1 = conv_pool(x1e, x1o, prep["c1_w"], prep["c1_b"], rows_per_step=tb * 16)
    h1 = h1.reshape(B, 16, LANE)
    # Even/odd rows of the 14 real conv1 rows; the trailing slot of each is a
    # junk pad row (never read for real conv2 outputs).
    x2e = h1[:, 0::2, :].reshape(B * 8, LANE)
    x2o = h1[:, 1::2, :].reshape(B * 8, LANE)

    # conv2 + ReLU + pool: per image, pooled rows 0..4 are real, 5..7 junk.
    h2 = conv_pool(x2e, x2o, prep["c2_w"], prep["c2_b"], rows_per_step=tb * 8)
    h2 = h2.reshape(B, 8, LANE)[:, :5, :]

    feat = h2.reshape(B, 5 * LANE)                       # lane-padded HWC flatten (bf16)
    logits = mlp_head(feat, prep["fc1_w"], prep["fc1_b"], prep["fc2_w"],
                      prep["fc2_b"], prep["fc3_w"], prep["fc3_b"])
    return logits[:, :num_cls]


# ---------------------------------------------------------------------------
# Parameters (deterministic, PyTorch-default-style uniform init)
# ---------------------------------------------------------------------------
def init_params(key, num_cls):
    ks = jax.random.split(key, 10)

    def u(k, shape, fan_in):
        bound = 1.0 / jnp.sqrt(float(fan_in))
        return jax.random.uniform(k, shape, jnp.float32, -bound, bound)

    return {
        "conv1_w": u(ks[0], (6, 3, 5, 5), 3 * 25),
        "conv1_b": u(ks[1], (6,), 3 * 25),
        "conv2_w": u(ks[2], (16, 6, 5, 5), 6 * 25),
        "conv2_b": u(ks[3], (16,), 6 * 25),
        "fc1_w": u(ks[4], (120, 400), 400),
        "fc1_b": u(ks[5], (120,), 400),
        "fc2_w": u(ks[6], (84, 120), 120),
        "fc2_b": u(ks[7], (84,), 120),
        "fc3_w": u(ks[8], (num_cls, 84), 84),
        "fc3_b": u(ks[9], (num_cls,), 84),
    }


# ---------------------------------------------------------------------------
# Pure-JAX f32 reference (numerical sanity check only)
# ---------------------------------------------------------------------------
def reference_forward(x_nchw, params):
    def conv(x, w, b):
        y = lax.conv_general_dilated(x, w, (1, 1), "VALID",
                                     dimension_numbers=("NCHW", "OIHW", "NCHW"))
        return y + b.reshape(1, -1, 1, 1)

    x = jax.nn.relu(conv(x_nchw, params["conv1_w"], params["conv1_b"]))
    x = lax.reduce_window(x, -jnp.inf, lax.max, (1, 1, 2, 2), (1, 1, 2, 2), "VALID")
    x = jax.nn.relu(conv(x, params["conv2_w"], params["conv2_b"]))
    x = lax.reduce_window(x, -jnp.inf, lax.max, (1, 1, 2, 2), (1, 1, 2, 2), "VALID")
    x = x.reshape(x.shape[0], -1)
    x = jax.nn.relu(x @ params["fc1_w"].T + params["fc1_b"])
    x = jax.nn.relu(x @ params["fc2_w"].T + params["fc2_b"])
    return x @ params["fc3_w"].T + params["fc3_b"]


if __name__ == "__main__":
    key = jax.random.PRNGKey(0)
    pkey, xkey = jax.random.split(key)
    num_cls = 10
    params = init_params(pkey, num_cls)
    prep = prepare_params(params, num_cls)              # one-time weight repacking
    # 32x32 spatial size is required by fc1's 16*5*5 input features.
    x = jax.random.normal(xkey, (2, 3, 32, 32), jnp.float32)

    fwd = jax.jit(functools.partial(local_net_forward, num_cls=num_cls))
    out = jax.block_until_ready(fwd(x, prep))
    assert out.shape == (2, num_cls) and out.dtype == jnp.float32

    # Sanity check against the plain-JAX f32 reference (kernel path uses bf16
    # MXU operands, hence the loose-ish tolerance).
    ref = reference_forward(x, params)
    np.testing.assert_allclose(np.asarray(out), np.asarray(ref), atol=5e-2, rtol=5e-2)
    print("KERNEL_OK")
</pallas_src>

<mosaic_0001>
module attributes {stable_mosaic.version = 11 : i64} {
  func.func @_conv_pool_kernel(%arg0: i32, %arg1: memref<16x128xbf16, #tpu.memory_space<vmem>>, %arg2: memref<16x128xbf16, #tpu.memory_space<vmem>>, %arg3: memref<5x128x256xbf16, #tpu.memory_space<vmem>>, %arg4: memref<1x128xf32, #tpu.memory_space<vmem>>, %arg5: memref<16x128xbf16, #tpu.memory_space<vmem>>) attributes {dimension_semantics = [#tpu.dimension_semantics<parallel>], iteration_bounds = array<i64: 1>, scalar_prefetch = 0 : i64, scratch_operands = 0 : i64, tpu.core_type = #tpu.core_type<tc>, window_params = [{transform_indices = @transform_0, window_bounds = array<i64: 16, 128>}, {transform_indices = @transform_1, window_bounds = array<i64: 16, 128>}, {pipeline_mode = #tpu.pipeline_mode<synchronous>, transform_indices = @transform_2, window_bounds = array<i64: 5, 128, 256>}, {pipeline_mode = #tpu.pipeline_mode<synchronous>, transform_indices = @transform_3, window_bounds = array<i64: 1, 128>}, {transform_indices = @transform_4, window_bounds = array<i64: 16, 128>}]} {
    %c0 = arith.constant 0 : index
    %c0_0 = arith.constant 0 : index
    %0 = vector.load %arg1[%c0, %c0_0] : memref<16x128xbf16, #tpu.memory_space<vmem>>, vector<16x128xbf16>
    %c0_1 = arith.constant 0 : index
    %c0_2 = arith.constant 0 : index
    %1 = vector.load %arg2[%c0_1, %c0_2] : memref<16x128xbf16, #tpu.memory_space<vmem>>, vector<16x128xbf16>
    %cst = arith.constant 0.000000e+00 : f32
    %2 = vector.broadcast %cst : f32 to vector<16x256xf32>
    %cst_3 = arith.constant 0.000000e+00 : f32
    %3 = vector.broadcast %cst_3 : f32 to vector<16x256xf32>
    %c0_4 = arith.constant 0 : index
    %c0_5 = arith.constant 0 : index
    %c0_6 = arith.constant 0 : index
    %4 = vector.load %arg3[%c0_4, %c0_5, %c0_6] : memref<5x128x256xbf16, #tpu.memory_space<vmem>>, vector<1x128x256xbf16>
    %5 = vector.shape_cast %4 : vector<1x128x256xbf16> to vector<128x256xbf16>
    %cst_7 = arith.constant dense<0.000000e+00> : vector<16x256xf32>
    %6 = tpu.matmul %0, %5, %cst_7 {dimension_numbers = #tpu.dot_dimension_numbers<[1], [0], [0], [1], [0, 0, 1, 1], [], []>} : vector<16x128xbf16>, vector<128x256xbf16>, vector<16x256xf32> -> vector<16x256xf32>
    %7 = arith.addf %2, %6 : vector<16x256xf32>
    %cst_8 = arith.constant dense<0.000000e+00> : vector<16x256xf32>
    %8 = tpu.matmul %1, %5, %cst_8 {dimension_numbers = #tpu.dot_dimension_numbers<[1], [0], [0], [1], [0, 0, 1, 1], [], []>} : vector<16x128xbf16>, vector<128x256xbf16>, vector<16x256xf32> -> vector<16x256xf32>
    %9 = arith.addf %3, %8 : vector<16x256xf32>
    %c1 = arith.constant 1 : index
    %c0_9 = arith.constant 0 : index
    %c0_10 = arith.constant 0 : index
    %10 = vector.load %arg3[%c1, %c0_9, %c0_10] : memref<5x128x256xbf16, #tpu.memory_space<vmem>>, vector<1x128x256xbf16>
    %11 = vector.shape_cast %10 : vector<1x128x256xbf16> to vector<128x256xbf16>
    %cst_11 = arith.constant dense<0.000000e+00> : vector<16x256xf32>
    %12 = tpu.matmul %1, %11, %cst_11 {dimension_numbers = #tpu.dot_dimension_numbers<[1], [0], [0], [1], [0, 0, 1, 1], [], []>} : vector<16x128xbf16>, vector<128x256xbf16>, vector<16x256xf32> -> vector<16x256xf32>
    %13 = arith.addf %7, %12 : vector<16x256xf32>
    %14 = vector.extract_strided_slice %0 {offsets = [1, 0], sizes = [15, 128], strides = [1, 1]} : vector<16x128xbf16> to vector<15x128xbf16>
    %15 = vector.extract_strided_slice %0 {offsets = [0, 0], sizes = [1, 128], strides = [1, 1]} : vector<16x128xbf16> to vector<1x128xbf16>
    %16 = tpu.concatenate %14, %15 in 0 : vector<15x128xbf16>, vector<1x128xbf16> -> vector<16x128xbf16>
    %cst_12 = arith.constant dense<0.000000e+00> : vector<16x256xf32>
    %17 = tpu.matmul %16, %11, %cst_12 {dimension_numbers = #tpu.dot_dimension_numbers<[1], [0], [0], [1], [0, 0, 1, 1], [], []>} : vector<16x128xbf16>, vector<128x256xbf16>, vector<16x256xf32> -> vector<16x256xf32>
    %18 = arith.addf %9, %17 : vector<16x256xf32>
    %c2 = arith.constant 2 : index
    %c0_13 = arith.constant 0 : index
    %c0_14 = arith.constant 0 : index
    %19 = vector.load %arg3[%c2, %c0_13, %c0_14] : memref<5x128x256xbf16, #tpu.memory_space<vmem>>, vector<1x128x256xbf16>
    %20 = vector.shape_cast %19 : vector<1x128x256xbf16> to vector<128x256xbf16>
    %21 = vector.extract_strided_slice %0 {offsets = [1, 0], sizes = [15, 128], strides = [1, 1]} : vector<16x128xbf16> to vector<15x128xbf16>
    %22 = vector.extract_strided_slice %0 {offsets = [0, 0], sizes = [1, 128], strides = [1, 1]} : vector<16x128xbf16> to vector<1x128xbf16>
    %23 = tpu.concatenate %21, %22 in 0 : vector<15x128xbf16>, vector<1x128xbf16> -> vector<16x128xbf16>
    %cst_15 = arith.constant dense<0.000000e+00> : vector<16x256xf32>
    %24 = tpu.matmul %23, %20, %cst_15 {dimension_numbers = #tpu.dot_dimension_numbers<[1], [0], [0], [1], [0, 0, 1, 1], [], []>} : vector<16x128xbf16>, vector<128x256xbf16>, vector<16x256xf32> -> vector<16x256xf32>
    %25 = arith.addf %13, %24 : vector<16x256xf32>
    %26 = vector.extract_strided_slice %1 {offsets = [1, 0], sizes = [15, 128], strides = [1, 1]} : vector<16x128xbf16> to vector<15x128xbf16>
    %27 = vector.extract_strided_slice %1 {offsets = [0, 0], sizes = [1, 128], strides = [1, 1]} : vector<16x128xbf16> to vector<1x128xbf16>
    %28 = tpu.concatenate %26, %27 in 0 : vector<15x128xbf16>, vector<1x128xbf16> -> vector<16x128xbf16>
    %cst_16 = arith.constant dense<0.000000e+00> : vector<16x256xf32>
    %29 = tpu.matmul %28, %20, %cst_16 {dimension_numbers = #tpu.dot_dimension_numbers<[1], [0], [0], [1], [0, 0, 1, 1], [], []>} : vector<16x128xbf16>, vector<128x256xbf16>, vector<16x256xf32> -> vector<16x256xf32>
    %30 = arith.addf %18, %29 : vector<16x256xf32>
    %c3 = arith.constant 3 : index
    %c0_17 = arith.constant 0 : index
    %c0_18 = arith.constant 0 : index
    %31 = vector.load %arg3[%c3, %c0_17, %c0_18] : memref<5x128x256xbf16, #tpu.memory_space<vmem>>, vector<1x128x256xbf16>
    %32 = vector.shape_cast %31 : vector<1x128x256xbf16> to vector<128x256xbf16>
    %33 = vector.extract_strided_slice %1 {offsets = [1, 0], sizes = [15, 128], strides = [1, 1]} : vector<16x128xbf16> to vector<15x128xbf16>
    %34 = vector.extract_strided_slice %1 {offsets = [0, 0], sizes = [1, 128], strides = [1, 1]} : vector<16x128xbf16> to vector<1x128xbf16>
    %35 = tpu.concatenate %33, %34 in 0 : vector<15x128xbf16>, vector<1x128xbf16> -> vector<16x128xbf16>
    %cst_19 = arith.constant dense<0.000000e+00> : vector<16x256xf32>
    %36 = tpu.matmul %35, %32, %cst_19 {dimension_numbers = #tpu.dot_dimension_numbers<[1], [0], [0], [1], [0, 0, 1, 1], [], []>} : vector<16x128xbf16>, vector<128x256xbf16>, vector<16x256xf32> -> vector<16x256xf32>
    %37 = arith.addf %25, %36 : vector<16x256xf32>
    %38 = vector.extract_strided_slice %0 {offsets = [2, 0], sizes = [14, 128], strides = [1, 1]} : vector<16x128xbf16> to vector<14x128xbf16>
    %39 = vector.extract_strided_slice %0 {offsets = [0, 0], sizes = [2, 128], strides = [1, 1]} : vector<16x128xbf16> to vector<2x128xbf16>
    %40 = tpu.concatenate %38, %39 in 0 : vector<14x128xbf16>, vector<2x128xbf16> -> vector<16x128xbf16>
    %cst_20 = arith.constant dense<0.000000e+00> : vector<16x256xf32>
    %41 = tpu.matmul %40, %32, %cst_20 {dimension_numbers = #tpu.dot_dimension_numbers<[1], [0], [0], [1], [0, 0, 1, 1], [], []>} : vector<16x128xbf16>, vector<128x256xbf16>, vector<16x256xf32> -> vector<16x256xf32>
    %42 = arith.addf %30, %41 : vector<16x256xf32>
    %c4 = arith.constant 4 : index
    %c0_21 = arith.constant 0 : index
    %c0_22 = arith.constant 0 : index
    %43 = vector.load %arg3[%c4, %c0_21, %c0_22] : memref<5x128x256xbf16, #tpu.memory_space<vmem>>, vector<1x128x256xbf16>
    %44 = vector.shape_cast %43 : vector<1x128x256xbf16> to vector<128x256xbf16>
    %45 = vector.extract_strided_slice %0 {offsets = [2, 0], sizes = [14, 128], strides = [1, 1]} : vector<16x128xbf16> to vector<14x128xbf16>
    %46 = vector.extract_strided_slice %0 {offsets = [0, 0], sizes = [2, 128], strides = [1, 1]} : vector<16x128xbf16> to vector<2x128xbf16>
    %47 = tpu.concatenate %45, %46 in 0 : vector<14x128xbf16>, vector<2x128xbf16> -> vector<16x128xbf16>
    %cst_23 = arith.constant dense<0.000000e+00> : vector<16x256xf32>
    %48 = tpu.matmul %47, %44, %cst_23 {dimension_numbers = #tpu.dot_dimension_numbers<[1], [0], [0], [1], [0, 0, 1, 1], [], []>} : vector<16x128xbf16>, vector<128x256xbf16>, vector<16x256xf32> -> vector<16x256xf32>
    %49 = arith.addf %37, %48 : vector<16x256xf32>
    %50 = vector.extract_strided_slice %1 {offsets = [2, 0], sizes = [14, 128], strides = [1, 1]} : vector<16x128xbf16> to vector<14x128xbf16>
    %51 = vector.extract_strided_slice %1 {offsets = [0, 0], sizes = [2, 128], strides = [1, 1]} : vector<16x128xbf16> to vector<2x128xbf16>
    %52 = tpu.concatenate %50, %51 in 0 : vector<14x128xbf16>, vector<2x128xbf16> -> vector<16x128xbf16>
    %cst_24 = arith.constant dense<0.000000e+00> : vector<16x256xf32>
    %53 = tpu.matmul %52, %44, %cst_24 {dimension_numbers = #tpu.dot_dimension_numbers<[1], [0], [0], [1], [0, 0, 1, 1], [], []>} : vector<16x128xbf16>, vector<128x256xbf16>, vector<16x256xf32> -> vector<16x256xf32>
    %54 = arith.addf %42, %53 : vector<16x256xf32>
    %55 = arith.maximumf %49, %54 : vector<16x256xf32>
    %56 = vector.extract_strided_slice %55 {offsets = [0, 0], sizes = [16, 128], strides = [1, 1]} : vector<16x256xf32> to vector<16x128xf32>
    %57 = vector.extract_strided_slice %55 {offsets = [0, 128], sizes = [16, 128], strides = [1, 1]} : vector<16x256xf32> to vector<16x128xf32>
    %58 = arith.maximumf %56, %57 : vector<16x128xf32>
    %c0_25 = arith.constant 0 : index
    %c0_26 = arith.constant 0 : index
    %59 = vector.load %arg4[%c0_25, %c0_26] : memref<1x128xf32, #tpu.memory_space<vmem>>, vector<1x128xf32>
    %60 = vector.broadcast %59 : vector<1x128xf32> to vector<16x128xf32>
    %61 = arith.addf %58, %60 : vector<16x128xf32>
    %cst_27 = arith.constant 0.000000e+00 : f32
    %62 = vector.broadcast %cst_27 : f32 to vector<16x128xf32>
    %63 = arith.maximumf %61, %62 : vector<16x128xf32>
    %64 = arith.truncf %63 : vector<16x128xf32> to vector<16x128xbf16>
    %c0_28 = arith.constant 0 : index
    %c0_29 = arith.constant 0 : index
    %65 = vector.load %arg5[%c0_28, %c0_29] : memref<16x128xbf16, #tpu.memory_space<vmem>>, vector<16x128xbf16>
    tpu.vector_store %arg5[%c0_28, %c0_29], %64 {strides = array<i32>} : memref<16x128xbf16, #tpu.memory_space<vmem>>, vector<16x128xbf16>,
    return
  }
  func.func @transform_0(%arg0: i32) -> (i32, i32) {
    %c0_i32 = arith.constant 0 : i32
    %c0_i32_0 = arith.constant 0 : i32
    return %arg0, %c0_i32 : i32, i32
  }
  func.func @transform_1(%arg0: i32) -> (i32, i32) {
    %c0_i32 = arith.constant 0 : i32
    %c0_i32_0 = arith.constant 0 : i32
    return %arg0, %c0_i32 : i32, i32
  }
  func.func @transform_2(%arg0: i32) -> (i32, i32, i32) {
    %c0_i32 = arith.constant 0 : i32
    %c0_i32_0 = arith.constant 0 : i32
    %c0_i32_1 = arith.constant 0 : i32
    %c0_i32_2 = arith.constant 0 : i32
    return %c0_i32, %c0_i32_0, %c0_i32_1 : i32, i32, i32
  }
  func.func @transform_3(%arg0: i32) -> (i32, i32) {
    %c0_i32 = arith.constant 0 : i32
    %c0_i32_0 = arith.constant 0 : i32
    %c0_i32_1 = arith.constant 0 : i32
    return %c0_i32, %c0_i32_0 : i32, i32
  }
  func.func @transform_4(%arg0: i32) -> (i32, i32) {
    %c0_i32 = arith.constant 0 : i32
    %c0_i32_0 = arith.constant 0 : i32
    return %arg0, %c0_i32 : i32, i32
  }
}

module attributes {stable_mosaic.version = 11 : i64} {
  func.func @_conv_pool_kernel(%arg0: i32, %arg1: memref<32x128xbf16, #tpu.memory_space<vmem>>, %arg2: memref<32x128xbf16, #tpu.memory_space<vmem>>, %arg3: memref<5x128x256xbf16, #tpu.memory_space<vmem>>, %arg4: memref<1x128xf32, #tpu.memory_space<vmem>>, %arg5: memref<32x128xbf16, #tpu.memory_space<vmem>>) attributes {dimension_semantics = [#tpu.dimension_semantics<parallel>], iteration_bounds = array<i64: 1>, scalar_prefetch = 0 : i64, scratch_operands = 0 : i64, tpu.core_type = #tpu.core_type<tc>, window_params = [{transform_indices = @transform_0, window_bounds = array<i64: 32, 128>}, {transform_indices = @transform_1, window_bounds = array<i64: 32, 128>}, {pipeline_mode = #tpu.pipeline_mode<synchronous>, transform_indices = @transform_2, window_bounds = array<i64: 5, 128, 256>}, {pipeline_mode = #tpu.pipeline_mode<synchronous>, transform_indices = @transform_3, window_bounds = array<i64: 1, 128>}, {transform_indices = @transform_4, window_bounds = array<i64: 32, 128>}]} {
    %c0 = arith.constant 0 : index
    %c0_0 = arith.constant 0 : index
    %0 = vector.load %arg1[%c0, %c0_0] : memref<32x128xbf16, #tpu.memory_space<vmem>>, vector<32x128xbf16>
    %c0_1 = arith.constant 0 : index
    %c0_2 = arith.constant 0 : index
    %1 = vector.load %arg2[%c0_1, %c0_2] : memref<32x128xbf16, #tpu.memory_space<vmem>>, vector<32x128xbf16>
    %cst = arith.constant 0.000000e+00 : f32
    %2 = vector.broadcast %cst : f32 to vector<32x256xf32>
    %cst_3 = arith.constant 0.000000e+00 : f32
    %3 = vector.broadcast %cst_3 : f32 to vector<32x256xf32>
    %c0_4 = arith.constant 0 : index
    %c0_5 = arith.constant 0 : index
    %c0_6 = arith.constant 0 : index
    %4 = vector.load %arg3[%c0_4, %c0_5, %c0_6] : memref<5x128x256xbf16, #tpu.memory_space<vmem>>, vector<1x128x256xbf16>
    %5 = vector.shape_cast %4 : vector<1x128x256xbf16> to vector<128x256xbf16>
    %cst_7 = arith.constant dense<0.000000e+00> : vector<32x256xf32>
    %6 = tpu.matmul %0, %5, %cst_7 {dimension_numbers = #tpu.dot_dimension_numbers<[1], [0], [0], [1], [0, 0, 1, 1], [], []>} : vector<32x128xbf16>, vector<128x256xbf16>, vector<32x256xf32> -> vector<32x256xf32>
    %7 = arith.addf %2, %6 : vector<32x256xf32>
    %cst_8 = arith.constant dense<0.000000e+00> : vector<32x256xf32>
    %8 = tpu.matmul %1, %5, %cst_8 {dimension_numbers = #tpu.dot_dimension_numbers<[1], [0], [0], [1], [0, 0, 1, 1], [], []>} : vector<32x128xbf16>, vector<128x256xbf16>, vector<32x256xf32> -> vector<32x256xf32>
    %9 = arith.addf %3, %8 : vector<32x256xf32>
    %c1 = arith.constant 1 : index
    %c0_9 = arith.constant 0 : index
    %c0_10 = arith.constant 0 : index
    %10 = vector.load %arg3[%c1, %c0_9, %c0_10] : memref<5x128x256xbf16, #tpu.memory_space<vmem>>, vector<1x128x256xbf16>
    %11 = vector.shape_cast %10 : vector<1x128x256xbf16> to vector<128x256xbf16>
    %cst_11 = arith.constant dense<0.000000e+00> : vector<32x256xf32>
    %12 = tpu.matmul %1, %11, %cst_11 {dimension_numbers = #tpu.dot_dimension_numbers<[1], [0], [0], [1], [0, 0, 1, 1], [], []>} : vector<32x128xbf16>, vector<128x256xbf16>, vector<32x256xf32> -> vector<32x256xf32>
    %13 = arith.addf %7, %12 : vector<32x256xf32>
    %14 = vector.extract_strided_slice %0 {offsets = [1, 0], sizes = [31, 128], strides = [1, 1]} : vector<32x128xbf16> to vector<31x128xbf16>
    %15 = vector.extract_strided_slice %0 {offsets = [0, 0], sizes = [1, 128], strides = [1, 1]} : vector<32x128xbf16> to vector<1x128xbf16>
    %16 = tpu.concatenate %14, %15 in 0 : vector<31x128xbf16>, vector<1x128xbf16> -> vector<32x128xbf16>
    %cst_12 = arith.constant dense<0.000000e+00> : vector<32x256xf32>
    %17 = tpu.matmul %16, %11, %cst_12 {dimension_numbers = #tpu.dot_dimension_numbers<[1], [0], [0], [1], [0, 0, 1, 1], [], []>} : vector<32x128xbf16>, vector<128x256xbf16>, vector<32x256xf32> -> vector<32x256xf32>
    %18 = arith.addf %9, %17 : vector<32x256xf32>
    %c2 = arith.constant 2 : index
    %c0_13 = arith.constant 0 : index
    %c0_14 = arith.constant 0 : index
    %19 = vector.load %arg3[%c2, %c0_13, %c0_14] : memref<5x128x256xbf16, #tpu.memory_space<vmem>>, vector<1x128x256xbf16>
    %20 = vector.shape_cast %19 : vector<1x128x256xbf16> to vector<128x256xbf16>
    %21 = vector.extract_strided_slice %0 {offsets = [1, 0], sizes = [31, 128], strides = [1, 1]} : vector<32x128xbf16> to vector<31x128xbf16>
    %22 = vector.extract_strided_slice %0 {offsets = [0, 0], sizes = [1, 128], strides = [1, 1]} : vector<32x128xbf16> to vector<1x128xbf16>
    %23 = tpu.concatenate %21, %22 in 0 : vector<31x128xbf16>, vector<1x128xbf16> -> vector<32x128xbf16>
    %cst_15 = arith.constant dense<0.000000e+00> : vector<32x256xf32>
    %24 = tpu.matmul %23, %20, %cst_15 {dimension_numbers = #tpu.dot_dimension_numbers<[1], [0], [0], [1], [0, 0, 1, 1], [], []>} : vector<32x128xbf16>, vector<128x256xbf16>, vector<32x256xf32> -> vector<32x256xf32>
    %25 = arith.addf %13, %24 : vector<32x256xf32>
    %26 = vector.extract_strided_slice %1 {offsets = [1, 0], sizes = [31, 128], strides = [1, 1]} : vector<32x128xbf16> to vector<31x128xbf16>
    %27 = vector.extract_strided_slice %1 {offsets = [0, 0], sizes = [1, 128], strides = [1, 1]} : vector<32x128xbf16> to vector<1x128xbf16>
    %28 = tpu.concatenate %26, %27 in 0 : vector<31x128xbf16>, vector<1x128xbf16> -> vector<32x128xbf16>
    %cst_16 = arith.constant dense<0.000000e+00> : vector<32x256xf32>
    %29 = tpu.matmul %28, %20, %cst_16 {dimension_numbers = #tpu.dot_dimension_numbers<[1], [0], [0], [1], [0, 0, 1, 1], [], []>} : vector<32x128xbf16>, vector<128x256xbf16>, vector<32x256xf32> -> vector<32x256xf32>
    %30 = arith.addf %18, %29 : vector<32x256xf32>
    %c3 = arith.constant 3 : index
    %c0_17 = arith.constant 0 : index
    %c0_18 = arith.constant 0 : index
    %31 = vector.load %arg3[%c3, %c0_17, %c0_18] : memref<5x128x256xbf16, #tpu.memory_space<vmem>>, vector<1x128x256xbf16>
    %32 = vector.shape_cast %31 : vector<1x128x256xbf16> to vector<128x256xbf16>
    %33 = vector.extract_strided_slice %1 {offsets = [1, 0], sizes = [31, 128], strides = [1, 1]} : vector<32x128xbf16> to vector<31x128xbf16>
    %34 = vector.extract_strided_slice %1 {offsets = [0, 0], sizes = [1, 128], strides = [1, 1]} : vector<32x128xbf16> to vector<1x128xbf16>
    %35 = tpu.concatenate %33, %34 in 0 : vector<31x128xbf16>, vector<1x128xbf16> -> vector<32x128xbf16>
    %cst_19 = arith.constant dense<0.000000e+00> : vector<32x256xf32>
    %36 = tpu.matmul %35, %32, %cst_19 {dimension_numbers = #tpu.dot_dimension_numbers<[1], [0], [0], [1], [0, 0, 1, 1], [], []>} : vector<32x128xbf16>, vector<128x256xbf16>, vector<32x256xf32> -> vector<32x256xf32>
    %37 = arith.addf %25, %36 : vector<32x256xf32>
    %38 = vector.extract_strided_slice %0 {offsets = [2, 0], sizes = [30, 128], strides = [1, 1]} : vector<32x128xbf16> to vector<30x128xbf16>
    %39 = vector.extract_strided_slice %0 {offsets = [0, 0], sizes = [2, 128], strides = [1, 1]} : vector<32x128xbf16> to vector<2x128xbf16>
    %40 = tpu.concatenate %38, %39 in 0 : vector<30x128xbf16>, vector<2x128xbf16> -> vector<32x128xbf16>
    %cst_20 = arith.constant dense<0.000000e+00> : vector<32x256xf32>
    %41 = tpu.matmul %40, %32, %cst_20 {dimension_numbers = #tpu.dot_dimension_numbers<[1], [0], [0], [1], [0, 0, 1, 1], [], []>} : vector<32x128xbf16>, vector<128x256xbf16>, vector<32x256xf32> -> vector<32x256xf32>
    %42 = arith.addf %30, %41 : vector<32x256xf32>
    %c4 = arith.constant 4 : index
    %c0_21 = arith.constant 0 : index
    %c0_22 = arith.constant 0 : index
    %43 = vector.load %arg3[%c4, %c0_21, %c0_22] : memref<5x128x256xbf16, #tpu.memory_space<vmem>>, vector<1x128x256xbf16>
    %44 = vector.shape_cast %43 : vector<1x128x256xbf16> to vector<128x256xbf16>
    %45 = vector.extract_strided_slice %0 {offsets = [2, 0], sizes = [30, 128], strides = [1, 1]} : vector<32x128xbf16> to vector<30x128xbf16>
    %46 = vector.extract_strided_slice %0 {offsets = [0, 0], sizes = [2, 128], strides = [1, 1]} : vector<32x128xbf16> to vector<2x128xbf16>
    %47 = tpu.concatenate %45, %46 in 0 : vector<30x128xbf16>, vector<2x128xbf16> -> vector<32x128xbf16>
    %cst_23 = arith.constant dense<0.000000e+00> : vector<32x256xf32>
    %48 = tpu.matmul %47, %44, %cst_23 {dimension_numbers = #tpu.dot_dimension_numbers<[1], [0], [0], [1], [0, 0, 1, 1], [], []>} : vector<32x128xbf16>, vector<128x256xbf16>, vector<32x256xf32> -> vector<32x256xf32>
    %49 = arith.addf %37, %48 : vector<32x256xf32>
    %50 = vector.extract_strided_slice %1 {offsets = [2, 0], sizes = [30, 128], strides = [1, 1]} : vector<32x128xbf16> to vector<30x128xbf16>
    %51 = vector.extract_strided_slice %1 {offsets = [0, 0], sizes = [2, 128], strides = [1, 1]} : vector<32x128xbf16> to vector<2x128xbf16>
    %52 = tpu.concatenate %50, %51 in 0 : vector<30x128xbf16>, vector<2x128xbf16> -> vector<32x128xbf16>
    %cst_24 = arith.constant dense<0.000000e+00> : vector<32x256xf32>
    %53 = tpu.matmul %52, %44, %cst_24 {dimension_numbers = #tpu.dot_dimension_numbers<[1], [0], [0], [1], [0, 0, 1, 1], [], []>} : vector<32x128xbf16>, vector<128x256xbf16>, vector<32x256xf32> -> vector<32x256xf32>
    %54 = arith.addf %42, %53 : vector<32x256xf32>
    %55 = arith.maximumf %49, %54 : vector<32x256xf32>
    %56 = vector.extract_strided_slice %55 {offsets = [0, 0], sizes = [32, 128], strides = [1, 1]} : vector<32x256xf32> to vector<32x128xf32>
    %57 = vector.extract_strided_slice %55 {offsets = [0, 128], sizes = [32, 128], strides = [1, 1]} : vector<32x256xf32> to vector<32x128xf32>
    %58 = arith.maximumf %56, %57 : vector<32x128xf32>
    %c0_25 = arith.constant 0 : index
    %c0_26 = arith.constant 0 : index
    %59 = vector.load %arg4[%c0_25, %c0_26] : memref<1x128xf32, #tpu.memory_space<vmem>>, vector<1x128xf32>
    %60 = vector.broadcast %59 : vector<1x128xf32> to vector<32x128xf32>
    %61 = arith.addf %58, %60 : vector<32x128xf32>
    %cst_27 = arith.constant 0.000000e+00 : f32
    %62 = vector.broadcast %cst_27 : f32 to vector<32x128xf32>
    %63 = arith.maximumf %61, %62 : vector<32x128xf32>
    %64 = arith.truncf %63 : vector<32x128xf32> to vector<32x128xbf16>
    %c0_28 = arith.constant 0 : index
    %c0_29 = arith.constant 0 : index
    %65 = vector.load %arg5[%c0_28, %c0_29] : memref<32x128xbf16, #tpu.memory_space<vmem>>, vector<32x128xbf16>
    tpu.vector_store %arg5[%c0_28, %c0_29], %64 {strides = array<i32>} : memref<32x128xbf16, #tpu.memory_space<vmem>>, vector<32x128xbf16>,
    return
  }
  func.func @transform_0(%arg0: i32) -> (i32, i32) {
    %c0_i32 = arith.constant 0 : i32
    %c0_i32_0 = arith.constant 0 : i32
    return %arg0, %c0_i32 : i32, i32
  }
  func.func @transform_1(%arg0: i32) -> (i32, i32) {
    %c0_i32 = arith.constant 0 : i32
    %c0_i32_0 = arith.constant 0 : i32
    return %arg0, %c0_i32 : i32, i32
  }
  func.func @transform_2(%arg0: i32) -> (i32, i32, i32) {
    %c0_i32 = arith.constant 0 : i32
    %c0_i32_0 = arith.constant 0 : i32
    %c0_i32_1 = arith.constant 0 : i32
    %c0_i32_2 = arith.constant 0 : i32
    return %c0_i32, %c0_i32_0, %c0_i32_1 : i32, i32, i32
  }
  func.func @transform_3(%arg0: i32) -> (i32, i32) {
    %c0_i32 = arith.constant 0 : i32
    %c0_i32_0 = arith.constant 0 : i32
    %c0_i32_1 = arith.constant 0 : i32
    return %c0_i32, %c0_i32_0 : i32, i32
  }
  func.func @transform_4(%arg0: i32) -> (i32, i32) {
    %c0_i32 = arith.constant 0 : i32
    %c0_i32_0 = arith.constant 0 : i32
    return %arg0, %c0_i32 : i32, i32
  }
}

module attributes {stable_mosaic.version = 11 : i64} {
  func.func @_mlp_kernel(%arg0: i32, %arg1: memref<2x640xbf16, #tpu.memory_space<vmem>>, %arg2: memref<640x128xbf16, #tpu.memory_space<vmem>>, %arg3: memref<1x128xf32, #tpu.memory_space<vmem>>, %arg4: memref<128x128xbf16, #tpu.memory_space<vmem>>, %arg5: memref<1x128xf32, #tpu.memory_space<vmem>>, %arg6: memref<128x128xbf16, #tpu.memory_space<vmem>>, %arg7: memref<1x128xf32, #tpu.memory_space<vmem>>, %arg8: memref<2x128xf32, #tpu.memory_space<vmem>>) attributes {dimension_semantics = [#tpu.dimension_semantics<parallel>], iteration_bounds = array<i64: 1>, scalar_prefetch = 0 : i64, scratch_operands = 0 : i64, tpu.core_type = #tpu.core_type<tc>, window_params = [{transform_indices = @transform_0, window_bounds = array<i64: 2, 640>}, {pipeline_mode = #tpu.pipeline_mode<synchronous>, transform_indices = @transform_1, window_bounds = array<i64: 640, 128>}, {pipeline_mode = #tpu.pipeline_mode<synchronous>, transform_indices = @transform_2, window_bounds = array<i64: 1, 128>}, {pipeline_mode = #tpu.pipeline_mode<synchronous>, transform_indices = @transform_3, window_bounds = array<i64: 128, 128>}, {pipeline_mode = #tpu.pipeline_mode<synchronous>, transform_indices = @transform_4, window_bounds = array<i64: 1, 128>}, {pipeline_mode = #tpu.pipeline_mode<synchronous>, transform_indices = @transform_5, window_bounds = array<i64: 128, 128>}, {pipeline_mode = #tpu.pipeline_mode<synchronous>, transform_indices = @transform_6, window_bounds = array<i64: 1, 128>}, {transform_indices = @transform_7, window_bounds = array<i64: 2, 128>}]} {
    %c0 = arith.constant 0 : index
    %c0_0 = arith.constant 0 : index
    %0 = vector.load %arg1[%c0, %c0_0] : memref<2x640xbf16, #tpu.memory_space<vmem>>, vector<2x640xbf16>
    %c0_1 = arith.constant 0 : index
    %c0_2 = arith.constant 0 : index
    %1 = vector.load %arg2[%c0_1, %c0_2] : memref<640x128xbf16, #tpu.memory_space<vmem>>, vector<640x128xbf16>
    %cst = arith.constant dense<0.000000e+00> : vector<2x128xf32>
    %2 = tpu.matmul %0, %1, %cst {dimension_numbers = #tpu.dot_dimension_numbers<[1], [0], [0], [1], [0, 0, 1, 1], [], []>} : vector<2x640xbf16>, vector<640x128xbf16>, vector<2x128xf32> -> vector<2x128xf32>
    %c0_3 = arith.constant 0 : index
    %c0_4 = arith.constant 0 : index
    %3 = vector.load %arg3[%c0_3, %c0_4] : memref<1x128xf32, #tpu.memory_space<vmem>>, vector<1x128xf32>
    %4 = vector.broadcast %3 : vector<1x128xf32> to vector<2x128xf32>
    %5 = arith.addf %2, %4 : vector<2x128xf32>
    %cst_5 = arith.constant 0.000000e+00 : f32
    %6 = vector.broadcast %cst_5 : f32 to vector<2x128xf32>
    %7 = arith.maximumf %5, %6 : vector<2x128xf32>
    %8 = arith.truncf %7 : vector<2x128xf32> to vector<2x128xbf16>
    %c0_6 = arith.constant 0 : index
    %c0_7 = arith.constant 0 : index
    %9 = vector.load %arg4[%c0_6, %c0_7] : memref<128x128xbf16, #tpu.memory_space<vmem>>, vector<128x128xbf16>
    %cst_8 = arith.constant dense<0.000000e+00> : vector<2x128xf32>
    %10 = tpu.matmul %8, %9, %cst_8 {dimension_numbers = #tpu.dot_dimension_numbers<[1], [0], [0], [1], [0, 0, 1, 1], [], []>} : vector<2x128xbf16>, vector<128x128xbf16>, vector<2x128xf32> -> vector<2x128xf32>
    %c0_9 = arith.constant 0 : index
    %c0_10 = arith.constant 0 : index
    %11 = vector.load %arg5[%c0_9, %c0_10] : memref<1x128xf32, #tpu.memory_space<vmem>>, vector<1x128xf32>
    %12 = vector.broadcast %11 : vector<1x128xf32> to vector<2x128xf32>
    %13 = arith.addf %10, %12 : vector<2x128xf32>
    %cst_11 = arith.constant 0.000000e+00 : f32
    %14 = vector.broadcast %cst_11 : f32 to vector<2x128xf32>
    %15 = arith.maximumf %13, %14 : vector<2x128xf32>
    %16 = arith.truncf %15 : vector<2x128xf32> to vector<2x128xbf16>
    %c0_12 = arith.constant 0 : index
    %c0_13 = arith.constant 0 : index
    %17 = vector.load %arg6[%c0_12, %c0_13] : memref<128x128xbf16, #tpu.memory_space<vmem>>, vector<128x128xbf16>
    %cst_14 = arith.constant dense<0.000000e+00> : vector<2x128xf32>
    %18 = tpu.matmul %16, %17, %cst_14 {dimension_numbers = #tpu.dot_dimension_numbers<[1], [0], [0], [1], [0, 0, 1, 1], [], []>} : vector<2x128xbf16>, vector<128x128xbf16>, vector<2x128xf32> -> vector<2x128xf32>
    %c0_15 = arith.constant 0 : index
    %c0_16 = arith.constant 0 : index
    %19 = vector.load %arg7[%c0_15, %c0_16] : memref<1x128xf32, #tpu.memory_space<vmem>>, vector<1x128xf32>
    %20 = vector.broadcast %19 : vector<1x128xf32> to vector<2x128xf32>
    %21 = arith.addf %18, %20 : vector<2x128xf32>
    %c0_17 = arith.constant 0 : index
    %c0_18 = arith.constant 0 : index
    %22 = vector.load %arg8[%c0_17, %c0_18] : memref<2x128xf32, #tpu.memory_space<vmem>>, vector<2x128xf32>
    tpu.vector_store %arg8[%c0_17, %c0_18], %21 {strides = array<i32>} : memref<2x128xf32, #tpu.memory_space<vmem>>, vector<2x128xf32>,
    return
  }
  func.func @transform_0(%arg0: i32) -> (i32, i32) {
    %c0_i32 = arith.constant 0 : i32
    %c0_i32_0 = arith.constant 0 : i32
    return %arg0, %c0_i32 : i32, i32
  }
  func.func @transform_1(%arg0: i32) -> (i32, i32) {
    %c0_i32 = arith.constant 0 : i32
    %c0_i32_0 = arith.constant 0 : i32
    %c0_i32_1 = arith.constant 0 : i32
    return %c0_i32, %c0_i32_0 : i32, i32
  }
  func.func @transform_2(%arg0: i32) -> (i32, i32) {
    %c0_i32 = arith.constant 0 : i32
    %c0_i32_0 = arith.constant 0 : i32
    %c0_i32_1 = arith.constant 0 : i32
    return %c0_i32, %c0_i32_0 : i32, i32
  }
  func.func @transform_3(%arg0: i32) -> (i32, i32) {
    %c0_i32 = arith.constant 0 : i32
    %c0_i32_0 = arith.constant 0 : i32
    %c0_i32_1 = arith.constant 0 : i32
    return %c0_i32, %c0_i32_0 : i32, i32
  }
  func.func @transform_4(%arg0: i32) -> (i32, i32) {
    %c0_i32 = arith.constant 0 : i32
    %c0_i32_0 = arith.constant 0 : i32
    %c0_i32_1 = arith.constant 0 : i32
    return %c0_i32, %c0_i32_0 : i32, i32
  }
  func.func @transform_5(%arg0: i32) -> (i32, i32) {
    %c0_i32 = arith.constant 0 : i32
    %c0_i32_0 = arith.constant 0 : i32
    %c0_i32_1 = arith.constant 0 : i32
    return %c0_i32, %c0_i32_0 : i32, i32
  }
  func.func @transform_6(%arg0: i32) -> (i32, i32) {
    %c0_i32 = arith.constant 0 : i32
    %c0_i32_0 = arith.constant 0 : i32
    %c0_i32_1 = arith.constant 0 : i32
    return %c0_i32, %c0_i32_0 : i32, i32
  }
  func.func @transform_7(%arg0: i32) -> (i32, i32) {
    %c0_i32 = arith.constant 0 : i32
    %c0_i32_0 = arith.constant 0 : i32
    return %arg0, %c0_i32 : i32, i32
  }
}

</mosaic_0001>

<llo_original>
// kernel: local_net_forward.5
$region0: #{local_net_forward.5}
  #allocation0 [shape = 'u32[]', space=smem, size = 0x4, offset = 0x4, fixed_abs, tag = 'smem constant byte address 0x4 - core index']
  #allocation1 [shape = 'u32[144,128]{1,0:T(1,128)}', space=vmem, size = 0x12000, scoped, tag = 'internal scratch']
  %s0 = inlined_call_operand.vmem [shape: bf16[2,640], index: 0, kind: input, shape index: {}]
  %s1 = inlined_call_operand.vmem [shape: bf16[640,128], index: 1, kind: input, shape index: {}]
  %s2 = inlined_call_operand.vmem [shape: f32[1,128], index: 2, kind: input, shape index: {}]
  %s3 = inlined_call_operand.vmem [shape: bf16[128,128], index: 3, kind: input, shape index: {}]
  %s4 = inlined_call_operand.vmem [shape: f32[1,128], index: 4, kind: input, shape index: {}]
  %s5 = inlined_call_operand.vmem [shape: bf16[128,128], index: 5, kind: input, shape index: {}]
  %s6 = inlined_call_operand.vmem [shape: f32[1,128], index: 6, kind: input, shape index: {}]
  %s7 = inlined_call_operand.hbm [shape: f32[2,128], index: 7, kind: output, shape index: {}]
  %s8 = sld [smem:[#allocation0]]
  $region38: #{local_net_forward.5} parent=0
    _
  %s10 = ssub.s32 1, %s8
  %s11 = scalar_select 0, %s10, %s8
  $region1: #{local_net_forward.5} parent=0
    #allocation2 [shape = 'u8[1024]{0}', space=vmem, size = 0x400, scoped, tag = 'output window, operand 0, single buffered']
    #allocation3 [shape = 's32[1]{0}', space=sflag, size = 0x4, scoped, tag = 'scoped memory for local_net_forward.5']
    %12 = vsyncpa [#allocation3], 0
    // Predicated region
    $region2: #{local_net_forward.5} parent=1 // pred_check
      _
    $region3: #{local_net_forward.5} parent=1 // pred_check_branch
      %14 = sbr.rel (0) target = $region5
    $region4: #{local_net_forward.5} parent=1 // pred_region
      _
    $region5: #{local_net_forward.5} parent=1 // pred_fallthru
      _
    // Predicated region
    $region6: #{local_net_forward.5} parent=1 // pred_check
      _
    $region7: #{local_net_forward.5} parent=1 // pred_check_branch
      %16 = sbr.rel (0) target = $region9
    $region8: #{local_net_forward.5} parent=1 // pred_region
      _
    $region9: #{local_net_forward.5} parent=1 // pred_fallthru
      _
    // Predicated region
    $region10: #{local_net_forward.5} parent=1 // pred_check
      _
    $region11: #{local_net_forward.5} parent=1 // pred_check_branch
      %18 = sbr.rel (0) target = $region13
    $region12: #{local_net_forward.5} parent=1 // pred_region
      _
    $region13: #{local_net_forward.5} parent=1 // pred_fallthru
      _
    // Predicated region
    $region14: #{local_net_forward.5} parent=1 // pred_check
      _
    $region15: #{local_net_forward.5} parent=1 // pred_check_branch
      %20 = sbr.rel (0) target = $region17
    $region16: #{local_net_forward.5} parent=1 // pred_region
      _
    $region17: #{local_net_forward.5} parent=1 // pred_fallthru
      _
    // Predicated region
    $region18: #{local_net_forward.5} parent=1 // pred_check
      _
    $region19: #{local_net_forward.5} parent=1 // pred_check_branch
      %22 = sbr.rel (0) target = $region21
    $region20: #{local_net_forward.5} parent=1 // pred_region
      _
    $region21: #{local_net_forward.5} parent=1 // pred_fallthru
      _
    // Predicated region
    $region22: #{local_net_forward.5} parent=1 // pred_check
      _
    $region23: #{local_net_forward.5} parent=1 // pred_check_branch
      %24 = sbr.rel (0) target = $region25
    $region24: #{local_net_forward.5} parent=1 // pred_region
      _
    $region25: #{local_net_forward.5} parent=1 // pred_fallthru
      _
    // Predicated region
    $region26: #{local_net_forward.5} parent=1 // pred_check
      _
    $region27: #{local_net_forward.5} parent=1 // pred_check_branch
      %26 = sbr.rel (0) target = $region29
    $region28: #{local_net_forward.5} parent=1 // pred_region
      _
    $region29: #{local_net_forward.5} parent=1 // pred_fallthru
      _
    %v28 = vld [vmem:[%s0] sm:$0x1f]
    %v29 = vld [vmem:[%s1] sm:$0xf]
    %v30 = vld [vmem:[%s1 + $0x4] sm:$0xf]
    %v31 = vld [vmem:[%s1 + $0x8] sm:$0xf]
    %v32 = vld [vmem:[%s1 + $0xc] sm:$0xf]
    %v33 = vld [vmem:[%s1 + $0x10] sm:$0xf]
    %v34 = vld [vmem:[%s1 + $0x14] sm:$0xf]
    %v35 = vld [vmem:[%s1 + $0x18] sm:$0xf]
    %v36 = vld [vmem:[%s1 + $0x1c] sm:$0xf]
    %v37 = vld [vmem:[%s1 + $0x20] sm:$0xf]
    %v38 = vld [vmem:[%s1 + $0x24] sm:$0xf]
    %v39 = vld [vmem:[%s1 + $0x28] sm:$0xf]
    %v40 = vld [vmem:[%s1 + $0x2c] sm:$0xf]
    %v41 = vld [vmem:[%s1 + $0x30] sm:$0xf]
    %v42 = vld [vmem:[%s1 + $0x34] sm:$0xf]
    %v43 = vld [vmem:[%s1 + $0x38] sm:$0xf]
    %v44 = vld [vmem:[%s1 + $0x3c] sm:$0xf]
    %v45 = vld [vmem:[%s1 + $0x40] sm:$0xf]
    %v46 = vld [vmem:[%s1 + $0x44] sm:$0xf]
    %v47 = vld [vmem:[%s1 + $0x48] sm:$0xf]
    %v48 = vld [vmem:[%s1 + $0x4c] sm:$0xf]
    %v49 = vld [vmem:[%s1 + $0x50] sm:$0xf]
    %v50 = vld [vmem:[%s1 + $0x54] sm:$0xf]
    %v51 = vld [vmem:[%s1 + $0x58] sm:$0xf]
    %v52 = vld [vmem:[%s1 + $0x5c] sm:$0xf]
    %v53 = vld [vmem:[%s1 + $0x60] sm:$0xf]
    %v54 = vld [vmem:[%s1 + $0x64] sm:$0xf]
    %v55 = vld [vmem:[%s1 + $0x68] sm:$0xf]
    %v56 = vld [vmem:[%s1 + $0x6c] sm:$0xf]
    %v57 = vld [vmem:[%s1 + $0x70] sm:$0xf]
    %v58 = vld [vmem:[%s1 + $0x74] sm:$0xf]
    %v59 = vld [vmem:[%s1 + $0x78] sm:$0xf]
    %v60 = vld [vmem:[%s1 + $0x7c] sm:$0xf]
    %v61 = vld [vmem:[%s1 + $0x80] sm:$0xf]
    %v62 = vld [vmem:[%s1 + $0x84] sm:$0xf]
    %v63 = vld [vmem:[%s1 + $0x88] sm:$0xf]
    %v64 = vld [vmem:[%s1 + $0x8c] sm:$0xf]
    %v65 = vld [vmem:[%s1 + $0x90] sm:$0xf]
    %v66 = vld [vmem:[%s1 + $0x94] sm:$0xf]
    %v67 = vld [vmem:[%s1 + $0x98] sm:$0xf]
    %v68 = vld [vmem:[%s1 + $0x9c] sm:$0xf]
    %v69 = vld [vmem:[%s1 + $0xa0] sm:$0xf]
    %v70 = vld [vmem:[%s1 + $0xa4] sm:$0xf]
    %v71 = vld [vmem:[%s1 + $0xa8] sm:$0xf]
    %v72 = vld [vmem:[%s1 + $0xac] sm:$0xf]
    %v73 = vld [vmem:[%s1 + $0xb0] sm:$0xf]
    %v74 = vld [vmem:[%s1 + $0xb4] sm:$0xf]
    %v75 = vld [vmem:[%s1 + $0xb8] sm:$0xf]
    %v76 = vld [vmem:[%s1 + $0xbc] sm:$0xf]
    %v77 = vld [vmem:[%s1 + $0xc0] sm:$0xf]
    %v78 = vld [vmem:[%s1 + $0xc4] sm:$0xf]
    %v79 = vld [vmem:[%s1 + $0xc8] sm:$0xf]
    %v80 = vld [vmem:[%s1 + $0xcc] sm:$0xf]
    %v81 = vld [vmem:[%s1 + $0xd0] sm:$0xf]
    %v82 = vld [vmem:[%s1 + $0xd4] sm:$0xf]
    %v83 = vld [vmem:[%s1 + $0xd8] sm:$0xf]
    %v84 = vld [vmem:[%s1 + $0xdc] sm:$0xf]
    %v85 = vld [vmem:[%s1 + $0xe0] sm:$0xf]
    %v86 = vld [vmem:[%s1 + $0xe4] sm:$0xf]
    %v87 = vld [vmem:[%s1 + $0xe8] sm:$0xf]
    %v88 = vld [vmem:[%s1 + $0xec] sm:$0xf]
    %v89 = vld [vmem:[%s1 + $0xf0] sm:$0xf]
    %v90 = vld [vmem:[%s1 + $0xf4] sm:$0xf]
    %v91 = vld [vmem:[%s1 + $0xf8] sm:$0xf]
    %v92 = vld [vmem:[%s1 + $0xfc] sm:$0xf]
    %v93 = vld [vmem:[%s1 + $0x100] sm:$0xf]
    %v94 = vld [vmem:[%s1 + $0x104] sm:$0xf]
    %v95 = vld [vmem:[%s1 + $0x108] sm:$0xf]
    %v96 = vld [vmem:[%s1 + $0x10c] sm:$0xf]
    %v97 = vld [vmem:[%s1 + $0x110] sm:$0xf]
    %v98 = vld [vmem:[%s1 + $0x114] sm:$0xf]
    %v99 = vld [vmem:[%s1 + $0x118] sm:$0xf]
    %v100 = vld [vmem:[%s1 + $0x11c] sm:$0xf]
    %v101 = vld [vmem:[%s1 + $0x120] sm:$0xf]
    %v102 = vld [vmem:[%s1 + $0x124] sm:$0xf]
    %v103 = vld [vmem:[%s1 + $0x128] sm:$0xf]
    %v104 = vld [vmem:[%s1 + $0x12c] sm:$0xf]
    %v105 = vld [vmem:[%s1 + $0x130] sm:$0xf]
    %v106 = vld [vmem:[%s1 + $0x134] sm:$0xf]
    %v107 = vld [vmem:[%s1 + $0x138] sm:$0xf]
    %v108 = vld [vmem:[%s1 + $0x13c] sm:$0xf]
    %v109 = vld [vmem:[%s2] sm:$0x1]
    %v111 = vlaneseq
    %v112 = vshrl.u32 %v111, 7
    %v113 = vsub.s32 0, %v112
    %v114 = vrot.slane %v109, %v113
    %v117 = vcombine.high %v28, %v28
    %v119 = vunpack.c.l.s4 1966171168
    %v120 = vunpack.c.0.s8 %v119
    %v121 = vlaneseq
    %v122 = vshrl.u32 %v121, 7
    %v123 = vsub.s32 %v120, %v122
    %v124 = vrot.slane %v28, %v123
    %v126 = vunpack.c.l.s4 1966171168
    %v127 = vunpack.c.0.s8 %v126
    %v128 = vlaneseq
    %v129 = vshrl.u32 %v128, 7
    %v130 = vsub.s32 %v127, %v129
    %v131 = vrot.slane %v117, %v130
    %v132 = vcombine.high %v124, %v124
    %v134 = vunpack.c.l.s4 1966171168
    %v135 = vunpack.c.0.s8 %v134
    %v136 = vlaneseq
    %v137 = vshrl.u32 %v136, 7
    %v138 = vsub.s32 %v135, %v137
    %v139 = vrot.slane %v124, %v138
    %v141 = vunpack.c.l.s4 1966171168
    %v142 = vunpack.c.0.s8 %v141
    %v143 = vlaneseq
    %v144 = vshrl.u32 %v143, 7
    %v145 = vsub.s32 %v142, %v144
    %v146 = vrot.slane %v131, %v145
    %v148 = vunpack.c.l.s4 1966171168
    %v149 = vunpack.c.0.s8 %v148
    %v150 = vlaneseq
    %v151 = vshrl.u32 %v150, 7
    %v152 = vsub.s32 %v149, %v151
    %v153 = vrot.slane %v132, %v152
    %v154 = vcombine.high %v139, %v139
    %v155 = vcombine.high %v153, %v153
    %v241 = vunpack.c.l.b16 %v29
    %v242 = vunpack.c.l.b16 %v30
    %v243 = vunpack.c.l.b16 %v31
    %v244 = vunpack.c.l.b16 %v32
    %v245 = vunpack.c.l.b16 %v33
    %v246 = vunpack.c.l.b16 %v34
    %v247 = vunpack.c.l.b16 %v35
    %v248 = vunpack.c.l.b16 %v36
    %v249 = vunpack.c.l.b16 %v37
    %v250 = vunpack.c.l.b16 %v38
    %v251 = vunpack.c.l.b16 %v39
    %v252 = vunpack.c.l.b16 %v40
    %v253 = vunpack.c.l.b16 %v41
    %v254 = vunpack.c.l.b16 %v42
    %v255 = vunpack.c.l.b16 %v43
    %v256 = vunpack.c.l.b16 %v44
    %v257 = vunpack.c.l.b16 %v45
    %v258 = vunpack.c.l.b16 %v46
    %v259 = vunpack.c.l.b16 %v47
    %v260 = vunpack.c.l.b16 %v48
    %v261 = vunpack.c.l.b16 %v49
    %v262 = vunpack.c.l.b16 %v50
    %v263 = vunpack.c.l.b16 %v51
    %v264 = vunpack.c.l.b16 %v52
    %v265 = vunpack.c.l.b16 %v53
    %v266 = vunpack.c.l.b16 %v54
    %v267 = vunpack.c.l.b16 %v55
    %v268 = vunpack.c.l.b16 %v56
    %v269 = vunpack.c.l.b16 %v57
    %v270 = vunpack.c.l.b16 %v58
    %v271 = vunpack.c.l.b16 %v59
    %v272 = vunpack.c.l.b16 %v60
    %v273 = vunpack.c.l.b16 %v61
    %v274 = vunpack.c.l.b16 %v62
    %v275 = vunpack.c.l.b16 %v63
    %v276 = vunpack.c.l.b16 %v64
    %v277 = vunpack.c.l.b16 %v65
    %v278 = vunpack.c.l.b16 %v66
    %v279 = vunpack.c.l.b16 %v67
    %v280 = vunpack.c.l.b16 %v68
    %v281 = vunpack.c.l.b16 %v69
    %v282 = vunpack.c.l.b16 %v70
    %v283 = vunpack.c.l.b16 %v71
    %v284 = vunpack.c.l.b16 %v72
    %v285 = vunpack.c.l.b16 %v73
    %v286 = vunpack.c.l.b16 %v74
    %v287 = vunpack.c.l.b16 %v75
    %v288 = vunpack.c.l.b16 %v76
    %v289 = vunpack.c.l.b16 %v77
    %v290 = vunpack.c.l.b16 %v78
    %v291 = vunpack.c.l.b16 %v79
    %v292 = vunpack.c.l.b16 %v80
    %v293 = vunpack.c.l.b16 %v81
    %v294 = vunpack.c.l.b16 %v82
    %v295 = vunpack.c.l.b16 %v83
    %v296 = vunpack.c.l.b16 %v84
    %v297 = vunpack.c.l.b16 %v85
    %v298 = vunpack.c.l.b16 %v86
    %v299 = vunpack.c.l.b16 %v87
    %v300 = vunpack.c.l.b16 %v88
    %v301 = vunpack.c.l.b16 %v89
    %v302 = vunpack.c.l.b16 %v90
    %v303 = vunpack.c.l.b16 %v91
    %v304 = vunpack.c.l.b16 %v92
    %v305 = vunpack.c.l.b16 %v93
    %v306 = vunpack.c.l.b16 %v94
    %v307 = vunpack.c.l.b16 %v95
    %v308 = vunpack.c.l.b16 %v96
    %v309 = vunpack.c.l.b16 %v97
    %v310 = vunpack.c.l.b16 %v98
    %v311 = vunpack.c.l.b16 %v99
    %v312 = vunpack.c.l.b16 %v100
    %v313 = vunpack.c.l.b16 %v101
    %v314 = vunpack.c.l.b16 %v102
    %v315 = vunpack.c.l.b16 %v103
    %v316 = vunpack.c.l.b16 %v104
    %v317 = vunpack.c.l.b16 %v105
    %v318 = vunpack.c.l.b16 %v106
    %v319 = vunpack.c.l.b16 %v107
    %v320 = vunpack.c.l.b16 %v108
    %v321 = vpack.c.b16 %v242, %v241
    %v322 = vpack.c.b16 %v244, %v243
    %v323 = vpack.c.b16 %v246, %v245
    %v324 = vpack.c.b16 %v248, %v247
    %v325 = vpack.c.b16 %v250, %v249
    %v326 = vpack.c.b16 %v252, %v251
    %v327 = vpack.c.b16 %v254, %v253
    %v328 = vpack.c.b16 %v256, %v255
    %v329 = vpack.c.b16 %v258, %v257
    %v330 = vpack.c.b16 %v260, %v259
    %v331 = vpack.c.b16 %v262, %v261
    %v332 = vpack.c.b16 %v264, %v263
    %v333 = vpack.c.b16 %v266, %v265
    %v334 = vpack.c.b16 %v268, %v267
    %v335 = vpack.c.b16 %v270, %v269
    %v336 = vpack.c.b16 %v272, %v271
    %v337 = vpack.c.b16 %v274, %v273
    %v338 = vpack.c.b16 %v276, %v275
    %v339 = vpack.c.b16 %v278, %v277
    %v340 = vpack.c.b16 %v280, %v279
    %v341 = vpack.c.b16 %v282, %v281
    %v342 = vpack.c.b16 %v284, %v283
    %v343 = vpack.c.b16 %v286, %v285
    %v344 = vpack.c.b16 %v288, %v287
    %v345 = vpack.c.b16 %v290, %v289
    %v346 = vpack.c.b16 %v292, %v291
    %v347 = vpack.c.b16 %v294, %v293
    %v348 = vpack.c.b16 %v296, %v295
    %v349 = vpack.c.b16 %v298, %v297
    %v350 = vpack.c.b16 %v300, %v299
    %v351 = vpack.c.b16 %v302, %v301
    %v352 = vpack.c.b16 %v304, %v303
    %v353 = vpack.c.b16 %v306, %v305
    %v354 = vpack.c.b16 %v308, %v307
    %v355 = vpack.c.b16 %v310, %v309
    %v356 = vpack.c.b16 %v312, %v311
    %v357 = vpack.c.b16 %v314, %v313
    %v358 = vpack.c.b16 %v316, %v315
    %v359 = vpack.c.b16 %v318, %v317
    %v360 = vpack.c.b16 %v320, %v319
    %401 = vmatprep.subr.bf16.mxu0 0
    %402 = vmatpush1.bf16.msra.mxu0 %v321
    %403 = vmatprep.subr.bf16.mxu0 0
    %404 = vmatpush1.bf16.msra.mxu0 %v322
    %405 = vmatprep.subr.bf16.mxu0 0
    %406 = vmatpush1.bf16.msra.mxu0 %v323
    %407 = vmatprep.subr.bf16.mxu0 0
    %408 = vmatpush1.bf16.msra.mxu0 %v324
    %409 = vmatprep.subr.bf16.mxu0 0
    %410 = vmatpush1.bf16.msra.mxu0 %v325
    %411 = vmatprep.subr.bf16.mxu0 0
    %412 = vmatpush1.bf16.msra.mxu0 %v326
    %413 = vmatprep.subr.bf16.mxu0 0
    %414 = vmatpush1.bf16.msra.mxu0 %v327
    %415 = vmatprep.subr.bf16.mxu0 0
    %416 = vmatpush1.bf16.msra.mxu0 %v328
    %417 = vmatprep.subr.bf16.mxu0 0
    %418 = vmatpush1.bf16.msra.mxu0 %v329
    %419 = vmatprep.subr.bf16.mxu0 0
    %420 = vmatpush1.bf16.msra.mxu0 %v330
    %421 = vmatprep.subr.bf16.mxu0 0
    %422 = vmatpush1.bf16.msra.mxu0 %v331
    %423 = vmatprep.subr.bf16.mxu0 0
    %424 = vmatpush1.bf16.msra.mxu0 %v332
    %425 = vmatprep.subr.bf16.mxu0 0
    %426 = vmatpush1.bf16.msra.mxu0 %v333
    %427 = vmatprep.subr.bf16.mxu0 0
    %428 = vmatpush1.bf16.msra.mxu0 %v334
    %429 = vmatprep.subr.bf16.mxu0 0
    %430 = vmatpush1.bf16.msra.mxu0 %v335
    %431 = vmatprep.subr.bf16.mxu0 0
    %432 = vmatpush1.bf16.msra.mxu0 %v336
    %433 = vmatprep.mubr.bf16.mxu0 %v153
    %434 = vmatmul.mubr.bf16.gmra.mrb[0].mxu0 %v139
    %v435 = vpop.f32.mrb[0].mxu0
    %v436 = vadd.f32 %v114, %v435
    %v437 = vpop.f32.mrb[0].mxu0
    %v438 = vpop.f32.mrb[0].mxu0
    %v439 = vpop.f32.mrb[0].mxu0
    %440 = vdwg.mxu0
    %441 = vmatprep.subr.bf16.mxu0 0
    %442 = vmatpush1.bf16.msra.mxu0 %v337
    %443 = vmatprep.subr.bf16.mxu0 0
    %444 = vmatpush1.bf16.msra.mxu0 %v338
    %445 = vmatprep.subr.bf16.mxu0 0
    %446 = vmatpush1.bf16.msra.mxu0 %v339
    %447 = vmatprep.subr.bf16.mxu0 0
    %448 = vmatpush1.bf16.msra.mxu0 %v340
    %449 = vmatprep.subr.bf16.mxu0 0
    %450 = vmatpush1.bf16.msra.mxu0 %v341
    %451 = vmatprep.subr.bf16.mxu0 0
    %452 = vmatpush1.bf16.msra.mxu0 %v342
    %453 = vmatprep.subr.bf16.mxu0 0
    %454 = vmatpush1.bf16.msra.mxu0 %v343
    %455 = vmatprep.subr.bf16.mxu0 0
    %456 = vmatpush1.bf16.msra.mxu0 %v344
    %457 = vmatprep.subr.bf16.mxu0 0
    %458 = vmatpush1.bf16.msra.mxu0 %v345
    %459 = vmatprep.subr.bf16.mxu0 0
    %460 = vmatpush1.bf16.msra.mxu0 %v346
    %461 = vmatprep.subr.bf16.mxu0 0
    %462 = vmatpush1.bf16.msra.mxu0 %v347
    %463 = vmatprep.subr.bf16.mxu0 0
    %464 = vmatpush1.bf16.msra.mxu0 %v348
    %465 = vmatprep.subr.bf16.mxu0 0
    %466 = vmatpush1.bf16.msra.mxu0 %v349
    %467 = vmatprep.subr.bf16.mxu0 0
    %468 = vmatpush1.bf16.msra.mxu0 %v350
    %469 = vmatprep.subr.bf16.mxu0 0
    %470 = vmatpush1.bf16.msra.mxu0 %v351
    %471 = vmatprep.subr.bf16.mxu0 0
    %472 = vmatpush1.bf16.msra.mxu0 %v352
    %473 = vmatprep.mubr.bf16.mxu0 %v155
    %474 = vmatmul.mubr.bf16.gmra.mrb[0].mxu0 %v154
    %v475 = vpop.f32.mrb[0].mxu0
    %v476 = vadd.f32 %v436, %v475
    %v477 = vpop.f32.mrb[0].mxu0
    %v478 = vpop.f32.mrb[0].mxu0
    %v479 = vpop.f32.mrb[0].mxu0
    %480 = vdwg.mxu0
    %481 = vmatprep.subr.bf16.mxu0 0
    %482 = vmatpush1.bf16.msra.mxu0 %v353
    %483 = vmatprep.subr.bf16.mxu0 0
    %484 = vmatpush1.bf16.msra.mxu0 %v354
    %485 = vmatprep.subr.bf16.mxu0 0
    %486 = vmatpush1.bf16.msra.mxu0 %v355
    %487 = vmatprep.subr.bf16.mxu0 0
    %488 = vmatpush1.bf16.msra.mxu0 %v356
    %489 = vmatprep.subr.bf16.mxu0 0
    %490 = vmatpush1.bf16.msra.mxu0 %v357
    %491 = vmatprep.subr.bf16.mxu0 0
    %492 = vmatpush1.bf16.msra.mxu0 %v358
    %493 = vmatprep.subr.bf16.mxu0 0
    %494 = vmatpush1.bf16.msra.mxu0 %v359
    %495 = vmatprep.subr.bf16.mxu0 0
    %496 = vmatpush1.bf16.msra.mxu0 %v360
    %497 = vmatprep.subr.bf16.mxu0 0
    %498 = vmatpush1.bf16.msra.mxu0 0
    %499 = vmatprep.subr.bf16.mxu0 0
    %500 = vmatpush1.bf16.msra.mxu0 0
    %501 = vmatprep.subr.bf16.mxu0 0
    %502 = vmatpush1.bf16.msra.mxu0 0
    %503 = vmatprep.subr.bf16.mxu0 0
    %504 = vmatpush1.bf16.msra.mxu0 0
    %505 = vmatprep.subr.bf16.mxu0 0
    %506 = vmatpush1.bf16.msra.mxu0 0
    %507 = vmatprep.subr.bf16.mxu0 0
    %508 = vmatpush1.bf16.msra.mxu0 0
    %509 = vmatprep.subr.bf16.mxu0 0
    %510 = vmatpush1.bf16.msra.mxu0 0
    %511 = vmatprep.subr.bf16.mxu0 0
    %512 = vmatpush1.bf16.msra.mxu0 0
    %513 = vmatprep.mubr.bf16.mxu0 0
    %514 = vmatmul.mubr.bf16.gmra.mrb[0].mxu0 %v146
    %v515 = vpop.f32.mrb[0].mxu0
    %v516 = vadd.f32 %v476, %v515
    %v517 = vpop.f32.mrb[0].mxu0
    %v518 = vpop.f32.mrb[0].mxu0
    %v519 = vpop.f32.mrb[0].mxu0
    %520 = vdwg.mxu0
    %v521 = vmax.f32 %v516, 0.0
    %v522 = vpack.c.bf16 %v521, %v521
    %v523 = vld [vmem:[%s3] sm:$0xf]
    %v524 = vld [vmem:[%s3 + $0x4] sm:$0xf]
    %v525 = vld [vmem:[%s3 + $0x8] sm:$0xf]
    %v526 = vld [vmem:[%s3 + $0xc] sm:$0xf]
    %v527 = vld [vmem:[%s3 + $0x10] sm:$0xf]
    %v528 = vld [vmem:[%s3 + $0x14] sm:$0xf]
    %v529 = vld [vmem:[%s3 + $0x18] sm:$0xf]
    %v530 = vld [vmem:[%s3 + $0x1c] sm:$0xf]
    %v531 = vld [vmem:[%s3 + $0x20] sm:$0xf]
    %v532 = vld [vmem:[%s3 + $0x24] sm:$0xf]
    %v533 = vld [vmem:[%s3 + $0x28] sm:$0xf]
    %v534 = vld [vmem:[%s3 + $0x2c] sm:$0xf]
    %v535 = vld [vmem:[%s3 + $0x30] sm:$0xf]
    %v536 = vld [vmem:[%s3 + $0x34] sm:$0xf]
    %v537 = vld [vmem:[%s3 + $0x38] sm:$0xf]
    %v538 = vld [vmem:[%s3 + $0x3c] sm:$0xf]
    %v539 = vld [vmem:[%s4] sm:$0x1]
    %v541 = vlaneseq
    %v542 = vshrl.u32 %v541, 7
    %v543 = vsub.s32 0, %v542
    %v544 = vrot.slane %v539, %v543
    %v562 = vunpack.c.l.b16 %v523
    %v563 = vunpack.c.l.b16 %v524
    %v564 = vunpack.c.l.b16 %v525
    %v565 = vunpack.c.l.b16 %v526
    %v566 = vunpack.c.l.b16 %v527
    %v567 = vunpack.c.l.b16 %v528
    %v568 = vunpack.c.l.b16 %v529
    %v569 = vunpack.c.l.b16 %v530
    %v570 = vunpack.c.l.b16 %v531
    %v571 = vunpack.c.l.b16 %v532
    %v572 = vunpack.c.l.b16 %v533
    %v573 = vunpack.c.l.b16 %v534
    %v574 = vunpack.c.l.b16 %v535
    %v575 = vunpack.c.l.b16 %v536
    %v576 = vunpack.c.l.b16 %v537
    %v577 = vunpack.c.l.b16 %v538
    %v578 = vpack.c.b16 %v563, %v562
    %v579 = vpack.c.b16 %v565, %v564
    %v580 = vpack.c.b16 %v567, %v566
    %v581 = vpack.c.b16 %v569, %v568
    %v582 = vpack.c.b16 %v571, %v570
    %v583 = vpack.c.b16 %v573, %v572
    %v584 = vpack.c.b16 %v575, %v574
    %v585 = vpack.c.b16 %v577, %v576
    %594 = vmatprep.subr.bf16.mxu0 0
    %595 = vmatpush1.bf16.msra.mxu0 %v578
    %596 = vmatprep.subr.bf16.mxu0 0
    %597 = vmatpush1.bf16.msra.mxu0 %v579
    %598 = vmatprep.subr.bf16.mxu0 0
    %599 = vmatpush1.bf16.msra.mxu0 %v580
    %600 = vmatprep.subr.bf16.mxu0 0
    %601 = vmatpush1.bf16.msra.mxu0 %v581
    %602 = vmatprep.subr.bf16.mxu0 0
    %603 = vmatpush1.bf16.msra.mxu0 %v582
    %604 = vmatprep.subr.bf16.mxu0 0
    %605 = vmatpush1.bf16.msra.mxu0 %v583
    %606 = vmatprep.subr.bf16.mxu0 0
    %607 = vmatpush1.bf16.msra.mxu0 %v584
    %608 = vmatprep.subr.bf16.mxu0 0
    %609 = vmatpush1.bf16.msra.mxu0 %v585
    %610 = vmatprep.subr.bf16.mxu0 0
    %611 = vmatpush1.bf16.msra.mxu0 0
    %612 = vmatprep.subr.bf16.mxu0 0
    %613 = vmatpush1.bf16.msra.mxu0 0
    %614 = vmatprep.subr.bf16.mxu0 0
    %615 = vmatpush1.bf16.msra.mxu0 0
    %616 = vmatprep.subr.bf16.mxu0 0
    %617 = vmatpush1.bf16.msra.mxu0 0
    %618 = vmatprep.subr.bf16.mxu0 0
    %619 = vmatpush1.bf16.msra.mxu0 0
    %620 = vmatprep.subr.bf16.mxu0 0
    %621 = vmatpush1.bf16.msra.mxu0 0
    %622 = vmatprep.subr.bf16.mxu0 0
    %623 = vmatpush1.bf16.msra.mxu0 0
    %624 = vmatprep.subr.bf16.mxu0 0
    %625 = vmatpush1.bf16.msra.mxu0 0
    %626 = vmatprep.mubr.bf16.mxu0 0
    %627 = vmatmul.mubr.bf16.gmra.mrb[0].mxu0 %v522
    %v628 = vpop.f32.mrb[0].mxu0
    %v629 = vadd.f32 %v544, %v628
    %v630 = vpop.f32.mrb[0].mxu0
    %v631 = vpop.f32.mrb[0].mxu0
    %v632 = vpop.f32.mrb[0].mxu0
    %633 = vdwg.mxu0
    %v634 = vmax.f32 %v629, 0.0
    %v635 = vpack.c.bf16 %v634, %v634
    %v636 = vld [vmem:[%s5] sm:$0xf]
    %v637 = vld [vmem:[%s5 + $0x4] sm:$0xf]
    %v638 = vld [vmem:[%s5 + $0x8] sm:$0xf]
    %v639 = vld [vmem:[%s5 + $0xc] sm:$0xf]
    %v640 = vld [vmem:[%s5 + $0x10] sm:$0xf]
    %v641 = vld [vmem:[%s5 + $0x14] sm:$0xf]
    %v642 = vld [vmem:[%s5 + $0x18] sm:$0xf]
    %v643 = vld [vmem:[%s5 + $0x1c] sm:$0xf]
    %v644 = vld [vmem:[%s5 + $0x20] sm:$0xf]
    %v645 = vld [vmem:[%s5 + $0x24] sm:$0xf]
    %v646 = vld [vmem:[%s5 + $0x28] sm:$0xf]
    %v647 = vld [vmem:[%s5 + $0x2c] sm:$0xf]
    %v648 = vld [vmem:[%s5 + $0x30] sm:$0xf]
    %v649 = vld [vmem:[%s5 + $0x34] sm:$0xf]
    %v650 = vld [vmem:[%s5 + $0x38] sm:$0xf]
    %v651 = vld [vmem:[%s5 + $0x3c] sm:$0xf]
    %v652 = vld [vmem:[%s6] sm:$0x1]
    %v654 = vlaneseq
    %v655 = vshrl.u32 %v654, 7
    %v656 = vsub.s32 0, %v655
    %v657 = vrot.slane %v652, %v656
    %v675 = vunpack.c.l.b16 %v636
    %v676 = vunpack.c.l.b16 %v637
    %v677 = vunpack.c.l.b16 %v638
    %v678 = vunpack.c.l.b16 %v639
    %v679 = vunpack.c.l.b16 %v640
    %v680 = vunpack.c.l.b16 %v641
    %v681 = vunpack.c.l.b16 %v642
    %v682 = vunpack.c.l.b16 %v643
    %v683 = vunpack.c.l.b16 %v644
    %v684 = vunpack.c.l.b16 %v645
    %v685 = vunpack.c.l.b16 %v646
    %v686 = vunpack.c.l.b16 %v647
    %v687 = vunpack.c.l.b16 %v648
    %v688 = vunpack.c.l.b16 %v649
    %v689 = vunpack.c.l.b16 %v650
    %v690 = vunpack.c.l.b16 %v651
    %v691 = vpack.c.b16 %v676, %v675
    %v692 = vpack.c.b16 %v678, %v677
    %v693 = vpack.c.b16 %v680, %v679
    %v694 = vpack.c.b16 %v682, %v681
    %v695 = vpack.c.b16 %v684, %v683
    %v696 = vpack.c.b16 %v686, %v685
    %v697 = vpack.c.b16 %v688, %v687
    %v698 = vpack.c.b16 %v690, %v689
    %707 = vmatprep.subr.bf16.mxu0 0
    %708 = vmatpush1.bf16.msra.mxu0 %v691
    %709 = vmatprep.subr.bf16.mxu0 0
    %710 = vmatpush1.bf16.msra.mxu0 %v692
    %711 = vmatprep.subr.bf16.mxu0 0
    %712 = vmatpush1.bf16.msra.mxu0 %v693
    %713 = vmatprep.subr.bf16.mxu0 0
    %714 = vmatpush1.bf16.msra.mxu0 %v694
    %715 = vmatprep.subr.bf16.mxu0 0
    %716 = vmatpush1.bf16.msra.mxu0 %v695
    %717 = vmatprep.subr.bf16.mxu0 0
    %718 = vmatpush1.bf16.msra.mxu0 %v696
    %719 = vmatprep.subr.bf16.mxu0 0
    %720 = vmatpush1.bf16.msra.mxu0 %v697
    %721 = vmatprep.subr.bf16.mxu0 0
    %722 = vmatpush1.bf16.msra.mxu0 %v698
    %723 = vmatprep.subr.bf16.mxu0 0
    %724 = vmatpush1.bf16.msra.mxu0 0
    %725 = vmatprep.subr.bf16.mxu0 0
    %726 = vmatpush1.bf16.msra.mxu0 0
    %727 = vmatprep.subr.bf16.mxu0 0
    %728 = vmatpush1.bf16.msra.mxu0 0
    %729 = vmatprep.subr.bf16.mxu0 0
    %730 = vmatpush1.bf16.msra.mxu0 0
    %731 = vmatprep.subr.bf16.mxu0 0
    %732 = vmatpush1.bf16.msra.mxu0 0
    %733 = vmatprep.subr.bf16.mxu0 0
    %734 = vmatpush1.bf16.msra.mxu0 0
    %735 = vmatprep.subr.bf16.mxu0 0
    %736 = vmatpush1.bf16.msra.mxu0 0
    %737 = vmatprep.subr.bf16.mxu0 0
    %738 = vmatpush1.bf16.msra.mxu0 0
    %739 = vmatprep.mubr.bf16.mxu0 0
    %740 = vmatmul.mubr.bf16.gmra.mrb[0].mxu0 %v635
    %v741 = vpop.f32.mrb[0].mxu0
    %v742 = vadd.f32 %v657, %v741
    %v743 = vpop.f32.mrb[0].mxu0
    %v744 = vpop.f32.mrb[0].mxu0
    %v745 = vpop.f32.mrb[0].mxu0
    %746 = vdwg.mxu0
    %747 = vst [vmem:[#allocation2] sm:$0x3] %v742
    // Predicated region
    $region30: #{local_net_forward.5} parent=1 // pred_check
      _
    $region31: #{local_net_forward.5} parent=1 // pred_check_branch
      %749 = sbr.rel (0) target = $region33
    $region32: #{local_net_forward.5} parent=1 // pred_region
      %s751 = ssub.s32 32, 32
      %752 = vsyncadd [#allocation3], %s751
      %s754 = sshll.u32 [#allocation2], 4
      %s755 = int_to_ptr.vmem [resolvable:$true] %s754
      %757 = dma.vmem_to_hbm [thread:$0]  %s755, 32, %s7, [#allocation3]
    $region33: #{local_net_forward.5} parent=1 // pred_fallthru
      _
    // Predicated region
    $region34: #{local_net_forward.5} parent=1 // pred_check
      _
    $region35: #{local_net_forward.5} parent=1 // pred_check_branch
      %759 = sbr.rel (0) target = $region37
    $region36: #{local_net_forward.5} parent=1 // pred_region
      %760 = dma.done [#allocation3], 32
    $region37: #{local_net_forward.5} parent=1 // pred_fallthru
      _
    %761 = vsyncpa [#allocation3], 1

// kernel: local_net_forward.4
$region0: #{local_net_forward.4}
  #allocation0 [shape = 'u32[]', space=smem, size = 0x4, offset = 0x4, fixed_abs, tag = 'smem constant byte address 0x4 - core index']
  #allocation1 [shape = 'u32[144,128]{1,0:T(1,128)}', space=vmem, size = 0x12000, scoped, tag = 'internal scratch']
  %s0 = inlined_call_operand.vmem [shape: bf16[16,128], index: 0, kind: input, shape index: {}]
  %s1 = inlined_call_operand.vmem [shape: bf16[16,128], index: 1, kind: input, shape index: {}]
  %s2 = inlined_call_operand.vmem [shape: bf16[5,128,256], index: 2, kind: input, shape index: {}]
  %s3 = inlined_call_operand.vmem [shape: f32[1,128], index: 3, kind: input, shape index: {}]
  %s4 = inlined_call_operand.vmem [shape: bf16[16,128], index: 4, kind: output, shape index: {}]
  %s5 = sld [smem:[#allocation0]]
  $region26: #{local_net_forward.4} parent=0
    _
  %s7 = ssub.s32 1, %s5
  %s8 = scalar_select 0, %s7, %s5
  // Predicated region
  $region2: #{local_net_forward.4} parent=0 // pred_check
    _
  $region3: #{local_net_forward.4} parent=0 // pred_check_branch
    %10 = sbr.rel (0) target = $region5
  $region4: #{local_net_forward.4} parent=0 // pred_region
    _
  $region5: #{local_net_forward.4} parent=0 // pred_fallthru
    _
  // Predicated region
  $region6: #{local_net_forward.4} parent=0 // pred_check
    _
  $region7: #{local_net_forward.4} parent=0 // pred_check_branch
    %12 = sbr.rel (0) target = $region9
  $region8: #{local_net_forward.4} parent=0 // pred_region
    _
  $region9: #{local_net_forward.4} parent=0 // pred_fallthru
    _
  // Predicated region
  $region10: #{local_net_forward.4} parent=0 // pred_check
    _
  $region11: #{local_net_forward.4} parent=0 // pred_check_branch
    %14 = sbr.rel (0) target = $region13
  $region12: #{local_net_forward.4} parent=0 // pred_region
    _
  $region13: #{local_net_forward.4} parent=0 // pred_fallthru
    _
  // Predicated region
  $region14: #{local_net_forward.4} parent=0 // pred_check
    _
  $region15: #{local_net_forward.4} parent=0 // pred_check_branch
    %16 = sbr.rel (0) target = $region17
  $region16: #{local_net_forward.4} parent=0 // pred_region
    _
  $region17: #{local_net_forward.4} parent=0 // pred_fallthru
    _
  %v18 = vld [vmem:[%s0] sm:$0xf]
  %v19 = vld [vmem:[%s0 + $0x4] sm:$0xf]
  %v20 = vld [vmem:[%s1] sm:$0xf]
  %v21 = vld [vmem:[%s1 + $0x4] sm:$0xf]
  %v22 = vld [vmem:[%s2] sm:$0xff]
  %v23 = vld [vmem:[%s2 + $0x8] sm:$0xff]
  %v24 = vld [vmem:[%s2 + $0x10] sm:$0xff]
  %v25 = vld [vmem:[%s2 + $0x18] sm:$0xff]
  %v26 = vld [vmem:[%s2 + $0x20] sm:$0xff]
  %v27 = vld [vmem:[%s2 + $0x28] sm:$0xff]
  %v28 = vld [vmem:[%s2 + $0x30] sm:$0xff]
  %v29 = vld [vmem:[%s2 + $0x38] sm:$0xff]
  %v30 = vld [vmem:[%s2 + $0x40] sm:$0xff]
  %v31 = vld [vmem:[%s2 + $0x48] sm:$0xff]
  %v32 = vld [vmem:[%s2 + $0x50] sm:$0xff]
  %v33 = vld [vmem:[%s2 + $0x58] sm:$0xff]
  %v34 = vld [vmem:[%s2 + $0x60] sm:$0xff]
  %v35 = vld [vmem:[%s2 + $0x68] sm:$0xff]
  %v36 = vld [vmem:[%s2 + $0x70] sm:$0xff]
  %v37 = vld [vmem:[%s2 + $0x78] sm:$0xff]
  %s38 = scalar_lea.vmem %s2, 128
  %v39 = vld [vmem:[%s38] sm:$0xff]
  %v40 = vld [vmem:[%s38 + $0x8] sm:$0xff]
  %v41 = vld [vmem:[%s38 + $0x10] sm:$0xff]
  %v42 = vld [vmem:[%s38 + $0x18] sm:$0xff]
  %v43 = vld [vmem:[%s38 + $0x20] sm:$0xff]
  %v44 = vld [vmem:[%s38 + $0x28] sm:$0xff]
  %v45 = vld [vmem:[%s38 + $0x30] sm:$0xff]
  %v46 = vld [vmem:[%s38 + $0x38] sm:$0xff]
  %v47 = vld [vmem:[%s38 + $0x40] sm:$0xff]
  %v48 = vld [vmem:[%s38 + $0x48] sm:$0xff]
  %v49 = vld [vmem:[%s38 + $0x50] sm:$0xff]
  %v50 = vld [vmem:[%s38 + $0x58] sm:$0xff]
  %v51 = vld [vmem:[%s38 + $0x60] sm:$0xff]
  %v52 = vld [vmem:[%s38 + $0x68] sm:$0xff]
  %v53 = vld [vmem:[%s38 + $0x70] sm:$0xff]
  %v54 = vld [vmem:[%s38 + $0x78] sm:$0xff]
  %v57 = vunpack.c.l.b16 %v20
  %v58 = vunpack.c.l.b16 %v21
  %v59 = vpack.c.b16 %v58, %v57
  %v77 = vunpack.c.l.b16 %v39
  %v78 = vunpack.c.h.b16 %v39
  %v79 = vunpack.c.l.b16 %v40
  %v80 = vunpack.c.h.b16 %v40
  %v81 = vunpack.c.l.b16 %v41
  %v82 = vunpack.c.h.b16 %v41
  %v83 = vunpack.c.l.b16 %v42
  %v84 = vunpack.c.h.b16 %v42
  %v85 = vunpack.c.l.b16 %v43
  %v86 = vunpack.c.h.b16 %v43
  %v87 = vunpack.c.l.b16 %v44
  %v88 = vunpack.c.h.b16 %v44
  %v89 = vunpack.c.l.b16 %v45
  %v90 = vunpack.c.h.b16 %v45
  %v91 = vunpack.c.l.b16 %v46
  %v92 = vunpack.c.h.b16 %v46
  %v93 = vunpack.c.l.b16 %v47
  %v94 = vunpack.c.h.b16 %v47
  %v95 = vunpack.c.l.b16 %v48
  %v96 = vunpack.c.h.b16 %v48
  %v97 = vunpack.c.l.b16 %v49
  %v98 = vunpack.c.h.b16 %v49
  %v99 = vunpack.c.l.b16 %v50
  %v100 = vunpack.c.h.b16 %v50
  %v101 = vunpack.c.l.b16 %v51
  %v102 = vunpack.c.h.b16 %v51
  %v103 = vunpack.c.l.b16 %v52
  %v104 = vunpack.c.h.b16 %v52
  %v105 = vunpack.c.l.b16 %v53
  %v106 = vunpack.c.h.b16 %v53
  %v107 = vunpack.c.l.b16 %v54
  %v108 = vunpack.c.h.b16 %v54
  %v109 = vpack.c.b16 %v79, %v77
  %v110 = vpack.c.b16 %v80, %v78
  %v111 = vpack.c.b16 %v83, %v81
  %v112 = vpack.c.b16 %v84, %v82
  %v113 = vpack.c.b16 %v87, %v85
  %v114 = vpack.c.b16 %v88, %v86
  %v115 = vpack.c.b16 %v91, %v89
  %v116 = vpack.c.b16 %v92, %v90
  %v117 = vpack.c.b16 %v95, %v93
  %v118 = vpack.c.b16 %v96, %v94
  %v119 = vpack.c.b16 %v99, %v97
  %v120 = vpack.c.b16 %v100, %v98
  %v121 = vpack.c.b16 %v103, %v101
  %v122 = vpack.c.b16 %v104, %v102
  %v123 = vpack.c.b16 %v107, %v105
  %v124 = vpack.c.b16 %v108, %v106
  %141 = vmatprep.subr.bf16.mxu0 %v110
  %142 = vmatpush1.bf16.msra.mxu0 %v109
  %143 = vmatprep.subr.bf16.mxu0 %v112
  %144 = vmatpush1.bf16.msra.mxu0 %v111
  %145 = vmatprep.subr.bf16.mxu0 %v114
  %146 = vmatpush1.bf16.msra.mxu0 %v113
  %147 = vmatprep.subr.bf16.mxu0 %v116
  %148 = vmatpush1.bf16.msra.mxu0 %v115
  %149 = vmatprep.subr.bf16.mxu0 %v118
  %150 = vmatpush1.bf16.msra.mxu0 %v117
  %151 = vmatprep.subr.bf16.mxu0 %v120
  %152 = vmatpush1.bf16.msra.mxu0 %v119
  %153 = vmatprep.subr.bf16.mxu0 %v122
  %154 = vmatpush1.bf16.msra.mxu0 %v121
  %155 = vmatprep.subr.bf16.mxu0 %v124
  %156 = vmatpush1.bf16.msra.mxu0 %v123
  %157 = vmatprep.subr.bf16.mxu0 0
  %158 = vmatpush1.bf16.msra.mxu0 0
  %159 = vmatprep.subr.bf16.mxu0 0
  %160 = vmatpush1.bf16.msra.mxu0 0
  %161 = vmatprep.subr.bf16.mxu0 0
  %162 = vmatpush1.bf16.msra.mxu0 0
  %163 = vmatprep.subr.bf16.mxu0 0
  %164 = vmatpush1.bf16.msra.mxu0 0
  %165 = vmatprep.subr.bf16.mxu0 0
  %166 = vmatpush1.bf16.msra.mxu0 0
  %167 = vmatprep.subr.bf16.mxu0 0
  %168 = vmatpush1.bf16.msra.mxu0 0
  %169 = vmatprep.subr.bf16.mxu0 0
  %170 = vmatpush1.bf16.msra.mxu0 0
  %171 = vmatprep.subr.bf16.mxu0 0
  %172 = vmatpush1.bf16.msra.mxu0 0
  %173 = vmatprep.mubr.bf16.mxu0 0
  %174 = vmatmul.mubr.bf16.gmra.mrb[0].mxu0 %v59
  %v175 = vpop.f32.mrb[0].mxu0
  %v176 = vadd.f32 0.0, %v175
  %v177 = vpop.f32.mrb[0].mxu0
  %v178 = vadd.f32 0.0, %v177
  %v179 = vpop.f32.mrb[0].mxu0
  %v180 = vadd.f32 0.0, %v179
  %v181 = vpop.f32.mrb[0].mxu0
  %v182 = vadd.f32 0.0, %v181
  %183 = vdwg.mxu0
  %v186 = vunpack.c.l.b16 %v18
  %v187 = vunpack.c.l.b16 %v19
  %v188 = vpack.c.b16 %v187, %v186
  %v206 = vunpack.c.l.b16 %v22
  %v207 = vunpack.c.h.b16 %v22
  %v208 = vunpack.c.l.b16 %v23
  %v209 = vunpack.c.h.b16 %v23
  %v210 = vunpack.c.l.b16 %v24
  %v211 = vunpack.c.h.b16 %v24
  %v212 = vunpack.c.l.b16 %v25
  %v213 = vunpack.c.h.b16 %v25
  %v214 = vunpack.c.l.b16 %v26
  %v215 = vunpack.c.h.b16 %v26
  %v216 = vunpack.c.l.b16 %v27
  %v217 = vunpack.c.h.b16 %v27
  %v218 = vunpack.c.l.b16 %v28
  %v219 = vunpack.c.h.b16 %v28
  %v220 = vunpack.c.l.b16 %v29
  %v221 = vunpack.c.h.b16 %v29
  %v222 = vunpack.c.l.b16 %v30
  %v223 = vunpack.c.h.b16 %v30
  %v224 = vunpack.c.l.b16 %v31
  %v225 = vunpack.c.h.b16 %v31
  %v226 = vunpack.c.l.b16 %v32
  %v227 = vunpack.c.h.b16 %v32
  %v228 = vunpack.c.l.b16 %v33
  %v229 = vunpack.c.h.b16 %v33
  %v230 = vunpack.c.l.b16 %v34
  %v231 = vunpack.c.h.b16 %v34
  %v232 = vunpack.c.l.b16 %v35
  %v233 = vunpack.c.h.b16 %v35
  %v234 = vunpack.c.l.b16 %v36
  %v235 = vunpack.c.h.b16 %v36
  %v236 = vunpack.c.l.b16 %v37
  %v237 = vunpack.c.h.b16 %v37
  %v238 = vpack.c.b16 %v208, %v206
  %v239 = vpack.c.b16 %v209, %v207
  %v240 = vpack.c.b16 %v212, %v210
  %v241 = vpack.c.b16 %v213, %v211
  %v242 = vpack.c.b16 %v216, %v214
  %v243 = vpack.c.b16 %v217, %v215
  %v244 = vpack.c.b16 %v220, %v218
  %v245 = vpack.c.b16 %v221, %v219
  %v246 = vpack.c.b16 %v224, %v222
  %v247 = vpack.c.b16 %v225, %v223
  %v248 = vpack.c.b16 %v228, %v226
  %v249 = vpack.c.b16 %v229, %v227
  %v250 = vpack.c.b16 %v232, %v230
  %v251 = vpack.c.b16 %v233, %v231
  %v252 = vpack.c.b16 %v236, %v234
  %v253 = vpack.c.b16 %v237, %v235
  %270 = vmatprep.subr.bf16.mxu0 %v239
  %271 = vmatpush1.bf16.msra.mxu0 %v238
  %272 = vmatprep.subr.bf16.mxu0 %v241
  %273 = vmatpush1.bf16.msra.mxu0 %v240
  %274 = vmatprep.subr.bf16.mxu0 %v243
  %275 = vmatpush1.bf16.msra.mxu0 %v242
  %276 = vmatprep.subr.bf16.mxu0 %v245
  %277 = vmatpush1.bf16.msra.mxu0 %v244
  %278 = vmatprep.subr.bf16.mxu0 %v247
  %279 = vmatpush1.bf16.msra.mxu0 %v246
  %280 = vmatprep.subr.bf16.mxu0 %v249
  %281 = vmatpush1.bf16.msra.mxu0 %v248
  %282 = vmatprep.subr.bf16.mxu0 %v251
  %283 = vmatpush1.bf16.msra.mxu0 %v250
  %284 = vmatprep.subr.bf16.mxu0 %v253
  %285 = vmatpush1.bf16.msra.mxu0 %v252
  %286 = vmatprep.subr.bf16.mxu0 0
  %287 = vmatpush1.bf16.msra.mxu0 0
  %288 = vmatprep.subr.bf16.mxu0 0
  %289 = vmatpush1.bf16.msra.mxu0 0
  %290 = vmatprep.subr.bf16.mxu0 0
  %291 = vmatpush1.bf16.msra.mxu0 0
  %292 = vmatprep.subr.bf16.mxu0 0
  %293 = vmatpush1.bf16.msra.mxu0 0
  %294 = vmatprep.subr.bf16.mxu0 0
  %295 = vmatpush1.bf16.msra.mxu0 0
  %296 = vmatprep.subr.bf16.mxu0 0
  %297 = vmatpush1.bf16.msra.mxu0 0
  %298 = vmatprep.subr.bf16.mxu0 0
  %299 = vmatpush1.bf16.msra.mxu0 0
  %300 = vmatprep.subr.bf16.mxu0 0
  %301 = vmatpush1.bf16.msra.mxu0 0
  %302 = vmatprep.mubr.bf16.mxu0 0
  %303 = vmatmul.mubr.bf16.gmra.mrb[0].mxu0 %v188
  %v304 = vpop.f32.mrb[0].mxu0
  %v305 = vadd.f32 %v176, %v304
  %v306 = vpop.f32.mrb[0].mxu0
  %v307 = vadd.f32 %v178, %v306
  %v308 = vpop.f32.mrb[0].mxu0
  %v309 = vadd.f32 %v180, %v308
  %v310 = vpop.f32.mrb[0].mxu0
  %v311 = vadd.f32 %v182, %v310
  %312 = vdwg.mxu0
  %v314 = vshrl.u32 %v188, 16
  %v316 = vshll.u32 %v188, 16
  %v318 = vrot.slane %v316, 1
  %v319 = vor.u32 %v314, %v318
  %v321 = vpack.c.b16 %v186, %v186
  %v323 = vshll.u32 %v321, 16
  %v325 = vrot.slane %v323, 1
  %vm327 = vcmask 1047552
  %vm328 = vsmask.f32 7424
  %vm329 = vmand %vm327, %vm328
  %v330 = vsel %vm329, %v319, %v325
  %331 = vmatprep.subr.bf16.mxu0 %v110
  %332 = vmatpush1.bf16.msra.mxu0 %v109
  %333 = vmatprep.subr.bf16.mxu0 %v112
  %334 = vmatpush1.bf16.msra.mxu0 %v111
  %335 = vmatprep.subr.bf16.mxu0 %v114
  %336 = vmatpush1.bf16.msra.mxu0 %v113
  %337 = vmatprep.subr.bf16.mxu0 %v116
  %338 = vmatpush1.bf16.msra.mxu0 %v115
  %339 = vmatprep.subr.bf16.mxu0 %v118
  %340 = vmatpush1.bf16.msra.mxu0 %v117
  %341 = vmatprep.subr.bf16.mxu0 %v120
  %342 = vmatpush1.bf16.msra.mxu0 %v119
  %343 = vmatprep.subr.bf16.mxu0 %v122
  %344 = vmatpush1.bf16.msra.mxu0 %v121
  %345 = vmatprep.subr.bf16.mxu0 %v124
  %346 = vmatpush1.bf16.msra.mxu0 %v123
  %347 = vmatprep.subr.bf16.mxu0 0
  %348 = vmatpush1.bf16.msra.mxu0 0
  %349 = vmatprep.subr.bf16.mxu0 0
  %350 = vmatpush1.bf16.msra.mxu0 0
  %351 = vmatprep.subr.bf16.mxu0 0
  %352 = vmatpush1.bf16.msra.mxu0 0
  %353 = vmatprep.subr.bf16.mxu0 0
  %354 = vmatpush1.bf16.msra.mxu0 0
  %355 = vmatprep.subr.bf16.mxu0 0
  %356 = vmatpush1.bf16.msra.mxu0 0
  %357 = vmatprep.subr.bf16.mxu0 0
  %358 = vmatpush1.bf16.msra.mxu0 0
  %359 = vmatprep.subr.bf16.mxu0 0
  %360 = vmatpush1.bf16.msra.mxu0 0
  %361 = vmatprep.subr.bf16.mxu0 0
  %362 = vmatpush1.bf16.msra.mxu0 0
  %363 = vmatprep.mubr.bf16.mxu0 0
  %364 = vmatmul.mubr.bf16.gmra.mrb[0].mxu0 %v330
  %v365 = vpop.f32.mrb[0].mxu0
  %v366 = vadd.f32 0.0, %v365
  %v367 = vpop.f32.mrb[0].mxu0
  %v368 = vadd.f32 0.0, %v367
  %v369 = vpop.f32.mrb[0].mxu0
  %v370 = vadd.f32 0.0, %v369
  %v371 = vpop.f32.mrb[0].mxu0
  %v372 = vadd.f32 0.0, %v371
  %373 = vdwg.mxu0
  %374 = vmatprep.subr.bf16.mxu0 %v239
  %375 = vmatpush1.bf16.msra.mxu0 %v238
  %376 = vmatprep.subr.bf16.mxu0 %v241
  %377 = vmatpush1.bf16.msra.mxu0 %v240
  %378 = vmatprep.subr.bf16.mxu0 %v243
  %379 = vmatpush1.bf16.msra.mxu0 %v242
  %380 = vmatprep.subr.bf16.mxu0 %v245
  %381 = vmatpush1.bf16.msra.mxu0 %v244
  %382 = vmatprep.subr.bf16.mxu0 %v247
  %383 = vmatpush1.bf16.msra.mxu0 %v246
  %384 = vmatprep.subr.bf16.mxu0 %v249
  %385 = vmatpush1.bf16.msra.mxu0 %v248
  %386 = vmatprep.subr.bf16.mxu0 %v251
  %387 = vmatpush1.bf16.msra.mxu0 %v250
  %388 = vmatprep.subr.bf16.mxu0 %v253
  %389 = vmatpush1.bf16.msra.mxu0 %v252
  %390 = vmatprep.subr.bf16.mxu0 0
  %391 = vmatpush1.bf16.msra.mxu0 0
  %392 = vmatprep.subr.bf16.mxu0 0
  %393 = vmatpush1.bf16.msra.mxu0 0
  %394 = vmatprep.subr.bf16.mxu0 0
  %395 = vmatpush1.bf16.msra.mxu0 0
  %396 = vmatprep.subr.bf16.mxu0 0
  %397 = vmatpush1.bf16.msra.mxu0 0
  %398 = vmatprep.subr.bf16.mxu0 0
  %399 = vmatpush1.bf16.msra.mxu0 0
  %400 = vmatprep.subr.bf16.mxu0 0
  %401 = vmatpush1.bf16.msra.mxu0 0
  %402 = vmatprep.subr.bf16.mxu0 0
  %403 = vmatpush1.bf16.msra.mxu0 0
  %404 = vmatprep.subr.bf16.mxu0 0
  %405 = vmatpush1.bf16.msra.mxu0 0
  %406 = vmatprep.mubr.bf16.mxu0 0
  %407 = vmatmul.mubr.bf16.gmra.mrb[0].mxu0 %v59
  %v408 = vpop.f32.mrb[0].mxu0
  %v409 = vadd.f32 %v366, %v408
  %v410 = vpop.f32.mrb[0].mxu0
  %v411 = vadd.f32 %v368, %v410
  %v412 = vpop.f32.mrb[0].mxu0
  %v413 = vadd.f32 %v370, %v412
  %v414 = vpop.f32.mrb[0].mxu0
  %v415 = vadd.f32 %v372, %v414
  %416 = vdwg.mxu0
  %s417 = scalar_lea.vmem %s2, 256
  %v418 = vld [vmem:[%s417] sm:$0xff]
  %v419 = vld [vmem:[%s417 + $0x8] sm:$0xff]
  %v420 = vld [vmem:[%s417 + $0x10] sm:$0xff]
  %v421 = vld [vmem:[%s417 + $0x18] sm:$0xff]
  %v422 = vld [vmem:[%s417 + $0x20] sm:$0xff]
  %v423 = vld [vmem:[%s417 + $0x28] sm:$0xff]
  %v424 = vld [vmem:[%s417 + $0x30] sm:$0xff]
  %v425 = vld [vmem:[%s417 + $0x38] sm:$0xff]
  %v426 = vld [vmem:[%s417 + $0x40] sm:$0xff]
  %v427 = vld [vmem:[%s417 + $0x48] sm:$0xff]
  %v428 = vld [vmem:[%s417 + $0x50] sm:$0xff]
  %v429 = vld [vmem:[%s417 + $0x58] sm:$0xff]
  %v430 = vld [vmem:[%s417 + $0x60] sm:$0xff]
  %v431 = vld [vmem:[%s417 + $0x68] sm:$0xff]
  %v432 = vld [vmem:[%s417 + $0x70] sm:$0xff]
  %v433 = vld [vmem:[%s417 + $0x78] sm:$0xff]
  %v450 = vunpack.c.l.b16 %v418
  %v451 = vunpack.c.h.b16 %v418
  %v452 = vunpack.c.l.b16 %v419
  %v453 = vunpack.c.h.b16 %v419
  %v454 = vunpack.c.l.b16 %v420
  %v455 = vunpack.c.h.b16 %v420
  %v456 = vunpack.c.l.b16 %v421
  %v457 = vunpack.c.h.b16 %v421
  %v458 = vunpack.c.l.b16 %v422
  %v459 = vunpack.c.h.b16 %v422
  %v460 = vunpack.c.l.b16 %v423
  %v461 = vunpack.c.h.b16 %v423
  %v462 = vunpack.c.l.b16 %v424
  %v463 = vunpack.c.h.b16 %v424
  %v464 = vunpack.c.l.b16 %v425
  %v465 = vunpack.c.h.b16 %v425
  %v466 = vunpack.c.l.b16 %v426
  %v467 = vunpack.c.h.b16 %v426
  %v468 = vunpack.c.l.b16 %v427
  %v469 = vunpack.c.h.b16 %v427
  %v470 = vunpack.c.l.b16 %v428
  %v471 = vunpack.c.h.b16 %v428
  %v472 = vunpack.c.l.b16 %v429
  %v473 = vunpack.c.h.b16 %v429
  %v474 = vunpack.c.l.b16 %v430
  %v475 = vunpack.c.h.b16 %v430
  %v476 = vunpack.c.l.b16 %v431
  %v477 = vunpack.c.h.b16 %v431
  %v478 = vunpack.c.l.b16 %v432
  %v479 = vunpack.c.h.b16 %v432
  %v480 = vunpack.c.l.b16 %v433
  %v481 = vunpack.c.h.b16 %v433
  %v482 = vpack.c.b16 %v452, %v450
  %v483 = vpack.c.b16 %v453, %v451
  %v484 = vpack.c.b16 %v456, %v454
  %v485 = vpack.c.b16 %v457, %v455
  %v486 = vpack.c.b16 %v460, %v458
  %v487 = vpack.c.b16 %v461, %v459
  %v488 = vpack.c.b16 %v464, %v462
  %v489 = vpack.c.b16 %v465, %v463
  %v490 = vpack.c.b16 %v468, %v466
  %v491 = vpack.c.b16 %v469, %v467
  %v492 = vpack.c.b16 %v472, %v470
  %v493 = vpack.c.b16 %v473, %v471
  %v494 = vpack.c.b16 %v476, %v474
  %v495 = vpack.c.b16 %v477, %v475
  %v496 = vpack.c.b16 %v480, %v478
  %v497 = vpack.c.b16 %v481, %v479
  %514 = vmatprep.subr.bf16.mxu0 %v483
  %515 = vmatpush1.bf16.msra.mxu0 %v482
  %516 = vmatprep.subr.bf16.mxu0 %v485
  %517 = vmatpush1.bf16.msra.mxu0 %v484
  %518 = vmatprep.subr.bf16.mxu0 %v487
  %519 = vmatpush1.bf16.msra.mxu0 %v486
  %520 = vmatprep.subr.bf16.mxu0 %v489
  %521 = vmatpush1.bf16.msra.mxu0 %v488
  %522 = vmatprep.subr.bf16.mxu0 %v491
  %523 = vmatpush1.bf16.msra.mxu0 %v490
  %524 = vmatprep.subr.bf16.mxu0 %v493
  %525 = vmatpush1.bf16.msra.mxu0 %v492
  %526 = vmatprep.subr.bf16.mxu0 %v495
  %527 = vmatpush1.bf16.msra.mxu0 %v494
  %528 = vmatprep.subr.bf16.mxu0 %v497
  %529 = vmatpush1.bf16.msra.mxu0 %v496
  %530 = vmatprep.subr.bf16.mxu0 0
  %531 = vmatpush1.bf16.msra.mxu0 0
  %532 = vmatprep.subr.bf16.mxu0 0
  %533 = vmatpush1.bf16.msra.mxu0 0
  %534 = vmatprep.subr.bf16.mxu0 0
  %535 = vmatpush1.bf16.msra.mxu0 0
  %536 = vmatprep.subr.bf16.mxu0 0
  %537 = vmatpush1.bf16.msra.mxu0 0
  %538 = vmatprep.subr.bf16.mxu0 0
  %539 = vmatpush1.bf16.msra.mxu0 0
  %540 = vmatprep.subr.bf16.mxu0 0
  %541 = vmatpush1.bf16.msra.mxu0 0
  %542 = vmatprep.subr.bf16.mxu0 0
  %543 = vmatpush1.bf16.msra.mxu0 0
  %544 = vmatprep.subr.bf16.mxu0 0
  %545 = vmatpush1.bf16.msra.mxu0 0
  %546 = vmatprep.mubr.bf16.mxu0 0
  %547 = vmatmul.mubr.bf16.gmra.mrb[0].mxu0 %v330
  %v548 = vpop.f32.mrb[0].mxu0
  %v549 = vadd.f32 0.0, %v548
  %v550 = vpop.f32.mrb[0].mxu0
  %v551 = vadd.f32 0.0, %v550
  %v552 = vpop.f32.mrb[0].mxu0
  %v553 = vadd.f32 0.0, %v552
  %v554 = vpop.f32.mrb[0].mxu0
  %v555 = vadd.f32 0.0, %v554
  %556 = vdwg.mxu0
  %v557 = vadd.f32 %v305, %v549
  %v558 = vadd.f32 %v307, %v551
  %v559 = vadd.f32 %v309, %v553
  %v560 = vadd.f32 %v311, %v555
  %v562 = vshrl.u32 %v59, 16
  %v564 = vshll.u32 %v59, 16
  %v566 = vrot.slane %v564, 1
  %v567 = vor.u32 %v562, %v566
  %v569 = vpack.c.b16 %v57, %v57
  %v571 = vshll.u32 %v569, 16
  %v573 = vrot.slane %v571, 1
  %v575 = vsel %vm329, %v567, %v573
  %576 = vmatprep.subr.bf16.mxu0 %v483
  %577 = vmatpush1.bf16.msra.mxu0 %v482
  %578 = vmatprep.subr.bf16.mxu0 %v485
  %579 = vmatpush1.bf16.msra.mxu0 %v484
  %580 = vmatprep.subr.bf16.mxu0 %v487
  %581 = vmatpush1.bf16.msra.mxu0 %v486
  %582 = vmatprep.subr.bf16.mxu0 %v489
  %583 = vmatpush1.bf16.msra.mxu0 %v488
  %584 = vmatprep.subr.bf16.mxu0 %v491
  %585 = vmatpush1.bf16.msra.mxu0 %v490
  %586 = vmatprep.subr.bf16.mxu0 %v493
  %587 = vmatpush1.bf16.msra.mxu0 %v492
  %588 = vmatprep.subr.bf16.mxu0 %v495
  %589 = vmatpush1.bf16.msra.mxu0 %v494
  %590 = vmatprep.subr.bf16.mxu0 %v497
  %591 = vmatpush1.bf16.msra.mxu0 %v496
  %592 = vmatprep.subr.bf16.mxu0 0
  %593 = vmatpush1.bf16.msra.mxu0 0
  %594 = vmatprep.subr.bf16.mxu0 0
  %595 = vmatpush1.bf16.msra.mxu0 0
  %596 = vmatprep.subr.bf16.mxu0 0
  %597 = vmatpush1.bf16.msra.mxu0 0
  %598 = vmatprep.subr.bf16.mxu0 0
  %599 = vmatpush1.bf16.msra.mxu0 0
  %600 = vmatprep.subr.bf16.mxu0 0
  %601 = vmatpush1.bf16.msra.mxu0 0
  %602 = vmatprep.subr.bf16.mxu0 0
  %603 = vmatpush1.bf16.msra.mxu0 0
  %604 = vmatprep.subr.bf16.mxu0 0
  %605 = vmatpush1.bf16.msra.mxu0 0
  %606 = vmatprep.subr.bf16.mxu0 0
  %607 = vmatpush1.bf16.msra.mxu0 0
  %608 = vmatprep.mubr.bf16.mxu0 0
  %609 = vmatmul.mubr.bf16.gmra.mrb[0].mxu0 %v575
  %v610 = vpop.f32.mrb[0].mxu0
  %v611 = vadd.f32 0.0, %v610
  %v612 = vpop.f32.mrb[0].mxu0
  %v613 = vadd.f32 0.0, %v612
  %v614 = vpop.f32.mrb[0].mxu0
  %v615 = vadd.f32 0.0, %v614
  %v616 = vpop.f32.mrb[0].mxu0
  %v617 = vadd.f32 0.0, %v616
  %618 = vdwg.mxu0
  %v619 = vadd.f32 %v409, %v611
  %v620 = vadd.f32 %v411, %v613
  %v621 = vadd.f32 %v413, %v615
  %v622 = vadd.f32 %v415, %v617
  %s623 = scalar_lea.vmem %s2, 384
  %v624 = vld [vmem:[%s623] sm:$0xff]
  %v625 = vld [vmem:[%s623 + $0x8] sm:$0xff]
  %v626 = vld [vmem:[%s623 + $0x10] sm:$0xff]
  %v627 = vld [vmem:[%s623 + $0x18] sm:$0xff]
  %v628 = vld [vmem:[%s623 + $0x20] sm:$0xff]
  %v629 = vld [vmem:[%s623 + $0x28] sm:$0xff]
  %v630 = vld [vmem:[%s623 + $0x30] sm:$0xff]
  %v631 = vld [vmem:[%s623 + $0x38] sm:$0xff]
  %v632 = vld [vmem:[%s623 + $0x40] sm:$0xff]
  %v633 = vld [vmem:[%s623 + $0x48] sm:$0xff]
  %v634 = vld [vmem:[%s623 + $0x50] sm:$0xff]
  %v635 = vld [vmem:[%s623 + $0x58] sm:$0xff]
  %v636 = vld [vmem:[%s623 + $0x60] sm:$0xff]
  %v637 = vld [vmem:[%s623 + $0x68] sm:$0xff]
  %v638 = vld [vmem:[%s623 + $0x70] sm:$0xff]
  %v639 = vld [vmem:[%s623 + $0x78] sm:$0xff]
  %v656 = vunpack.c.l.b16 %v624
  %v657 = vunpack.c.h.b16 %v624
  %v658 = vunpack.c.l.b16 %v625
  %v659 = vunpack.c.h.b16 %v625
  %v660 = vunpack.c.l.b16 %v626
  %v661 = vunpack.c.h.b16 %v626
  %v662 = vunpack.c.l.b16 %v627
  %v663 = vunpack.c.h.b16 %v627
  %v664 = vunpack.c.l.b16 %v628
  %v665 = vunpack.c.h.b16 %v628
  %v666 = vunpack.c.l.b16 %v629
  %v667 = vunpack.c.h.b16 %v629
  %v668 = vunpack.c.l.b16 %v630
  %v669 = vunpack.c.h.b16 %v630
  %v670 = vunpack.c.l.b16 %v631
  %v671 = vunpack.c.h.b16 %v631
  %v672 = vunpack.c.l.b16 %v632
  %v673 = vunpack.c.h.b16 %v632
  %v674 = vunpack.c.l.b16 %v633
  %v675 = vunpack.c.h.b16 %v633
  %v676 = vunpack.c.l.b16 %v634
  %v677 = vunpack.c.h.b16 %v634
  %v678 = vunpack.c.l.b16 %v635
  %v679 = vunpack.c.h.b16 %v635
  %v680 = vunpack.c.l.b16 %v636
  %v681 = vunpack.c.h.b16 %v636
  %v682 = vunpack.c.l.b16 %v637
  %v683 = vunpack.c.h.b16 %v637
  %v684 = vunpack.c.l.b16 %v638
  %v685 = vunpack.c.h.b16 %v638
  %v686 = vunpack.c.l.b16 %v639
  %v687 = vunpack.c.h.b16 %v639
  %v688 = vpack.c.b16 %v658, %v656
  %v689 = vpack.c.b16 %v659, %v657
  %v690 = vpack.c.b16 %v662, %v660
  %v691 = vpack.c.b16 %v663, %v661
  %v692 = vpack.c.b16 %v666, %v664
  %v693 = vpack.c.b16 %v667, %v665
  %v694 = vpack.c.b16 %v670, %v668
  %v695 = vpack.c.b16 %v671, %v669
  %v696 = vpack.c.b16 %v674, %v672
  %v697 = vpack.c.b16 %v675, %v673
  %v698 = vpack.c.b16 %v678, %v676
  %v699 = vpack.c.b16 %v679, %v677
  %v700 = vpack.c.b16 %v682, %v680
  %v701 = vpack.c.b16 %v683, %v681
  %v702 = vpack.c.b16 %v686, %v684
  %v703 = vpack.c.b16 %v687, %v685
  %720 = vmatprep.subr.bf16.mxu0 %v689
  %721 = vmatpush1.bf16.msra.mxu0 %v688
  %722 = vmatprep.subr.bf16.mxu0 %v691
  %723 = vmatpush1.bf16.msra.mxu0 %v690
  %724 = vmatprep.subr.bf16.mxu0 %v693
  %725 = vmatpush1.bf16.msra.mxu0 %v692
  %726 = vmatprep.subr.bf16.mxu0 %v695
  %727 = vmatpush1.bf16.msra.mxu0 %v694
  %728 = vmatprep.subr.bf16.mxu0 %v697
  %729 = vmatpush1.bf16.msra.mxu0 %v696
  %730 = vmatprep.subr.bf16.mxu0 %v699
  %731 = vmatpush1.bf16.msra.mxu0 %v698
  %732 = vmatprep.subr.bf16.mxu0 %v701
  %733 = vmatpush1.bf16.msra.mxu0 %v700
  %734 = vmatprep.subr.bf16.mxu0 %v703
  %735 = vmatpush1.bf16.msra.mxu0 %v702
  %736 = vmatprep.subr.bf16.mxu0 0
  %737 = vmatpush1.bf16.msra.mxu0 0
  %738 = vmatprep.subr.bf16.mxu0 0
  %739 = vmatpush1.bf16.msra.mxu0 0
  %740 = vmatprep.subr.bf16.mxu0 0
  %741 = vmatpush1.bf16.msra.mxu0 0
  %742 = vmatprep.subr.bf16.mxu0 0
  %743 = vmatpush1.bf16.msra.mxu0 0
  %744 = vmatprep.subr.bf16.mxu0 0
  %745 = vmatpush1.bf16.msra.mxu0 0
  %746 = vmatprep.subr.bf16.mxu0 0
  %747 = vmatpush1.bf16.msra.mxu0 0
  %748 = vmatprep.subr.bf16.mxu0 0
  %749 = vmatpush1.bf16.msra.mxu0 0
  %750 = vmatprep.subr.bf16.mxu0 0
  %751 = vmatpush1.bf16.msra.mxu0 0
  %752 = vmatprep.mubr.bf16.mxu0 0
  %753 = vmatmul.mubr.bf16.gmra.mrb[0].mxu0 %v575
  %v754 = vpop.f32.mrb[0].mxu0
  %v755 = vadd.f32 0.0, %v754
  %v756 = vpop.f32.mrb[0].mxu0
  %v757 = vadd.f32 0.0, %v756
  %v758 = vpop.f32.mrb[0].mxu0
  %v759 = vadd.f32 0.0, %v758
  %v760 = vpop.f32.mrb[0].mxu0
  %v761 = vadd.f32 0.0, %v760
  %762 = vdwg.mxu0
  %v763 = vadd.f32 %v557, %v755
  %v764 = vadd.f32 %v558, %v757
  %v765 = vadd.f32 %v559, %v759
  %v766 = vadd.f32 %v560, %v761
  %v767 = vrot.slane %v188, 1
  %v768 = vrot.slane %v321, 1
  %vm769 = vcmask 1046528
  %v772 = vsel %vm769, %v767, %v768
  %774 = vmatprep.subr.bf16.mxu0 %v689
  %775 = vmatpush1.bf16.msra.mxu0 %v688
  %776 = vmatprep.subr.bf16.mxu0 %v691
  %777 = vmatpush1.bf16.msra.mxu0 %v690
  %778 = vmatprep.subr.bf16.mxu0 %v693
  %779 = vmatpush1.bf16.msra.mxu0 %v692
  %780 = vmatprep.subr.bf16.mxu0 %v695
  %781 = vmatpush1.bf16.msra.mxu0 %v694
  %782 = vmatprep.subr.bf16.mxu0 %v697
  %783 = vmatpush1.bf16.msra.mxu0 %v696
  %784 = vmatprep.subr.bf16.mxu0 %v699
  %785 = vmatpush1.bf16.msra.mxu0 %v698
  %786 = vmatprep.subr.bf16.mxu0 %v701
  %787 = vmatpush1.bf16.msra.mxu0 %v700
  %788 = vmatprep.subr.bf16.mxu0 %v703
  %789 = vmatpush1.bf16.msra.mxu0 %v702
  %790 = vmatprep.subr.bf16.mxu0 0
  %791 = vmatpush1.bf16.msra.mxu0 0
  %792 = vmatprep.subr.bf16.mxu0 0
  %793 = vmatpush1.bf16.msra.mxu0 0
  %794 = vmatprep.subr.bf16.mxu0 0
  %795 = vmatpush1.bf16.msra.mxu0 0
  %796 = vmatprep.subr.bf16.mxu0 0
  %797 = vmatpush1.bf16.msra.mxu0 0
  %798 = vmatprep.subr.bf16.mxu0 0
  %799 = vmatpush1.bf16.msra.mxu0 0
  %800 = vmatprep.subr.bf16.mxu0 0
  %801 = vmatpush1.bf16.msra.mxu0 0
  %802 = vmatprep.subr.bf16.mxu0 0
  %803 = vmatpush1.bf16.msra.mxu0 0
  %804 = vmatprep.subr.bf16.mxu0 0
  %805 = vmatpush1.bf16.msra.mxu0 0
  %806 = vmatprep.mubr.bf16.mxu0 0
  %807 = vmatmul.mubr.bf16.gmra.mrb[0].mxu0 %v772
  %v808 = vpop.f32.mrb[0].mxu0
  %v809 = vadd.f32 0.0, %v808
  %v810 = vpop.f32.mrb[0].mxu0
  %v811 = vadd.f32 0.0, %v810
  %v812 = vpop.f32.mrb[0].mxu0
  %v813 = vadd.f32 0.0, %v812
  %v814 = vpop.f32.mrb[0].mxu0
  %v815 = vadd.f32 0.0, %v814
  %816 = vdwg.mxu0
  %v817 = vadd.f32 %v619, %v809
  %v818 = vadd.f32 %v620, %v811
  %v819 = vadd.f32 %v621, %v813
  %v820 = vadd.f32 %v622, %v815
  %s821 = scalar_lea.vmem %s2, 512
  %v822 = vld [vmem:[%s821] sm:$0xff]
  %v823 = vld [vmem:[%s821 + $0x8] sm:$0xff]
  %v824 = vld [vmem:[%s821 + $0x10] sm:$0xff]
  %v825 = vld [vmem:[%s821 + $0x18] sm:$0xff]
  %v826 = vld [vmem:[%s821 + $0x20] sm:$0xff]
  %v827 = vld [vmem:[%s821 + $0x28] sm:$0xff]
  %v828 = vld [vmem:[%s821 + $0x30] sm:$0xff]
  %v829 = vld [vmem:[%s821 + $0x38] sm:$0xff]
  %v830 = vld [vmem:[%s821 + $0x40] sm:$0xff]
  %v831 = vld [vmem:[%s821 + $0x48] sm:$0xff]
  %v832 = vld [vmem:[%s821 + $0x50] sm:$0xff]
  %v833 = vld [vmem:[%s821 + $0x58] sm:$0xff]
  %v834 = vld [vmem:[%s821 + $0x60] sm:$0xff]
  %v835 = vld [vmem:[%s821 + $0x68] sm:$0xff]
  %v836 = vld [vmem:[%s821 + $0x70] sm:$0xff]
  %v837 = vld [vmem:[%s821 + $0x78] sm:$0xff]
  %v854 = vunpack.c.l.b16 %v822
  %v855 = vunpack.c.h.b16 %v822
  %v856 = vunpack.c.l.b16 %v823
  %v857 = vunpack.c.h.b16 %v823
  %v858 = vunpack.c.l.b16 %v824
  %v859 = vunpack.c.h.b16 %v824
  %v860 = vunpack.c.l.b16 %v825
  %v861 = vunpack.c.h.b16 %v825
  %v862 = vunpack.c.l.b16 %v826
  %v863 = vunpack.c.h.b16 %v826
  %v864 = vunpack.c.l.b16 %v827
  %v865 = vunpack.c.h.b16 %v827
  %v866 = vunpack.c.l.b16 %v828
  %v867 = vunpack.c.h.b16 %v828
  %v868 = vunpack.c.l.b16 %v829
  %v869 = vunpack.c.h.b16 %v829
  %v870 = vunpack.c.l.b16 %v830
  %v871 = vunpack.c.h.b16 %v830
  %v872 = vunpack.c.l.b16 %v831
  %v873 = vunpack.c.h.b16 %v831
  %v874 = vunpack.c.l.b16 %v832
  %v875 = vunpack.c.h.b16 %v832
  %v876 = vunpack.c.l.b16 %v833
  %v877 = vunpack.c.h.b16 %v833
  %v878 = vunpack.c.l.b16 %v834
  %v879 = vunpack.c.h.b16 %v834
  %v880 = vunpack.c.l.b16 %v835
  %v881 = vunpack.c.h.b16 %v835
  %v882 = vunpack.c.l.b16 %v836
  %v883 = vunpack.c.h.b16 %v836
  %v884 = vunpack.c.l.b16 %v837
  %v885 = vunpack.c.h.b16 %v837
  %v886 = vpack.c.b16 %v856, %v854
  %v887 = vpack.c.b16 %v857, %v855
  %v888 = vpack.c.b16 %v860, %v858
  %v889 = vpack.c.b16 %v861, %v859
  %v890 = vpack.c.b16 %v864, %v862
  %v891 = vpack.c.b16 %v865, %v863
  %v892 = vpack.c.b16 %v868, %v866
  %v893 = vpack.c.b16 %v869, %v867
  %v894 = vpack.c.b16 %v872, %v870
  %v895 = vpack.c.b16 %v873, %v871
  %v896 = vpack.c.b16 %v876, %v874
  %v897 = vpack.c.b16 %v877, %v875
  %v898 = vpack.c.b16 %v880, %v878
  %v899 = vpack.c.b16 %v881, %v879
  %v900 = vpack.c.b16 %v884, %v882
  %v901 = vpack.c.b16 %v885, %v883
  %918 = vmatprep.subr.bf16.mxu0 %v887
  %919 = vmatpush1.bf16.msra.mxu0 %v886
  %920 = vmatprep.subr.bf16.mxu0 %v889
  %921 = vmatpush1.bf16.msra.mxu0 %v888
  %922 = vmatprep.subr.bf16.mxu0 %v891
  %923 = vmatpush1.bf16.msra.mxu0 %v890
  %924 = vmatprep.subr.bf16.mxu0 %v893
  %925 = vmatpush1.bf16.msra.mxu0 %v892
  %926 = vmatprep.subr.bf16.mxu0 %v895
  %927 = vmatpush1.bf16.msra.mxu0 %v894
  %928 = vmatprep.subr.bf16.mxu0 %v897
  %929 = vmatpush1.bf16.msra.mxu0 %v896
  %930 = vmatprep.subr.bf16.mxu0 %v899
  %931 = vmatpush1.bf16.msra.mxu0 %v898
  %932 = vmatprep.subr.bf16.mxu0 %v901
  %933 = vmatpush1.bf16.msra.mxu0 %v900
  %934 = vmatprep.subr.bf16.mxu0 0
  %935 = vmatpush1.bf16.msra.mxu0 0
  %936 = vmatprep.subr.bf16.mxu0 0
  %937 = vmatpush1.bf16.msra.mxu0 0
  %938 = vmatprep.subr.bf16.mxu0 0
  %939 = vmatpush1.bf16.msra.mxu0 0
  %940 = vmatprep.subr.bf16.mxu0 0
  %941 = vmatpush1.bf16.msra.mxu0 0
  %942 = vmatprep.subr.bf16.mxu0 0
  %943 = vmatpush1.bf16.msra.mxu0 0
  %944 = vmatprep.subr.bf16.mxu0 0
  %945 = vmatpush1.bf16.msra.mxu0 0
  %946 = vmatprep.subr.bf16.mxu0 0
  %947 = vmatpush1.bf16.msra.mxu0 0
  %948 = vmatprep.subr.bf16.mxu0 0
  %949 = vmatpush1.bf16.msra.mxu0 0
  %950 = vmatprep.mubr.bf16.mxu0 0
  %951 = vmatmul.mubr.bf16.gmra.mrb[0].mxu0 %v772
  %v952 = vpop.f32.mrb[0].mxu0
  %v953 = vadd.f32 0.0, %v952
  %v954 = vpop.f32.mrb[0].mxu0
  %v955 = vadd.f32 0.0, %v954
  %v956 = vpop.f32.mrb[0].mxu0
  %v957 = vadd.f32 0.0, %v956
  %v958 = vpop.f32.mrb[0].mxu0
  %v959 = vadd.f32 0.0, %v958
  %960 = vdwg.mxu0
  %v961 = vadd.f32 %v763, %v953
  %v962 = vadd.f32 %v764, %v955
  %v963 = vadd.f32 %v765, %v957
  %v964 = vadd.f32 %v766, %v959
  %v965 = vrot.slane %v59, 1
  %v966 = vrot.slane %v569, 1
  %v969 = vsel %vm769, %v965, %v966
  %971 = vmatprep.subr.bf16.mxu0 %v887
  %972 = vmatpush1.bf16.msra.mxu0 %v886
  %973 = vmatprep.subr.bf16.mxu0 %v889
  %974 = vmatpush1.bf16.msra.mxu0 %v888
  %975 = vmatprep.subr.bf16.mxu0 %v891
  %976 = vmatpush1.bf16.msra.mxu0 %v890
  %977 = vmatprep.subr.bf16.mxu0 %v893
  %978 = vmatpush1.bf16.msra.mxu0 %v892
  %979 = vmatprep.subr.bf16.mxu0 %v895
  %980 = vmatpush1.bf16.msra.mxu0 %v894
  %981 = vmatprep.subr.bf16.mxu0 %v897
  %982 = vmatpush1.bf16.msra.mxu0 %v896
  %983 = vmatprep.subr.bf16.mxu0 %v899
  %984 = vmatpush1.bf16.msra.mxu0 %v898
  %985 = vmatprep.subr.bf16.mxu0 %v901
  %986 = vmatpush1.bf16.msra.mxu0 %v900
  %987 = vmatprep.subr.bf16.mxu0 0
  %988 = vmatpush1.bf16.msra.mxu0 0
  %989 = vmatprep.subr.bf16.mxu0 0
  %990 = vmatpush1.bf16.msra.mxu0 0
  %991 = vmatprep.subr.bf16.mxu0 0
  %992 = vmatpush1.bf16.msra.mxu0 0
  %993 = vmatprep.subr.bf16.mxu0 0
  %994 = vmatpush1.bf16.msra.mxu0 0
  %995 = vmatprep.subr.bf16.mxu0 0
  %996 = vmatpush1.bf16.msra.mxu0 0
  %997 = vmatprep.subr.bf16.mxu0 0
  %998 = vmatpush1.bf16.msra.mxu0 0
  %999 = vmatprep.subr.bf16.mxu0 0
  %1000 = vmatpush1.bf16.msra.mxu0 0
  %1001 = vmatprep.subr.bf16.mxu0 0
  %1002 = vmatpush1.bf16.msra.mxu0 0
  %1003 = vmatprep.mubr.bf16.mxu0 0
  %1004 = vmatmul.mubr.bf16.gmra.mrb[0].mxu0 %v969
  %v1005 = vpop.f32.mrb[0].mxu0
  %v1006 = vadd.f32 0.0, %v1005
  %v1007 = vpop.f32.mrb[0].mxu0
  %v1008 = vadd.f32 0.0, %v1007
  %v1009 = vpop.f32.mrb[0].mxu0
  %v1010 = vadd.f32 0.0, %v1009
  %v1011 = vpop.f32.mrb[0].mxu0
  %v1012 = vadd.f32 0.0, %v1011
  %1013 = vdwg.mxu0
  %v1014 = vadd.f32 %v817, %v1006
  %v1015 = vadd.f32 %v818, %v1008
  %v1016 = vadd.f32 %v819, %v1010
  %v1017 = vadd.f32 %v820, %v1012
  %v1018 = vmax.f32 %v961, %v1014
  %v1019 = vmax.f32 %v962, %v1015
  %v1020 = vmax.f32 %v963, %v1016
  %v1021 = vmax.f32 %v964, %v1017
  %v1022 = vmax.f32 %v1018, %v1019
  %v1023 = vmax.f32 %v1020, %v1021
  %v1024 = vld [vmem:[%s3] sm:$0x1]
  %v1026 = vlaneseq
  %v1027 = vshrl.u32 %v1026, 7
  %v1028 = vsub.s32 0, %v1027
  %v1029 = vrot.slane %v1024, %v1028
  %v1031 = vadd.f32 %v1022, %v1029
  %v1032 = vadd.f32 %v1023, %v1029
  %v1033 = vmax.f32 %v1031, 0.0
  %v1034 = vmax.f32 %v1032, 0.0
  %v1035 = vpack.c.bf16 %v1034, %v1033
  %v1037 = vunpack.c.l.b16 %v1035
  %v1038 = vunpack.c.h.b16 %v1035
  %v1039 = vpack.c.b16 %v1037, %v1037
  %v1040 = vpack.c.b16 %v1038, %v1038
  %1043 = vst [vmem:[%s4] sm:$0xf] %v1039
  %1044 = vst [vmem:[%s4 + $0x4] sm:$0xf] %v1040
  // Predicated region
  $region18: #{local_net_forward.4} parent=0 // pred_check
    _
  $region19: #{local_net_forward.4} parent=0 // pred_check_branch
    %1046 = sbr.rel (0) target = $region21
  $region20: #{local_net_forward.4} parent=0 // pred_region
    _
  $region21: #{local_net_forward.4} parent=0 // pred_fallthru
    _
  // Predicated region
  $region22: #{local_net_forward.4} parent=0 // pred_check
    _
  $region23: #{local_net_forward.4} parent=0 // pred_check_branch
    %1048 = sbr.rel (0) target = $region25
  $region24: #{local_net_forward.4} parent=0 // pred_region
    _
  $region25: #{local_net_forward.4} parent=0 // pred_fallthru
    _

// kernel: local_net_forward.3
$region0: #{local_net_forward.3}
  #allocation0 [shape = 'u32[]', space=smem, size = 0x4, offset = 0x4, fixed_abs, tag = 'smem constant byte address 0x4 - core index']
  #allocation1 [shape = 'u32[144,128]{1,0:T(1,128)}', space=vmem, size = 0x12000, scoped, tag = 'internal scratch']
  %s0 = inlined_call_operand.vmem [shape: bf16[32,128], index: 0, kind: input, shape index: {}]
  %s1 = inlined_call_operand.vmem [shape: bf16[32,128], index: 1, kind: input, shape index: {}]
  %s2 = inlined_call_operand.vmem [shape: bf16[5,128,256], index: 2, kind: input, shape index: {}]
  %s3 = inlined_call_operand.vmem [shape: f32[1,128], index: 3, kind: input, shape index: {}]
  %s4 = inlined_call_operand.vmem [shape: bf16[32,128], index: 4, kind: output, shape index: {}]
  %s5 = sld [smem:[#allocation0]]
  $region26: #{local_net_forward.3} parent=0
    _
  %s7 = ssub.s32 1, %s5
  %s8 = scalar_select 0, %s7, %s5
  // Predicated region
  $region2: #{local_net_forward.3} parent=0 // pred_check
    _
  $region3: #{local_net_forward.3} parent=0 // pred_check_branch
    %10 = sbr.rel (0) target = $region5
  $region4: #{local_net_forward.3} parent=0 // pred_region
    _
  $region5: #{local_net_forward.3} parent=0 // pred_fallthru
    _
  // Predicated region
  $region6: #{local_net_forward.3} parent=0 // pred_check
    _
  $region7: #{local_net_forward.3} parent=0 // pred_check_branch
    %12 = sbr.rel (0) target = $region9
  $region8: #{local_net_forward.3} parent=0 // pred_region
    _
  $region9: #{local_net_forward.3} parent=0 // pred_fallthru
    _
  // Predicated region
  $region10: #{local_net_forward.3} parent=0 // pred_check
    _
  $region11: #{local_net_forward.3} parent=0 // pred_check_branch
    %14 = sbr.rel (0) target = $region13
  $region12: #{local_net_forward.3} parent=0 // pred_region
    _
  $region13: #{local_net_forward.3} parent=0 // pred_fallthru
    _
  // Predicated region
  $region14: #{local_net_forward.3} parent=0 // pred_check
    _
  $region15: #{local_net_forward.3} parent=0 // pred_check_branch
    %16 = sbr.rel (0) target = $region17
  $region16: #{local_net_forward.3} parent=0 // pred_region
    _
  $region17: #{local_net_forward.3} parent=0 // pred_fallthru
    _
  %v18 = vld [vmem:[%s0] sm:$0xf]
  %v19 = vld [vmem:[%s0 + $0x4] sm:$0xf]
  %v20 = vld [vmem:[%s0 + $0x8] sm:$0xf]
  %v21 = vld [vmem:[%s0 + $0xc] sm:$0xf]
  %v22 = vld [vmem:[%s1] sm:$0xf]
  %v23 = vld [vmem:[%s1 + $0x4] sm:$0xf]
  %v24 = vld [vmem:[%s1 + $0x8] sm:$0xf]
  %v25 = vld [vmem:[%s1 + $0xc] sm:$0xf]
  %v26 = vld [vmem:[%s2] sm:$0xff]
  %v27 = vld [vmem:[%s2 + $0x8] sm:$0xff]
  %v28 = vld [vmem:[%s2 + $0x10] sm:$0xff]
  %v29 = vld [vmem:[%s2 + $0x18] sm:$0xff]
  %v30 = vld [vmem:[%s2 + $0x20] sm:$0xff]
  %v31 = vld [vmem:[%s2 + $0x28] sm:$0xff]
  %v32 = vld [vmem:[%s2 + $0x30] sm:$0xff]
  %v33 = vld [vmem:[%s2 + $0x38] sm:$0xff]
  %v34 = vld [vmem:[%s2 + $0x40] sm:$0xff]
  %v35 = vld [vmem:[%s2 + $0x48] sm:$0xff]
  %v36 = vld [vmem:[%s2 + $0x50] sm:$0xff]
  %v37 = vld [vmem:[%s2 + $0x58] sm:$0xff]
  %v38 = vld [vmem:[%s2 + $0x60] sm:$0xff]
  %v39 = vld [vmem:[%s2 + $0x68] sm:$0xff]
  %v40 = vld [vmem:[%s2 + $0x70] sm:$0xff]
  %v41 = vld [vmem:[%s2 + $0x78] sm:$0xff]
  %s42 = scalar_lea.vmem %s2, 128
  %v43 = vld [vmem:[%s42] sm:$0xff]
  %v44 = vld [vmem:[%s42 + $0x8] sm:$0xff]
  %v45 = vld [vmem:[%s42 + $0x10] sm:$0xff]
  %v46 = vld [vmem:[%s42 + $0x18] sm:$0xff]
  %v47 = vld [vmem:[%s42 + $0x20] sm:$0xff]
  %v48 = vld [vmem:[%s42 + $0x28] sm:$0xff]
  %v49 = vld [vmem:[%s42 + $0x30] sm:$0xff]
  %v50 = vld [vmem:[%s42 + $0x38] sm:$0xff]
  %v51 = vld [vmem:[%s42 + $0x40] sm:$0xff]
  %v52 = vld [vmem:[%s42 + $0x48] sm:$0xff]
  %v53 = vld [vmem:[%s42 + $0x50] sm:$0xff]
  %v54 = vld [vmem:[%s42 + $0x58] sm:$0xff]
  %v55 = vld [vmem:[%s42 + $0x60] sm:$0xff]
  %v56 = vld [vmem:[%s42 + $0x68] sm:$0xff]
  %v57 = vld [vmem:[%s42 + $0x70] sm:$0xff]
  %v58 = vld [vmem:[%s42 + $0x78] sm:$0xff]
  %v63 = vunpack.c.l.b16 %v22
  %v64 = vunpack.c.l.b16 %v23
  %v65 = vunpack.c.l.b16 %v24
  %v66 = vunpack.c.l.b16 %v25
  %v67 = vpack.c.b16 %v64, %v63
  %v68 = vpack.c.b16 %v66, %v65
  %v87 = vunpack.c.l.b16 %v43
  %v88 = vunpack.c.h.b16 %v43
  %v89 = vunpack.c.l.b16 %v44
  %v90 = vunpack.c.h.b16 %v44
  %v91 = vunpack.c.l.b16 %v45
  %v92 = vunpack.c.h.b16 %v45
  %v93 = vunpack.c.l.b16 %v46
  %v94 = vunpack.c.h.b16 %v46
  %v95 = vunpack.c.l.b16 %v47
  %v96 = vunpack.c.h.b16 %v47
  %v97 = vunpack.c.l.b16 %v48
  %v98 = vunpack.c.h.b16 %v48
  %v99 = vunpack.c.l.b16 %v49
  %v100 = vunpack.c.h.b16 %v49
  %v101 = vunpack.c.l.b16 %v50
  %v102 = vunpack.c.h.b16 %v50
  %v103 = vunpack.c.l.b16 %v51
  %v104 = vunpack.c.h.b16 %v51
  %v105 = vunpack.c.l.b16 %v52
  %v106 = vunpack.c.h.b16 %v52
  %v107 = vunpack.c.l.b16 %v53
  %v108 = vunpack.c.h.b16 %v53
  %v109 = vunpack.c.l.b16 %v54
  %v110 = vunpack.c.h.b16 %v54
  %v111 = vunpack.c.l.b16 %v55
  %v112 = vunpack.c.h.b16 %v55
  %v113 = vunpack.c.l.b16 %v56
  %v114 = vunpack.c.h.b16 %v56
  %v115 = vunpack.c.l.b16 %v57
  %v116 = vunpack.c.h.b16 %v57
  %v117 = vunpack.c.l.b16 %v58
  %v118 = vunpack.c.h.b16 %v58
  %v119 = vpack.c.b16 %v89, %v87
  %v120 = vpack.c.b16 %v90, %v88
  %v121 = vpack.c.b16 %v93, %v91
  %v122 = vpack.c.b16 %v94, %v92
  %v123 = vpack.c.b16 %v97, %v95
  %v124 = vpack.c.b16 %v98, %v96
  %v125 = vpack.c.b16 %v101, %v99
  %v126 = vpack.c.b16 %v102, %v100
  %v127 = vpack.c.b16 %v105, %v103
  %v128 = vpack.c.b16 %v106, %v104
  %v129 = vpack.c.b16 %v109, %v107
  %v130 = vpack.c.b16 %v110, %v108
  %v131 = vpack.c.b16 %v113, %v111
  %v132 = vpack.c.b16 %v114, %v112
  %v133 = vpack.c.b16 %v117, %v115
  %v134 = vpack.c.b16 %v118, %v116
  %151 = vmatprep.subr.bf16.mxu0 %v120
  %152 = vmatpush1.bf16.msra.mxu0 %v119
  %153 = vmatprep.subr.bf16.mxu0 %v122
  %154 = vmatpush1.bf16.msra.mxu0 %v121
  %155 = vmatprep.subr.bf16.mxu0 %v124
  %156 = vmatpush1.bf16.msra.mxu0 %v123
  %157 = vmatprep.subr.bf16.mxu0 %v126
  %158 = vmatpush1.bf16.msra.mxu0 %v125
  %159 = vmatprep.subr.bf16.mxu0 %v128
  %160 = vmatpush1.bf16.msra.mxu0 %v127
  %161 = vmatprep.subr.bf16.mxu0 %v130
  %162 = vmatpush1.bf16.msra.mxu0 %v129
  %163 = vmatprep.subr.bf16.mxu0 %v132
  %164 = vmatpush1.bf16.msra.mxu0 %v131
  %165 = vmatprep.subr.bf16.mxu0 %v134
  %166 = vmatpush1.bf16.msra.mxu0 %v133
  %167 = vmatprep.subr.bf16.mxu0 0
  %168 = vmatpush1.bf16.msra.mxu0 0
  %169 = vmatprep.subr.bf16.mxu0 0
  %170 = vmatpush1.bf16.msra.mxu0 0
  %171 = vmatprep.subr.bf16.mxu0 0
  %172 = vmatpush1.bf16.msra.mxu0 0
  %173 = vmatprep.subr.bf16.mxu0 0
  %174 = vmatpush1.bf16.msra.mxu0 0
  %175 = vmatprep.subr.bf16.mxu0 0
  %176 = vmatpush1.bf16.msra.mxu0 0
  %177 = vmatprep.subr.bf16.mxu0 0
  %178 = vmatpush1.bf16.msra.mxu0 0
  %179 = vmatprep.subr.bf16.mxu0 0
  %180 = vmatpush1.bf16.msra.mxu0 0
  %181 = vmatprep.subr.bf16.mxu0 0
  %182 = vmatpush1.bf16.msra.mxu0 0
  %183 = vmatprep.mubr.bf16.mxu0 0
  %184 = vmatmul.mubr.bf16.gmra.mrb[0].mxu0 %v67
  %v185 = vpop.f32.mrb[0].mxu0
  %v186 = vadd.f32 0.0, %v185
  %v187 = vpop.f32.mrb[0].mxu0
  %v188 = vadd.f32 0.0, %v187
  %v189 = vpop.f32.mrb[0].mxu0
  %v190 = vadd.f32 0.0, %v189
  %v191 = vpop.f32.mrb[0].mxu0
  %v192 = vadd.f32 0.0, %v191
  %193 = vmatprep.mubr.bf16.mxu0 0
  %194 = vmatmul.mubr.bf16.gmra.mrb[0].mxu0 %v68
  %v195 = vpop.f32.mrb[0].mxu0
  %v196 = vadd.f32 0.0, %v195
  %v197 = vpop.f32.mrb[0].mxu0
  %v198 = vadd.f32 0.0, %v197
  %v199 = vpop.f32.mrb[0].mxu0
  %v200 = vadd.f32 0.0, %v199
  %v201 = vpop.f32.mrb[0].mxu0
  %v202 = vadd.f32 0.0, %v201
  %203 = vdwg.mxu0
  %v208 = vunpack.c.l.b16 %v18
  %v209 = vunpack.c.l.b16 %v19
  %v210 = vunpack.c.l.b16 %v20
  %v211 = vunpack.c.l.b16 %v21
  %v212 = vpack.c.b16 %v209, %v208
  %v213 = vpack.c.b16 %v211, %v210
  %v232 = vunpack.c.l.b16 %v26
  %v233 = vunpack.c.h.b16 %v26
  %v234 = vunpack.c.l.b16 %v27
  %v235 = vunpack.c.h.b16 %v27
  %v236 = vunpack.c.l.b16 %v28
  %v237 = vunpack.c.h.b16 %v28
  %v238 = vunpack.c.l.b16 %v29
  %v239 = vunpack.c.h.b16 %v29
  %v240 = vunpack.c.l.b16 %v30
  %v241 = vunpack.c.h.b16 %v30
  %v242 = vunpack.c.l.b16 %v31
  %v243 = vunpack.c.h.b16 %v31
  %v244 = vunpack.c.l.b16 %v32
  %v245 = vunpack.c.h.b16 %v32
  %v246 = vunpack.c.l.b16 %v33
  %v247 = vunpack.c.h.b16 %v33
  %v248 = vunpack.c.l.b16 %v34
  %v249 = vunpack.c.h.b16 %v34
  %v250 = vunpack.c.l.b16 %v35
  %v251 = vunpack.c.h.b16 %v35
  %v252 = vunpack.c.l.b16 %v36
  %v253 = vunpack.c.h.b16 %v36
  %v254 = vunpack.c.l.b16 %v37
  %v255 = vunpack.c.h.b16 %v37
  %v256 = vunpack.c.l.b16 %v38
  %v257 = vunpack.c.h.b16 %v38
  %v258 = vunpack.c.l.b16 %v39
  %v259 = vunpack.c.h.b16 %v39
  %v260 = vunpack.c.l.b16 %v40
  %v261 = vunpack.c.h.b16 %v40
  %v262 = vunpack.c.l.b16 %v41
  %v263 = vunpack.c.h.b16 %v41
  %v264 = vpack.c.b16 %v234, %v232
  %v265 = vpack.c.b16 %v235, %v233
  %v266 = vpack.c.b16 %v238, %v236
  %v267 = vpack.c.b16 %v239, %v237
  %v268 = vpack.c.b16 %v242, %v240
  %v269 = vpack.c.b16 %v243, %v241
  %v270 = vpack.c.b16 %v246, %v244
  %v271 = vpack.c.b16 %v247, %v245
  %v272 = vpack.c.b16 %v250, %v248
  %v273 = vpack.c.b16 %v251, %v249
  %v274 = vpack.c.b16 %v254, %v252
  %v275 = vpack.c.b16 %v255, %v253
  %v276 = vpack.c.b16 %v258, %v256
  %v277 = vpack.c.b16 %v259, %v257
  %v278 = vpack.c.b16 %v262, %v260
  %v279 = vpack.c.b16 %v263, %v261
  %296 = vmatprep.subr.bf16.mxu0 %v265
  %297 = vmatpush1.bf16.msra.mxu0 %v264
  %298 = vmatprep.subr.bf16.mxu0 %v267
  %299 = vmatpush1.bf16.msra.mxu0 %v266
  %300 = vmatprep.subr.bf16.mxu0 %v269
  %301 = vmatpush1.bf16.msra.mxu0 %v268
  %302 = vmatprep.subr.bf16.mxu0 %v271
  %303 = vmatpush1.bf16.msra.mxu0 %v270
  %304 = vmatprep.subr.bf16.mxu0 %v273
  %305 = vmatpush1.bf16.msra.mxu0 %v272
  %306 = vmatprep.subr.bf16.mxu0 %v275
  %307 = vmatpush1.bf16.msra.mxu0 %v274
  %308 = vmatprep.subr.bf16.mxu0 %v277
  %309 = vmatpush1.bf16.msra.mxu0 %v276
  %310 = vmatprep.subr.bf16.mxu0 %v279
  %311 = vmatpush1.bf16.msra.mxu0 %v278
  %312 = vmatprep.subr.bf16.mxu0 0
  %313 = vmatpush1.bf16.msra.mxu0 0
  %314 = vmatprep.subr.bf16.mxu0 0
  %315 = vmatpush1.bf16.msra.mxu0 0
  %316 = vmatprep.subr.bf16.mxu0 0
  %317 = vmatpush1.bf16.msra.mxu0 0
  %318 = vmatprep.subr.bf16.mxu0 0
  %319 = vmatpush1.bf16.msra.mxu0 0
  %320 = vmatprep.subr.bf16.mxu0 0
  %321 = vmatpush1.bf16.msra.mxu0 0
  %322 = vmatprep.subr.bf16.mxu0 0
  %323 = vmatpush1.bf16.msra.mxu0 0
  %324 = vmatprep.subr.bf16.mxu0 0
  %325 = vmatpush1.bf16.msra.mxu0 0
  %326 = vmatprep.subr.bf16.mxu0 0
  %327 = vmatpush1.bf16.msra.mxu0 0
  %328 = vmatprep.mubr.bf16.mxu0 0
  %329 = vmatmul.mubr.bf16.gmra.mrb[0].mxu0 %v212
  %v330 = vpop.f32.mrb[0].mxu0
  %v331 = vadd.f32 %v186, %v330
  %v332 = vpop.f32.mrb[0].mxu0
  %v333 = vadd.f32 %v188, %v332
  %v334 = vpop.f32.mrb[0].mxu0
  %v335 = vadd.f32 %v190, %v334
  %v336 = vpop.f32.mrb[0].mxu0
  %v337 = vadd.f32 %v192, %v336
  %338 = vmatprep.mubr.bf16.mxu0 0
  %339 = vmatmul.mubr.bf16.gmra.mrb[0].mxu0 %v213
  %v340 = vpop.f32.mrb[0].mxu0
  %v341 = vadd.f32 %v196, %v340
  %v342 = vpop.f32.mrb[0].mxu0
  %v343 = vadd.f32 %v198, %v342
  %v344 = vpop.f32.mrb[0].mxu0
  %v345 = vadd.f32 %v200, %v344
  %v346 = vpop.f32.mrb[0].mxu0
  %v347 = vadd.f32 %v202, %v346
  %348 = vdwg.mxu0
  %vm349 = vsmask.f32 7424
  %v351 = vshrl.u32 %v212, 16
  %v353 = vshll.u32 %v212, 16
  %v355 = vrot.slane %v353, 1
  %v356 = vor.u32 %v351, %v355
  %v358 = vshll.u32 %v213, 16
  %v360 = vrot.slane %v358, 1
  %v361 = vsel %vm349, %v356, %v360
  %v362 = vshrl.u32 %v213, 16
  %v364 = vor.u32 %v362, %v360
  %v367 = vpack.c.b16 %v208, %v208
  %v369 = vshll.u32 %v367, 16
  %v371 = vrot.slane %v369, 1
  %vm373 = vcmask 1047552
  %vm374 = vmand %vm373, %vm349
  %v375 = vsel %vm374, %v364, %v371
  %376 = vmatprep.subr.bf16.mxu0 %v120
  %377 = vmatpush1.bf16.msra.mxu0 %v119
  %378 = vmatprep.subr.bf16.mxu0 %v122
  %379 = vmatpush1.bf16.msra.mxu0 %v121
  %380 = vmatprep.subr.bf16.mxu0 %v124
  %381 = vmatpush1.bf16.msra.mxu0 %v123
  %382 = vmatprep.subr.bf16.mxu0 %v126
  %383 = vmatpush1.bf16.msra.mxu0 %v125
  %384 = vmatprep.subr.bf16.mxu0 %v128
  %385 = vmatpush1.bf16.msra.mxu0 %v127
  %386 = vmatprep.subr.bf16.mxu0 %v130
  %387 = vmatpush1.bf16.msra.mxu0 %v129
  %388 = vmatprep.subr.bf16.mxu0 %v132
  %389 = vmatpush1.bf16.msra.mxu0 %v131
  %390 = vmatprep.subr.bf16.mxu0 %v134
  %391 = vmatpush1.bf16.msra.mxu0 %v133
  %392 = vmatprep.subr.bf16.mxu0 0
  %393 = vmatpush1.bf16.msra.mxu0 0
  %394 = vmatprep.subr.bf16.mxu0 0
  %395 = vmatpush1.bf16.msra.mxu0 0
  %396 = vmatprep.subr.bf16.mxu0 0
  %397 = vmatpush1.bf16.msra.mxu0 0
  %398 = vmatprep.subr.bf16.mxu0 0
  %399 = vmatpush1.bf16.msra.mxu0 0
  %400 = vmatprep.subr.bf16.mxu0 0
  %401 = vmatpush1.bf16.msra.mxu0 0
  %402 = vmatprep.subr.bf16.mxu0 0
  %403 = vmatpush1.bf16.msra.mxu0 0
  %404 = vmatprep.subr.bf16.mxu0 0
  %405 = vmatpush1.bf16.msra.mxu0 0
  %406 = vmatprep.subr.bf16.mxu0 0
  %407 = vmatpush1.bf16.msra.mxu0 0
  %408 = vmatprep.mubr.bf16.mxu0 0
  %409 = vmatmul.mubr.bf16.gmra.mrb[0].mxu0 %v361
  %v410 = vpop.f32.mrb[0].mxu0
  %v411 = vadd.f32 0.0, %v410
  %v412 = vpop.f32.mrb[0].mxu0
  %v413 = vadd.f32 0.0, %v412
  %v414 = vpop.f32.mrb[0].mxu0
  %v415 = vadd.f32 0.0, %v414
  %v416 = vpop.f32.mrb[0].mxu0
  %v417 = vadd.f32 0.0, %v416
  %418 = vmatprep.mubr.bf16.mxu0 0
  %419 = vmatmul.mubr.bf16.gmra.mrb[0].mxu0 %v375
  %v420 = vpop.f32.mrb[0].mxu0
  %v421 = vadd.f32 0.0, %v420
  %v422 = vpop.f32.mrb[0].mxu0
  %v423 = vadd.f32 0.0, %v422
  %v424 = vpop.f32.mrb[0].mxu0
  %v425 = vadd.f32 0.0, %v424
  %v426 = vpop.f32.mrb[0].mxu0
  %v427 = vadd.f32 0.0, %v426
  %428 = vdwg.mxu0
  %429 = vmatprep.subr.bf16.mxu0 %v265
  %430 = vmatpush1.bf16.msra.mxu0 %v264
  %431 = vmatprep.subr.bf16.mxu0 %v267
  %432 = vmatpush1.bf16.msra.mxu0 %v266
  %433 = vmatprep.subr.bf16.mxu0 %v269
  %434 = vmatpush1.bf16.msra.mxu0 %v268
  %435 = vmatprep.subr.bf16.mxu0 %v271
  %436 = vmatpush1.bf16.msra.mxu0 %v270
  %437 = vmatprep.subr.bf16.mxu0 %v273
  %438 = vmatpush1.bf16.msra.mxu0 %v272
  %439 = vmatprep.subr.bf16.mxu0 %v275
  %440 = vmatpush1.bf16.msra.mxu0 %v274
  %441 = vmatprep.subr.bf16.mxu0 %v277
  %442 = vmatpush1.bf16.msra.mxu0 %v276
  %443 = vmatprep.subr.bf16.mxu0 %v279
  %444 = vmatpush1.bf16.msra.mxu0 %v278
  %445 = vmatprep.subr.bf16.mxu0 0
  %446 = vmatpush1.bf16.msra.mxu0 0
  %447 = vmatprep.subr.bf16.mxu0 0
  %448 = vmatpush1.bf16.msra.mxu0 0
  %449 = vmatprep.subr.bf16.mxu0 0
  %450 = vmatpush1.bf16.msra.mxu0 0
  %451 = vmatprep.subr.bf16.mxu0 0
  %452 = vmatpush1.bf16.msra.mxu0 0
  %453 = vmatprep.subr.bf16.mxu0 0
  %454 = vmatpush1.bf16.msra.mxu0 0
  %455 = vmatprep.subr.bf16.mxu0 0
  %456 = vmatpush1.bf16.msra.mxu0 0
  %457 = vmatprep.subr.bf16.mxu0 0
  %458 = vmatpush1.bf16.msra.mxu0 0
  %459 = vmatprep.subr.bf16.mxu0 0
  %460 = vmatpush1.bf16.msra.mxu0 0
  %461 = vmatprep.mubr.bf16.mxu0 0
  %462 = vmatmul.mubr.bf16.gmra.mrb[0].mxu0 %v67
  %v463 = vpop.f32.mrb[0].mxu0
  %v464 = vadd.f32 %v411, %v463
  %v465 = vpop.f32.mrb[0].mxu0
  %v466 = vadd.f32 %v413, %v465
  %v467 = vpop.f32.mrb[0].mxu0
  %v468 = vadd.f32 %v415, %v467
  %v469 = vpop.f32.mrb[0].mxu0
  %v470 = vadd.f32 %v417, %v469
  %471 = vmatprep.mubr.bf16.mxu0 0
  %472 = vmatmul.mubr.bf16.gmra.mrb[0].mxu0 %v68
  %v473 = vpop.f32.mrb[0].mxu0
  %v474 = vadd.f32 %v421, %v473
  %v475 = vpop.f32.mrb[0].mxu0
  %v476 = vadd.f32 %v423, %v475
  %v477 = vpop.f32.mrb[0].mxu0
  %v478 = vadd.f32 %v425, %v477
  %v479 = vpop.f32.mrb[0].mxu0
  %v480 = vadd.f32 %v427, %v479
  %481 = vdwg.mxu0
  %s482 = scalar_lea.vmem %s2, 256
  %v483 = vld [vmem:[%s482] sm:$0xff]
  %v484 = vld [vmem:[%s482 + $0x8] sm:$0xff]
  %v485 = vld [vmem:[%s482 + $0x10] sm:$0xff]
  %v486 = vld [vmem:[%s482 + $0x18] sm:$0xff]
  %v487 = vld [vmem:[%s482 + $0x20] sm:$0xff]
  %v488 = vld [vmem:[%s482 + $0x28] sm:$0xff]
  %v489 = vld [vmem:[%s482 + $0x30] sm:$0xff]
  %v490 = vld [vmem:[%s482 + $0x38] sm:$0xff]
  %v491 = vld [vmem:[%s482 + $0x40] sm:$0xff]
  %v492 = vld [vmem:[%s482 + $0x48] sm:$0xff]
  %v493 = vld [vmem:[%s482 + $0x50] sm:$0xff]
  %v494 = vld [vmem:[%s482 + $0x58] sm:$0xff]
  %v495 = vld [vmem:[%s482 + $0x60] sm:$0xff]
  %v496 = vld [vmem:[%s482 + $0x68] sm:$0xff]
  %v497 = vld [vmem:[%s482 + $0x70] sm:$0xff]
  %v498 = vld [vmem:[%s482 + $0x78] sm:$0xff]
  %v515 = vunpack.c.l.b16 %v483
  %v516 = vunpack.c.h.b16 %v483
  %v517 = vunpack.c.l.b16 %v484
  %v518 = vunpack.c.h.b16 %v484
  %v519 = vunpack.c.l.b16 %v485
  %v520 = vunpack.c.h.b16 %v485
  %v521 = vunpack.c.l.b16 %v486
  %v522 = vunpack.c.h.b16 %v486
  %v523 = vunpack.c.l.b16 %v487
  %v524 = vunpack.c.h.b16 %v487
  %v525 = vunpack.c.l.b16 %v488
  %v526 = vunpack.c.h.b16 %v488
  %v527 = vunpack.c.l.b16 %v489
  %v528 = vunpack.c.h.b16 %v489
  %v529 = vunpack.c.l.b16 %v490
  %v530 = vunpack.c.h.b16 %v490
  %v531 = vunpack.c.l.b16 %v491
  %v532 = vunpack.c.h.b16 %v491
  %v533 = vunpack.c.l.b16 %v492
  %v534 = vunpack.c.h.b16 %v492
  %v535 = vunpack.c.l.b16 %v493
  %v536 = vunpack.c.h.b16 %v493
  %v537 = vunpack.c.l.b16 %v494
  %v538 = vunpack.c.h.b16 %v494
  %v539 = vunpack.c.l.b16 %v495
  %v540 = vunpack.c.h.b16 %v495
  %v541 = vunpack.c.l.b16 %v496
  %v542 = vunpack.c.h.b16 %v496
  %v543 = vunpack.c.l.b16 %v497
  %v544 = vunpack.c.h.b16 %v497
  %v545 = vunpack.c.l.b16 %v498
  %v546 = vunpack.c.h.b16 %v498
  %v547 = vpack.c.b16 %v517, %v515
  %v548 = vpack.c.b16 %v518, %v516
  %v549 = vpack.c.b16 %v521, %v519
  %v550 = vpack.c.b16 %v522, %v520
  %v551 = vpack.c.b16 %v525, %v523
  %v552 = vpack.c.b16 %v526, %v524
  %v553 = vpack.c.b16 %v529, %v527
  %v554 = vpack.c.b16 %v530, %v528
  %v555 = vpack.c.b16 %v533, %v531
  %v556 = vpack.c.b16 %v534, %v532
  %v557 = vpack.c.b16 %v537, %v535
  %v558 = vpack.c.b16 %v538, %v536
  %v559 = vpack.c.b16 %v541, %v539
  %v560 = vpack.c.b16 %v542, %v540
  %v561 = vpack.c.b16 %v545, %v543
  %v562 = vpack.c.b16 %v546, %v544
  %579 = vmatprep.subr.bf16.mxu0 %v548
  %580 = vmatpush1.bf16.msra.mxu0 %v547
  %581 = vmatprep.subr.bf16.mxu0 %v550
  %582 = vmatpush1.bf16.msra.mxu0 %v549
  %583 = vmatprep.subr.bf16.mxu0 %v552
  %584 = vmatpush1.bf16.msra.mxu0 %v551
  %585 = vmatprep.subr.bf16.mxu0 %v554
  %586 = vmatpush1.bf16.msra.mxu0 %v553
  %587 = vmatprep.subr.bf16.mxu0 %v556
  %588 = vmatpush1.bf16.msra.mxu0 %v555
  %589 = vmatprep.subr.bf16.mxu0 %v558
  %590 = vmatpush1.bf16.msra.mxu0 %v557
  %591 = vmatprep.subr.bf16.mxu0 %v560
  %592 = vmatpush1.bf16.msra.mxu0 %v559
  %593 = vmatprep.subr.bf16.mxu0 %v562
  %594 = vmatpush1.bf16.msra.mxu0 %v561
  %595 = vmatprep.subr.bf16.mxu0 0
  %596 = vmatpush1.bf16.msra.mxu0 0
  %597 = vmatprep.subr.bf16.mxu0 0
  %598 = vmatpush1.bf16.msra.mxu0 0
  %599 = vmatprep.subr.bf16.mxu0 0
  %600 = vmatpush1.bf16.msra.mxu0 0
  %601 = vmatprep.subr.bf16.mxu0 0
  %602 = vmatpush1.bf16.msra.mxu0 0
  %603 = vmatprep.subr.bf16.mxu0 0
  %604 = vmatpush1.bf16.msra.mxu0 0
  %605 = vmatprep.subr.bf16.mxu0 0
  %606 = vmatpush1.bf16.msra.mxu0 0
  %607 = vmatprep.subr.bf16.mxu0 0
  %608 = vmatpush1.bf16.msra.mxu0 0
  %609 = vmatprep.subr.bf16.mxu0 0
  %610 = vmatpush1.bf16.msra.mxu0 0
  %611 = vmatprep.mubr.bf16.mxu0 0
  %612 = vmatmul.mubr.bf16.gmra.mrb[0].mxu0 %v361
  %v613 = vpop.f32.mrb[0].mxu0
  %v614 = vadd.f32 0.0, %v613
  %v615 = vpop.f32.mrb[0].mxu0
  %v616 = vadd.f32 0.0, %v615
  %v617 = vpop.f32.mrb[0].mxu0
  %v618 = vadd.f32 0.0, %v617
  %v619 = vpop.f32.mrb[0].mxu0
  %v620 = vadd.f32 0.0, %v619
  %621 = vmatprep.mubr.bf16.mxu0 0
  %622 = vmatmul.mubr.bf16.gmra.mrb[0].mxu0 %v375
  %v623 = vpop.f32.mrb[0].mxu0
  %v624 = vadd.f32 0.0, %v623
  %v625 = vpop.f32.mrb[0].mxu0
  %v626 = vadd.f32 0.0, %v625
  %v627 = vpop.f32.mrb[0].mxu0
  %v628 = vadd.f32 0.0, %v627
  %v629 = vpop.f32.mrb[0].mxu0
  %v630 = vadd.f32 0.0, %v629
  %631 = vdwg.mxu0
  %v632 = vadd.f32 %v331, %v614
  %v633 = vadd.f32 %v333, %v616
  %v634 = vadd.f32 %v335, %v618
  %v635 = vadd.f32 %v337, %v620
  %v636 = vadd.f32 %v341, %v624
  %v637 = vadd.f32 %v343, %v626
  %v638 = vadd.f32 %v345, %v628
  %v639 = vadd.f32 %v347, %v630
  %v641 = vshrl.u32 %v67, 16
  %v643 = vshll.u32 %v67, 16
  %v645 = vrot.slane %v643, 1
  %v646 = vor.u32 %v641, %v645
  %v648 = vshll.u32 %v68, 16
  %v650 = vrot.slane %v648, 1
  %v651 = vsel %vm349, %v646, %v650
  %v652 = vshrl.u32 %v68, 16
  %v654 = vor.u32 %v652, %v650
  %v657 = vpack.c.b16 %v63, %v63
  %v659 = vshll.u32 %v657, 16
  %v661 = vrot.slane %v659, 1
  %v663 = vsel %vm374, %v654, %v661
  %664 = vmatprep.subr.bf16.mxu0 %v548
  %665 = vmatpush1.bf16.msra.mxu0 %v547
  %666 = vmatprep.subr.bf16.mxu0 %v550
  %667 = vmatpush1.bf16.msra.mxu0 %v549
  %668 = vmatprep.subr.bf16.mxu0 %v552
  %669 = vmatpush1.bf16.msra.mxu0 %v551
  %670 = vmatprep.subr.bf16.mxu0 %v554
  %671 = vmatpush1.bf16.msra.mxu0 %v553
  %672 = vmatprep.subr.bf16.mxu0 %v556
  %673 = vmatpush1.bf16.msra.mxu0 %v555
  %674 = vmatprep.subr.bf16.mxu0 %v558
  %675 = vmatpush1.bf16.msra.mxu0 %v557
  %676 = vmatprep.subr.bf16.mxu0 %v560
  %677 = vmatpush1.bf16.msra.mxu0 %v559
  %678 = vmatprep.subr.bf16.mxu0 %v562
  %679 = vmatpush1.bf16.msra.mxu0 %v561
  %680 = vmatprep.subr.bf16.mxu0 0
  %681 = vmatpush1.bf16.msra.mxu0 0
  %682 = vmatprep.subr.bf16.mxu0 0
  %683 = vmatpush1.bf16.msra.mxu0 0
  %684 = vmatprep.subr.bf16.mxu0 0
  %685 = vmatpush1.bf16.msra.mxu0 0
  %686 = vmatprep.subr.bf16.mxu0 0
  %687 = vmatpush1.bf16.msra.mxu0 0
  %688 = vmatprep.subr.bf16.mxu0 0
  %689 = vmatpush1.bf16.msra.mxu0 0
  %690 = vmatprep.subr.bf16.mxu0 0
  %691 = vmatpush1.bf16.msra.mxu0 0
  %692 = vmatprep.subr.bf16.mxu0 0
  %693 = vmatpush1.bf16.msra.mxu0 0
  %694 = vmatprep.subr.bf16.mxu0 0
  %695 = vmatpush1.bf16.msra.mxu0 0
  %696 = vmatprep.mubr.bf16.mxu0 0
  %697 = vmatmul.mubr.bf16.gmra.mrb[0].mxu0 %v651
  %v698 = vpop.f32.mrb[0].mxu0
  %v699 = vadd.f32 0.0, %v698
  %v700 = vpop.f32.mrb[0].mxu0
  %v701 = vadd.f32 0.0, %v700
  %v702 = vpop.f32.mrb[0].mxu0
  %v703 = vadd.f32 0.0, %v702
  %v704 = vpop.f32.mrb[0].mxu0
  %v705 = vadd.f32 0.0, %v704
  %706 = vmatprep.mubr.bf16.mxu0 0
  %707 = vmatmul.mubr.bf16.gmra.mrb[0].mxu0 %v663
  %v708 = vpop.f32.mrb[0].mxu0
  %v709 = vadd.f32 0.0, %v708
  %v710 = vpop.f32.mrb[0].mxu0
  %v711 = vadd.f32 0.0, %v710
  %v712 = vpop.f32.mrb[0].mxu0
  %v713 = vadd.f32 0.0, %v712
  %v714 = vpop.f32.mrb[0].mxu0
  %v715 = vadd.f32 0.0, %v714
  %716 = vdwg.mxu0
  %v717 = vadd.f32 %v464, %v699
  %v718 = vadd.f32 %v466, %v701
  %v719 = vadd.f32 %v468, %v703
  %v720 = vadd.f32 %v470, %v705
  %v721 = vadd.f32 %v474, %v709
  %v722 = vadd.f32 %v476, %v711
  %v723 = vadd.f32 %v478, %v713
  %v724 = vadd.f32 %v480, %v715
  %s725 = scalar_lea.vmem %s2, 384
  %v726 = vld [vmem:[%s725] sm:$0xff]
  %v727 = vld [vmem:[%s725 + $0x8] sm:$0xff]
  %v728 = vld [vmem:[%s725 + $0x10] sm:$0xff]
  %v729 = vld [vmem:[%s725 + $0x18] sm:$0xff]
  %v730 = vld [vmem:[%s725 + $0x20] sm:$0xff]
  %v731 = vld [vmem:[%s725 + $0x28] sm:$0xff]
  %v732 = vld [vmem:[%s725 + $0x30] sm:$0xff]
  %v733 = vld [vmem:[%s725 + $0x38] sm:$0xff]
  %v734 = vld [vmem:[%s725 + $0x40] sm:$0xff]
  %v735 = vld [vmem:[%s725 + $0x48] sm:$0xff]
  %v736 = vld [vmem:[%s725 + $0x50] sm:$0xff]
  %v737 = vld [vmem:[%s725 + $0x58] sm:$0xff]
  %v738 = vld [vmem:[%s725 + $0x60] sm:$0xff]
  %v739 = vld [vmem:[%s725 + $0x68] sm:$0xff]
  %v740 = vld [vmem:[%s725 + $0x70] sm:$0xff]
  %v741 = vld [vmem:[%s725 + $0x78] sm:$0xff]
  %v758 = vunpack.c.l.b16 %v726
  %v759 = vunpack.c.h.b16 %v726
  %v760 = vunpack.c.l.b16 %v727
  %v761 = vunpack.c.h.b16 %v727
  %v762 = vunpack.c.l.b16 %v728
  %v763 = vunpack.c.h.b16 %v728
  %v764 = vunpack.c.l.b16 %v729
  %v765 = vunpack.c.h.b16 %v729
  %v766 = vunpack.c.l.b16 %v730
  %v767 = vunpack.c.h.b16 %v730
  %v768 = vunpack.c.l.b16 %v731
  %v769 = vunpack.c.h.b16 %v731
  %v770 = vunpack.c.l.b16 %v732
  %v771 = vunpack.c.h.b16 %v732
  %v772 = vunpack.c.l.b16 %v733
  %v773 = vunpack.c.h.b16 %v733
  %v774 = vunpack.c.l.b16 %v734
  %v775 = vunpack.c.h.b16 %v734
  %v776 = vunpack.c.l.b16 %v735
  %v777 = vunpack.c.h.b16 %v735
  %v778 = vunpack.c.l.b16 %v736
  %v779 = vunpack.c.h.b16 %v736
  %v780 = vunpack.c.l.b16 %v737
  %v781 = vunpack.c.h.b16 %v737
  %v782 = vunpack.c.l.b16 %v738
  %v783 = vunpack.c.h.b16 %v738
  %v784 = vunpack.c.l.b16 %v739
  %v785 = vunpack.c.h.b16 %v739
  %v786 = vunpack.c.l.b16 %v740
  %v787 = vunpack.c.h.b16 %v740
  %v788 = vunpack.c.l.b16 %v741
  %v789 = vunpack.c.h.b16 %v741
  %v790 = vpack.c.b16 %v760, %v758
  %v791 = vpack.c.b16 %v761, %v759
  %v792 = vpack.c.b16 %v764, %v762
  %v793 = vpack.c.b16 %v765, %v763
  %v794 = vpack.c.b16 %v768, %v766
  %v795 = vpack.c.b16 %v769, %v767
  %v796 = vpack.c.b16 %v772, %v770
  %v797 = vpack.c.b16 %v773, %v771
  %v798 = vpack.c.b16 %v776, %v774
  %v799 = vpack.c.b16 %v777, %v775
  %v800 = vpack.c.b16 %v780, %v778
  %v801 = vpack.c.b16 %v781, %v779
  %v802 = vpack.c.b16 %v784, %v782
  %v803 = vpack.c.b16 %v785, %v783
  %v804 = vpack.c.b16 %v788, %v786
  %v805 = vpack.c.b16 %v789, %v787
  %822 = vmatprep.subr.bf16.mxu0 %v791
  %823 = vmatpush1.bf16.msra.mxu0 %v790
  %824 = vmatprep.subr.bf16.mxu0 %v793
  %825 = vmatpush1.bf16.msra.mxu0 %v792
  %826 = vmatprep.subr.bf16.mxu0 %v795
  %827 = vmatpush1.bf16.msra.mxu0 %v794
  %828 = vmatprep.subr.bf16.mxu0 %v797
  %829 = vmatpush1.bf16.msra.mxu0 %v796
  %830 = vmatprep.subr.bf16.mxu0 %v799
  %831 = vmatpush1.bf16.msra.mxu0 %v798
  %832 = vmatprep.subr.bf16.mxu0 %v801
  %833 = vmatpush1.bf16.msra.mxu0 %v800
  %834 = vmatprep.subr.bf16.mxu0 %v803
  %835 = vmatpush1.bf16.msra.mxu0 %v802
  %836 = vmatprep.subr.bf16.mxu0 %v805
  %837 = vmatpush1.bf16.msra.mxu0 %v804
  %838 = vmatprep.subr.bf16.mxu0 0
  %839 = vmatpush1.bf16.msra.mxu0 0
  %840 = vmatprep.subr.bf16.mxu0 0
  %841 = vmatpush1.bf16.msra.mxu0 0
  %842 = vmatprep.subr.bf16.mxu0 0
  %843 = vmatpush1.bf16.msra.mxu0 0
  %844 = vmatprep.subr.bf16.mxu0 0
  %845 = vmatpush1.bf16.msra.mxu0 0
  %846 = vmatprep.subr.bf16.mxu0 0
  %847 = vmatpush1.bf16.msra.mxu0 0
  %848 = vmatprep.subr.bf16.mxu0 0
  %849 = vmatpush1.bf16.msra.mxu0 0
  %850 = vmatprep.subr.bf16.mxu0 0
  %851 = vmatpush1.bf16.msra.mxu0 0
  %852 = vmatprep.subr.bf16.mxu0 0
  %853 = vmatpush1.bf16.msra.mxu0 0
  %854 = vmatprep.mubr.bf16.mxu0 0
  %855 = vmatmul.mubr.bf16.gmra.mrb[0].mxu0 %v651
  %v856 = vpop.f32.mrb[0].mxu0
  %v857 = vadd.f32 0.0, %v856
  %v858 = vpop.f32.mrb[0].mxu0
  %v859 = vadd.f32 0.0, %v858
  %v860 = vpop.f32.mrb[0].mxu0
  %v861 = vadd.f32 0.0, %v860
  %v862 = vpop.f32.mrb[0].mxu0
  %v863 = vadd.f32 0.0, %v862
  %864 = vmatprep.mubr.bf16.mxu0 0
  %865 = vmatmul.mubr.bf16.gmra.mrb[0].mxu0 %v663
  %v866 = vpop.f32.mrb[0].mxu0
  %v867 = vadd.f32 0.0, %v866
  %v868 = vpop.f32.mrb[0].mxu0
  %v869 = vadd.f32 0.0, %v868
  %v870 = vpop.f32.mrb[0].mxu0
  %v871 = vadd.f32 0.0, %v870
  %v872 = vpop.f32.mrb[0].mxu0
  %v873 = vadd.f32 0.0, %v872
  %874 = vdwg.mxu0
  %v875 = vadd.f32 %v632, %v857
  %v876 = vadd.f32 %v633, %v859
  %v877 = vadd.f32 %v634, %v861
  %v878 = vadd.f32 %v635, %v863
  %v879 = vadd.f32 %v636, %v867
  %v880 = vadd.f32 %v637, %v869
  %v881 = vadd.f32 %v638, %v871
  %v882 = vadd.f32 %v639, %v873
  %vm883 = vcmask 1046528
  %v884 = vrot.slane %v212, 1
  %v885 = vrot.slane %v213, 1
  %v886 = vsel %vm883, %v884, %v885
  %v888 = vrot.slane %v367, 1
  %vm889 = vcmask 1046528
  %v892 = vsel %vm889, %v885, %v888
  %894 = vmatprep.subr.bf16.mxu0 %v791
  %895 = vmatpush1.bf16.msra.mxu0 %v790
  %896 = vmatprep.subr.bf16.mxu0 %v793
  %897 = vmatpush1.bf16.msra.mxu0 %v792
  %898 = vmatprep.subr.bf16.mxu0 %v795
  %899 = vmatpush1.bf16.msra.mxu0 %v794
  %900 = vmatprep.subr.bf16.mxu0 %v797
  %901 = vmatpush1.bf16.msra.mxu0 %v796
  %902 = vmatprep.subr.bf16.mxu0 %v799
  %903 = vmatpush1.bf16.msra.mxu0 %v798
  %904 = vmatprep.subr.bf16.mxu0 %v801
  %905 = vmatpush1.bf16.msra.mxu0 %v800
  %906 = vmatprep.subr.bf16.mxu0 %v803
  %907 = vmatpush1.bf16.msra.mxu0 %v802
  %908 = vmatprep.subr.bf16.mxu0 %v805
  %909 = vmatpush1.bf16.msra.mxu0 %v804
  %910 = vmatprep.subr.bf16.mxu0 0
  %911 = vmatpush1.bf16.msra.mxu0 0
  %912 = vmatprep.subr.bf16.mxu0 0
  %913 = vmatpush1.bf16.msra.mxu0 0
  %914 = vmatprep.subr.bf16.mxu0 0
  %915 = vmatpush1.bf16.msra.mxu0 0
  %916 = vmatprep.subr.bf16.mxu0 0
  %917 = vmatpush1.bf16.msra.mxu0 0
  %918 = vmatprep.subr.bf16.mxu0 0
  %919 = vmatpush1.bf16.msra.mxu0 0
  %920 = vmatprep.subr.bf16.mxu0 0
  %921 = vmatpush1.bf16.msra.mxu0 0
  %922 = vmatprep.subr.bf16.mxu0 0
  %923 = vmatpush1.bf16.msra.mxu0 0
  %924 = vmatprep.subr.bf16.mxu0 0
  %925 = vmatpush1.bf16.msra.mxu0 0
  %926 = vmatprep.mubr.bf16.mxu0 0
  %927 = vmatmul.mubr.bf16.gmra.mrb[0].mxu0 %v886
  %v928 = vpop.f32.mrb[0].mxu0
  %v929 = vadd.f32 0.0, %v928
  %v930 = vpop.f32.mrb[0].mxu0
  %v931 = vadd.f32 0.0, %v930
  %v932 = vpop.f32.mrb[0].mxu0
  %v933 = vadd.f32 0.0, %v932
  %v934 = vpop.f32.mrb[0].mxu0
  %v935 = vadd.f32 0.0, %v934
  %936 = vmatprep.mubr.bf16.mxu0 0
  %937 = vmatmul.mubr.bf16.gmra.mrb[0].mxu0 %v892
  %v938 = vpop.f32.mrb[0].mxu0
  %v939 = vadd.f32 0.0, %v938
  %v940 = vpop.f32.mrb[0].mxu0
  %v941 = vadd.f32 0.0, %v940
  %v942 = vpop.f32.mrb[0].mxu0
  %v943 = vadd.f32 0.0, %v942
  %v944 = vpop.f32.mrb[0].mxu0
  %v945 = vadd.f32 0.0, %v944
  %946 = vdwg.mxu0
  %v947 = vadd.f32 %v717, %v929
  %v948 = vadd.f32 %v718, %v931
  %v949 = vadd.f32 %v719, %v933
  %v950 = vadd.f32 %v720, %v935
  %v951 = vadd.f32 %v721, %v939
  %v952 = vadd.f32 %v722, %v941
  %v953 = vadd.f32 %v723, %v943
  %v954 = vadd.f32 %v724, %v945
  %s955 = scalar_lea.vmem %s2, 512
  %v956 = vld [vmem:[%s955] sm:$0xff]
  %v957 = vld [vmem:[%s955 + $0x8] sm:$0xff]
  %v958 = vld [vmem:[%s955 + $0x10] sm:$0xff]
  %v959 = vld [vmem:[%s955 + $0x18] sm:$0xff]
  %v960 = vld [vmem:[%s955 + $0x20] sm:$0xff]
  %v961 = vld [vmem:[%s955 + $0x28] sm:$0xff]
  %v962 = vld [vmem:[%s955 + $0x30] sm:$0xff]
  %v963 = vld [vmem:[%s955 + $0x38] sm:$0xff]
  %v964 = vld [vmem:[%s955 + $0x40] sm:$0xff]
  %v965 = vld [vmem:[%s955 + $0x48] sm:$0xff]
  %v966 = vld [vmem:[%s955 + $0x50] sm:$0xff]
  %v967 = vld [vmem:[%s955 + $0x58] sm:$0xff]
  %v968 = vld [vmem:[%s955 + $0x60] sm:$0xff]
  %v969 = vld [vmem:[%s955 + $0x68] sm:$0xff]
  %v970 = vld [vmem:[%s955 + $0x70] sm:$0xff]
  %v971 = vld [vmem:[%s955 + $0x78] sm:$0xff]
  %v988 = vunpack.c.l.b16 %v956
  %v989 = vunpack.c.h.b16 %v956
  %v990 = vunpack.c.l.b16 %v957
  %v991 = vunpack.c.h.b16 %v957
  %v992 = vunpack.c.l.b16 %v958
  %v993 = vunpack.c.h.b16 %v958
  %v994 = vunpack.c.l.b16 %v959
  %v995 = vunpack.c.h.b16 %v959
  %v996 = vunpack.c.l.b16 %v960
  %v997 = vunpack.c.h.b16 %v960
  %v998 = vunpack.c.l.b16 %v961
  %v999 = vunpack.c.h.b16 %v961
  %v1000 = vunpack.c.l.b16 %v962
  %v1001 = vunpack.c.h.b16 %v962
  %v1002 = vunpack.c.l.b16 %v963
  %v1003 = vunpack.c.h.b16 %v963
  %v1004 = vunpack.c.l.b16 %v964
  %v1005 = vunpack.c.h.b16 %v964
  %v1006 = vunpack.c.l.b16 %v965
  %v1007 = vunpack.c.h.b16 %v965
  %v1008 = vunpack.c.l.b16 %v966
  %v1009 = vunpack.c.h.b16 %v966
  %v1010 = vunpack.c.l.b16 %v967
  %v1011 = vunpack.c.h.b16 %v967
  %v1012 = vunpack.c.l.b16 %v968
  %v1013 = vunpack.c.h.b16 %v968
  %v1014 = vunpack.c.l.b16 %v969
  %v1015 = vunpack.c.h.b16 %v969
  %v1016 = vunpack.c.l.b16 %v970
  %v1017 = vunpack.c.h.b16 %v970
  %v1018 = vunpack.c.l.b16 %v971
  %v1019 = vunpack.c.h.b16 %v971
  %v1020 = vpack.c.b16 %v990, %v988
  %v1021 = vpack.c.b16 %v991, %v989
  %v1022 = vpack.c.b16 %v994, %v992
  %v1023 = vpack.c.b16 %v995, %v993
  %v1024 = vpack.c.b16 %v998, %v996
  %v1025 = vpack.c.b16 %v999, %v997
  %v1026 = vpack.c.b16 %v1002, %v1000
  %v1027 = vpack.c.b16 %v1003, %v1001
  %v1028 = vpack.c.b16 %v1006, %v1004
  %v1029 = vpack.c.b16 %v1007, %v1005
  %v1030 = vpack.c.b16 %v1010, %v1008
  %v1031 = vpack.c.b16 %v1011, %v1009
  %v1032 = vpack.c.b16 %v1014, %v1012
  %v1033 = vpack.c.b16 %v1015, %v1013
  %v1034 = vpack.c.b16 %v1018, %v1016
  %v1035 = vpack.c.b16 %v1019, %v1017
  %1052 = vmatprep.subr.bf16.mxu0 %v1021
  %1053 = vmatpush1.bf16.msra.mxu0 %v1020
  %1054 = vmatprep.subr.bf16.mxu0 %v1023
  %1055 = vmatpush1.bf16.msra.mxu0 %v1022
  %1056 = vmatprep.subr.bf16.mxu0 %v1025
  %1057 = vmatpush1.bf16.msra.mxu0 %v1024
  %1058 = vmatprep.subr.bf16.mxu0 %v1027
  %1059 = vmatpush1.bf16.msra.mxu0 %v1026
  %1060 = vmatprep.subr.bf16.mxu0 %v1029
  %1061 = vmatpush1.bf16.msra.mxu0 %v1028
  %1062 = vmatprep.subr.bf16.mxu0 %v1031
  %1063 = vmatpush1.bf16.msra.mxu0 %v1030
  %1064 = vmatprep.subr.bf16.mxu0 %v1033
  %1065 = vmatpush1.bf16.msra.mxu0 %v1032
  %1066 = vmatprep.subr.bf16.mxu0 %v1035
  %1067 = vmatpush1.bf16.msra.mxu0 %v1034
  %1068 = vmatprep.subr.bf16.mxu0 0
  %1069 = vmatpush1.bf16.msra.mxu0 0
  %1070 = vmatprep.subr.bf16.mxu0 0
  %1071 = vmatpush1.bf16.msra.mxu0 0
  %1072 = vmatprep.subr.bf16.mxu0 0
  %1073 = vmatpush1.bf16.msra.mxu0 0
  %1074 = vmatprep.subr.bf16.mxu0 0
  %1075 = vmatpush1.bf16.msra.mxu0 0
  %1076 = vmatprep.subr.bf16.mxu0 0
  %1077 = vmatpush1.bf16.msra.mxu0 0
  %1078 = vmatprep.subr.bf16.mxu0 0
  %1079 = vmatpush1.bf16.msra.mxu0 0
  %1080 = vmatprep.subr.bf16.mxu0 0
  %1081 = vmatpush1.bf16.msra.mxu0 0
  %1082 = vmatprep.subr.bf16.mxu0 0
  %1083 = vmatpush1.bf16.msra.mxu0 0
  %1084 = vmatprep.mubr.bf16.mxu0 0
  %1085 = vmatmul.mubr.bf16.gmra.mrb[0].mxu0 %v886
  %v1086 = vpop.f32.mrb[0].mxu0
  %v1087 = vadd.f32 0.0, %v1086
  %v1088 = vpop.f32.mrb[0].mxu0
  %v1089 = vadd.f32 0.0, %v1088
  %v1090 = vpop.f32.mrb[0].mxu0
  %v1091 = vadd.f32 0.0, %v1090
  %v1092 = vpop.f32.mrb[0].mxu0
  %v1093 = vadd.f32 0.0, %v1092
  %1094 = vmatprep.mubr.bf16.mxu0 0
  %1095 = vmatmul.mubr.bf16.gmra.mrb[0].mxu0 %v892
  %v1096 = vpop.f32.mrb[0].mxu0
  %v1097 = vadd.f32 0.0, %v1096
  %v1098 = vpop.f32.mrb[0].mxu0
  %v1099 = vadd.f32 0.0, %v1098
  %v1100 = vpop.f32.mrb[0].mxu0
  %v1101 = vadd.f32 0.0, %v1100
  %v1102 = vpop.f32.mrb[0].mxu0
  %v1103 = vadd.f32 0.0, %v1102
  %1104 = vdwg.mxu0
  %v1105 = vadd.f32 %v875, %v1087
  %v1106 = vadd.f32 %v876, %v1089
  %v1107 = vadd.f32 %v877, %v1091
  %v1108 = vadd.f32 %v878, %v1093
  %v1109 = vadd.f32 %v879, %v1097
  %v1110 = vadd.f32 %v880, %v1099
  %v1111 = vadd.f32 %v881, %v1101
  %v1112 = vadd.f32 %v882, %v1103
  %v1113 = vrot.slane %v67, 1
  %v1114 = vrot.slane %v68, 1
  %v1115 = vsel %vm883, %v1113, %v1114
  %v1117 = vrot.slane %v657, 1
  %v1120 = vsel %vm889, %v1114, %v1117
  %1122 = vmatprep.subr.bf16.mxu0 %v1021
  %1123 = vmatpush1.bf16.msra.mxu0 %v1020
  %1124 = vmatprep.subr.bf16.mxu0 %v1023
  %1125 = vmatpush1.bf16.msra.mxu0 %v1022
  %1126 = vmatprep.subr.bf16.mxu0 %v1025
  %1127 = vmatpush1.bf16.msra.mxu0 %v1024
  %1128 = vmatprep.subr.bf16.mxu0 %v1027
  %1129 = vmatpush1.bf16.msra.mxu0 %v1026
  %1130 = vmatprep.subr.bf16.mxu0 %v1029
  %1131 = vmatpush1.bf16.msra.mxu0 %v1028
  %1132 = vmatprep.subr.bf16.mxu0 %v1031
  %1133 = vmatpush1.bf16.msra.mxu0 %v1030
  %1134 = vmatprep.subr.bf16.mxu0 %v1033
  %1135 = vmatpush1.bf16.msra.mxu0 %v1032
  %1136 = vmatprep.subr.bf16.mxu0 %v1035
  %1137 = vmatpush1.bf16.msra.mxu0 %v1034
  %1138 = vmatprep.subr.bf16.mxu0 0
  %1139 = vmatpush1.bf16.msra.mxu0 0
  %1140 = vmatprep.subr.bf16.mxu0 0
  %1141 = vmatpush1.bf16.msra.mxu0 0
  %1142 = vmatprep.subr.bf16.mxu0 0
  %1143 = vmatpush1.bf16.msra.mxu0 0
  %1144 = vmatprep.subr.bf16.mxu0 0
  %1145 = vmatpush1.bf16.msra.mxu0 0
  %1146 = vmatprep.subr.bf16.mxu0 0
  %1147 = vmatpush1.bf16.msra.mxu0 0
  %1148 = vmatprep.subr.bf16.mxu0 0
  %1149 = vmatpush1.bf16.msra.mxu0 0
  %1150 = vmatprep.subr.bf16.mxu0 0
  %1151 = vmatpush1.bf16.msra.mxu0 0
  %1152 = vmatprep.subr.bf16.mxu0 0
  %1153 = vmatpush1.bf16.msra.mxu0 0
  %1154 = vmatprep.mubr.bf16.mxu0 0
  %1155 = vmatmul.mubr.bf16.gmra.mrb[0].mxu0 %v1115
  %v1156 = vpop.f32.mrb[0].mxu0
  %v1157 = vadd.f32 0.0, %v1156
  %v1158 = vpop.f32.mrb[0].mxu0
  %v1159 = vadd.f32 0.0, %v1158
  %v1160 = vpop.f32.mrb[0].mxu0
  %v1161 = vadd.f32 0.0, %v1160
  %v1162 = vpop.f32.mrb[0].mxu0
  %v1163 = vadd.f32 0.0, %v1162
  %1164 = vmatprep.mubr.bf16.mxu0 0
  %1165 = vmatmul.mubr.bf16.gmra.mrb[0].mxu0 %v1120
  %v1166 = vpop.f32.mrb[0].mxu0
  %v1167 = vadd.f32 0.0, %v1166
  %v1168 = vpop.f32.mrb[0].mxu0
  %v1169 = vadd.f32 0.0, %v1168
  %v1170 = vpop.f32.mrb[0].mxu0
  %v1171 = vadd.f32 0.0, %v1170
  %v1172 = vpop.f32.mrb[0].mxu0
  %v1173 = vadd.f32 0.0, %v1172
  %1174 = vdwg.mxu0
  %v1175 = vadd.f32 %v947, %v1157
  %v1176 = vadd.f32 %v948, %v1159
  %v1177 = vadd.f32 %v949, %v1161
  %v1178 = vadd.f32 %v950, %v1163
  %v1179 = vadd.f32 %v951, %v1167
  %v1180 = vadd.f32 %v952, %v1169
  %v1181 = vadd.f32 %v953, %v1171
  %v1182 = vadd.f32 %v954, %v1173
  %v1183 = vmax.f32 %v1105, %v1175
  %v1184 = vmax.f32 %v1106, %v1176
  %v1185 = vmax.f32 %v1107, %v1177
  %v1186 = vmax.f32 %v1108, %v1178
  %v1187 = vmax.f32 %v1109, %v1179
  %v1188 = vmax.f32 %v1110, %v1180
  %v1189 = vmax.f32 %v1111, %v1181
  %v1190 = vmax.f32 %v1112, %v1182
  %v1191 = vmax.f32 %v1183, %v1184
  %v1192 = vmax.f32 %v1185, %v1186
  %v1193 = vmax.f32 %v1187, %v1188
  %v1194 = vmax.f32 %v1189, %v1190
  %v1195 = vld [vmem:[%s3] sm:$0x1]
  %v1197 = vlaneseq
  %v1198 = vshrl.u32 %v1197, 7
  %v1199 = vsub.s32 0, %v1198
  %v1200 = vrot.slane %v1195, %v1199
  %v1202 = vadd.f32 %v1191, %v1200
  %v1203 = vadd.f32 %v1192, %v1200
  %v1204 = vadd.f32 %v1193, %v1200
  %v1205 = vadd.f32 %v1194, %v1200
  %v1206 = vmax.f32 %v1202, 0.0
  %v1207 = vmax.f32 %v1203, 0.0
  %v1208 = vmax.f32 %v1204, 0.0
  %v1209 = vmax.f32 %v1205, 0.0
  %v1210 = vpack.c.bf16 %v1207, %v1206
  %v1211 = vpack.c.bf16 %v1209, %v1208
  %v1214 = vunpack.c.l.b16 %v1210
  %v1215 = vunpack.c.h.b16 %v1210
  %v1216 = vunpack.c.l.b16 %v1211
  %v1217 = vunpack.c.h.b16 %v1211
  %v1218 = vpack.c.b16 %v1214, %v1214
  %v1219 = vpack.c.b16 %v1215, %v1215
  %v1220 = vpack.c.b16 %v1216, %v1216
  %v1221 = vpack.c.b16 %v1217, %v1217
  %1226 = vst [vmem:[%s4] sm:$0xf] %v1218
  %1227 = vst [vmem:[%s4 + $0x4] sm:$0xf] %v1219
  %1228 = vst [vmem:[%s4 + $0x8] sm:$0xf] %v1220
  %1229 = vst [vmem:[%s4 + $0xc] sm:$0xf] %v1221
  // Predicated region
  $region18: #{local_net_forward.3} parent=0 // pred_check
    _
  $region19: #{local_net_forward.3} parent=0 // pred_check_branch
    %1231 = sbr.rel (0) target = $region21
  $region20: #{local_net_forward.3} parent=0 // pred_region
    _
  $region21: #{local_net_forward.3} parent=0 // pred_fallthru
    _
  // Predicated region
  $region22: #{local_net_forward.3} parent=0 // pred_check
    _
  $region23: #{local_net_forward.3} parent=0 // pred_check_branch
    %1233 = sbr.rel (0) target = $region25
  $region24: #{local_net_forward.3} parent=0 // pred_region
    _
  $region25: #{local_net_forward.3} parent=0 // pred_fallthru
    _

</llo_original>
